<compile_context>
chip_gen: v6e
topology: v6e:2x2x1
jax: 0.10.0
libtpu: 0.0.40
codegen_flags: <defaults>
</compile_context>

<pallas_src>
import jax
import jax.numpy as jnp
from jax.experimental import pallas as pl
from jax.experimental.pallas import tpu as pltpu


# ----------------------------------------------------------------------------- model dims

IN_CH = 4
STEM_CH = 8
L2_CH = 16
IN_FEATURES = L2_CH          # original_resnet.fc.in_features
HIDDEN1 = 32                 # hidden_size1 (scaled down from 1024)
HIDDEN2 = 16                 # hidden_size2 (scaled down from 512)
NUM_CLASSES = 2
BN_EPS = 1e-5

# Packed weight-slab row offsets (multiples of 8 -> sublane-aligned in-kernel slices).
R_STEM, R_L1A, R_L1B = 0, 8, 16
R_L2A, R_L2B, R_DS = 24, 40, 56
R_FC1, R_FC2, R_FC3 = 72, 104, 120
WS_ROWS, WS_COLS = 128, 145          # 145 = max(9*Cin) + 1 bias column
GUARD = 128                          # lane-aligned staging base inside the band scratch


# ----------------------------------------------------------------------------- fused kernel

def _make_fused_kernel(B, H, W):
    H1, W1 = H, W                    # stem resolution
    H2, W2 = H // 2, W // 2          # after 2x2/stride-2 max-pool
    H3, W3 = H2 // 2, W2 // 2        # after layer2 stride-2
    M1, M2, M3 = B * H1 * W1, B * H2 * W2, B * H3 * W3

    def kernel(x_ref, ws_ref, m_ref, sel1_ref, sel2_ref, avg_ref, out_ref,
               band_ref, col_ref):

        # Zero the staging band ONCE (only ~12 vregs): any later read that falls outside a
        # freshly-staged window hits either these zeros or finite stale data, and in both
        # cases it is multiplied by a 0 entry of the precomputed boundary masks.
        band_ref[...] = jnp.zeros(band_ref.shape, jnp.float32)

        def conv3x3(x, w_row, cout, cin, Wc, Mc, m_row, relu):
            """3x3 / stride-1 / pad-1 conv (+ folded BN) as ONE im2col MXU matmul.

            x     : (cin, Mc) lane-dense activation, Mc = B*Hc*Wc, b-major then h then w.
            w_row : row offset of the (cout, 9*cin | bias) block in the packed weight slab.
            m_row : row offset of this resolution's 9 boundary masks in the mask slab.
            """
            K = 9 * cin
            band_ref[0:cin, GUARD:GUARD + Mc] = x                 # lane-aligned staging store
            for t in range(9):
                dy, dx = t // 3 - 1, t % 3 - 1
                delta = dy * Wc + dx
                shifted = band_ref[0:cin, GUARD + delta:GUARD + delta + Mc]
                if delta == 0:                                    # center tap: mask is all-ones
                    col_ref[t * cin:(t + 1) * cin, 0:Mc] = shifted
                else:
                    col_ref[t * cin:(t + 1) * cin, 0:Mc] = (
                        shifted * m_ref[m_row + t:m_row + t + 1, 0:Mc])
            acc = jnp.dot(ws_ref[w_row:w_row + cout, 0:K], col_ref[0:K, 0:Mc],
                          preferred_element_type=jnp.float32)
            acc = acc + ws_ref[w_row:w_row + cout, K:K + 1]       # folded-BN shift
            return jnp.maximum(acc, 0.0) if relu else acc

        # ---- stem: conv3x3 + (folded) BN + ReLU, then 2x2/stride-2 max-pool.
        a = conv3x3(x_ref[...], R_STEM, STEM_CH, IN_CH, W1, M1, 0, relu=True)
        band_ref[0:STEM_CH, GUARD:GUARD + M1] = a                 # stage for the pool window
        p = a
        for off in (1, W1, W1 + 1):                               # (h,w+1), (h+1,w), (h+1,w+1)
            p = jnp.maximum(p, band_ref[0:STEM_CH, GUARD + off:GUARD + off + M1])
        # stride-2 keep == precomputed selection matmul (positions (2ho, 2wo) only).
        a = jnp.dot(p, sel1_ref[...], preferred_element_type=jnp.float32)   # (STEM_CH, M2)

        # ---- layer1 basic block (identity shortcut)
        y = conv3x3(a, R_L1A, STEM_CH, STEM_CH, W2, M2, 9, relu=True)
        y = conv3x3(y, R_L1B, STEM_CH, STEM_CH, W2, M2, 9, relu=False)
        a = jnp.maximum(a + y, 0.0)

        # ---- layer2 basic block (stride 2, 1x1 downsample shortcut)
        #      stride-2 conv == stride-1 conv at full res followed by even-position selection.
        y = conv3x3(a, R_L2A, L2_CH, STEM_CH, W2, M2, 9, relu=False)
        y = jnp.maximum(jnp.dot(y, sel2_ref[...], preferred_element_type=jnp.float32), 0.0)
        y = conv3x3(y, R_L2B, L2_CH, L2_CH, W3, M3, 18, relu=False)
        idn = jnp.dot(ws_ref[R_DS:R_DS + L2_CH, 0:STEM_CH], a,
                      preferred_element_type=jnp.float32)                   # 1x1 conv, full res
        idn = jnp.dot(idn, sel2_ref[...], preferred_element_type=jnp.float32)
        idn = idn + ws_ref[R_DS:R_DS + L2_CH, STEM_CH:STEM_CH + 1]          # folded-BN shift
        a = jnp.maximum(y + idn, 0.0)                                       # (L2_CH, M3)

        # ---- global average pool + 3-layer FC head (use_dropout=False -> identity)
        feat = jnp.dot(a, avg_ref[...], preferred_element_type=jnp.float32)  # (L2_CH, B)
        h = jnp.maximum(
            jnp.dot(ws_ref[R_FC1:R_FC1 + HIDDEN1, 0:IN_FEATURES], feat,
                    preferred_element_type=jnp.float32)
            + ws_ref[R_FC1:R_FC1 + HIDDEN1, IN_FEATURES:IN_FEATURES + 1], 0.0)
        h = jnp.maximum(
            jnp.dot(ws_ref[R_FC2:R_FC2 + HIDDEN2, 0:HIDDEN1], h,
                    preferred_element_type=jnp.float32)
            + ws_ref[R_FC2:R_FC2 + HIDDEN2, HIDDEN1:HIDDEN1 + 1], 0.0)
        out_ref[...] = (
            jnp.dot(ws_ref[R_FC3:R_FC3 + NUM_CLASSES, 0:HIDDEN2], h,
                    preferred_element_type=jnp.float32)
            + ws_ref[R_FC3:R_FC3 + NUM_CLASSES, HIDDEN2:HIDDEN2 + 1])

    return kernel


# ----------------------------------------------------------------------------- trace-time constants

def _conv_masks(B, Hc, Wc):
    """(9, B*Hc*Wc) f32 validity mask per 3x3 tap (zero-padding boundaries / image seams)."""
    p = jnp.arange(B * Hc * Wc, dtype=jnp.int32)
    h = (p // Wc) % Hc
    w = p % Wc
    rows = []
    for dy in (-1, 0, 1):
        for dx in (-1, 0, 1):
            rows.append((h + dy >= 0) & (h + dy < Hc) & (w + dx >= 0) & (w + dx < Wc))
    return jnp.stack(rows).astype(jnp.float32)


def _subsample_matrix(B, Hc, Wc):
    """(B*Hc*Wc, B*(Hc//2)*(Wc//2)) f32 selection matrix keeping positions (2ho, 2wo)."""
    Ho, Wo = Hc // 2, Wc // 2
    c = jnp.arange(B * Ho * Wo, dtype=jnp.int32)
    src = (c // (Ho * Wo)) * (Hc * Wc) + ((c // Wo) % Ho) * (2 * Wc) + (c % Wo) * 2
    r = jnp.arange(B * Hc * Wc, dtype=jnp.int32)
    return (r[:, None] == src[None, :]).astype(jnp.float32)


def _avg_matrix(B, hw):
    """(B*hw, B) f32 matrix implementing AdaptiveAvgPool2d(1) + flatten on (C, B*hw) slabs."""
    r = jnp.arange(B * hw, dtype=jnp.int32)
    return ((r[:, None] // hw) == jnp.arange(B, dtype=jnp.int32)[None, :]
            ).astype(jnp.float32) / hw


def _fold_bn_conv(w_hwio, bn):
    """Fold inference BN into a conv. Returns ((Cout, kh*kw*Cin) weights, (Cout,) shift)."""
    scale = bn["gamma"] * jax.lax.rsqrt(bn["var"] + BN_EPS)                # (Cout,)
    shift = bn["beta"] - bn["mean"] * scale
    kh, kw, cin, cout = w_hwio.shape
    w = jnp.transpose(w_hwio * scale[None, None, None, :], (3, 0, 1, 2))   # (Cout,kh,kw,Cin)
    return w.reshape(cout, kh * kw * cin), shift                           # col = tap*Cin + ci


def _pack_weight_slab(params):
    """All conv (BN-folded) / FC weights + biases packed into one (128, 145) f32 slab."""
    ws = jnp.zeros((WS_ROWS, WS_COLS), jnp.float32)

    def put(ws, row, w, b):
        cout, k = w.shape
        ws = ws.at[row:row + cout, 0:k].set(w)
        return ws.at[row:row + cout, k].set(b)                             # bias column

    ws = put(ws, R_STEM, *_fold_bn_conv(params["conv1_w"], params["bn1"]))
    ws = put(ws, R_L1A, *_fold_bn_conv(params["l1_conv1_w"], params["l1_bn1"]))
    ws = put(ws, R_L1B, *_fold_bn_conv(params["l1_conv2_w"], params["l1_bn2"]))
    ws = put(ws, R_L2A, *_fold_bn_conv(params["l2_conv1_w"], params["l2_bn1"]))
    ws = put(ws, R_L2B, *_fold_bn_conv(params["l2_conv2_w"], params["l2_bn2"]))
    ws = put(ws, R_DS, *_fold_bn_conv(params["l2_down_w"], params["l2_down_bn"]))
    ws = put(ws, R_FC1, params["fc1_w"].T, params["fc1_b"])
    ws = put(ws, R_FC2, params["fc2_w"].T, params["fc2_b"])
    ws = put(ws, R_FC3, params["fc3_w"].T, params["fc3_b"])
    return ws


# ----------------------------------------------------------------------------- JAX glue

def modified_resnet_forward(x_nchw, params):
    B, Cin, H, W = x_nchw.shape
    assert Cin == IN_CH
    assert H % 4 == 0 and W % 4 == 0

    H2, W2, H3, W3 = H // 2, W // 2, H // 4, W // 4
    M1, M2, M3 = B * H * W, B * H2 * W2, B * H3 * W3

    # NCHW (PyTorch) -> channel-major lane-dense slab (C, B*H*W). Layout plumbing only.
    x2d = jnp.transpose(x_nchw, (1, 0, 2, 3)).reshape(Cin, M1).astype(jnp.float32)

    # Everything data-independent is built here (constant-folded by XLA), never in-kernel.
    ws = _pack_weight_slab(params)
    masks = jnp.zeros((27, M1), jnp.float32)
    masks = masks.at[0:9, 0:M1].set(_conv_masks(B, H, W))
    masks = masks.at[9:18, 0:M2].set(_conv_masks(B, H2, W2))
    masks = masks.at[18:27, 0:M3].set(_conv_masks(B, H3, W3))
    sel1 = _subsample_matrix(B, H, W)          # stem-pool stride-2 keep
    sel2 = _subsample_matrix(B, H2, W2)        # layer2 stride-2 keep
    avg = _avg_matrix(B, H3 * W3)              # global average pool

    band_cols = -(-(GUARD + M1 + W + 1) // 128) * 128
    col_rows = 9 * L2_CH                       # max 9*Cin over all convs

    flops = 2 * (STEM_CH * 9 * IN_CH * M1 + STEM_CH * M1 * M2
                 + 2 * STEM_CH * 9 * STEM_CH * M2
                 + L2_CH * 9 * STEM_CH * M2 + L2_CH * M2 * M3
                 + L2_CH * 9 * L2_CH * M3
                 + L2_CH * STEM_CH * M2 + L2_CH * M2 * M3
                 + L2_CH * M3 * B
                 + HIDDEN1 * IN_FEATURES * B + HIDDEN2 * HIDDEN1 * B
                 + NUM_CLASSES * HIDDEN2 * B)
    bytes_accessed = 4 * (x2d.size + ws.size + masks.size + sel1.size + sel2.size
                          + avg.size + NUM_CLASSES * B)

    kernel = _make_fused_kernel(B, H, W)
    out_cb = pl.pallas_call(
        kernel,
        out_shape=jax.ShapeDtypeStruct((NUM_CLASSES, B), jnp.float32),
        scratch_shapes=[pltpu.VMEM((L2_CH, band_cols), jnp.float32),   # shifted-tap staging band
                        pltpu.VMEM((col_rows, M1), jnp.float32)],      # im2col slab
        cost_estimate=pl.CostEstimate(flops=flops, transcendentals=0,
                                      bytes_accessed=bytes_accessed),
    )(x2d, ws, masks, sel1, sel2, avg)

    return out_cb.T                                                    # (B, NUM_CLASSES)


# ----------------------------------------------------------------------------- pure-JAX reference

def reference_forward(x, params):
    """Independent pure-JAX forward of the same module (used only to validate the kernel)."""
    def bn(y, p):
        scale = p["gamma"] * jax.lax.rsqrt(p["var"] + BN_EPS)
        shift = p["beta"] - p["mean"] * scale
        return y * scale[None, :, None, None] + shift[None, :, None, None]

    def conv(y, w, stride, pad):
        return jax.lax.conv_general_dilated(
            y, w, (stride, stride), ((pad, pad), (pad, pad)),
            dimension_numbers=("NCHW", "HWIO", "NCHW"))

    relu = jax.nn.relu
    y = relu(bn(conv(x, params["conv1_w"], 1, 1), params["bn1"]))
    y = jax.lax.reduce_window(y, -jnp.inf, jax.lax.max, (1, 1, 2, 2), (1, 1, 2, 2), "VALID")
    z = relu(bn(conv(y, params["l1_conv1_w"], 1, 1), params["l1_bn1"]))
    z = bn(conv(z, params["l1_conv2_w"], 1, 1), params["l1_bn2"])
    y = relu(y + z)
    z = relu(bn(conv(y, params["l2_conv1_w"], 2, 1), params["l2_bn1"]))
    z = bn(conv(z, params["l2_conv2_w"], 1, 1), params["l2_bn2"])
    idn = bn(conv(y, params["l2_down_w"], 2, 0), params["l2_down_bn"])
    y = relu(z + idn)
    feat = jnp.mean(y, axis=(2, 3))                                    # GAP + flatten
    h = relu(feat @ params["fc1_w"] + params["fc1_b"])
    h = relu(h @ params["fc2_w"] + params["fc2_b"])
    return h @ params["fc3_w"] + params["fc3_b"]


# ----------------------------------------------------------------------------- parameters

def _bn_params(key, c):
    k1, k2 = jax.random.split(key)
    return {
        "gamma": 1.0 + 0.1 * jax.random.normal(k1, (c,), jnp.float32),
        "beta": 0.1 * jax.random.normal(k2, (c,), jnp.float32),
        "mean": jnp.zeros((c,), jnp.float32),
        "var": jnp.ones((c,), jnp.float32),
    }


def init_params(key):
    ks = jax.random.split(key, 20)
    w = lambda k, shape: 0.1 * jax.random.normal(k, shape, jnp.float32)
    return {
        # stem
        "conv1_w": w(ks[0], (3, 3, IN_CH, STEM_CH)),
        "bn1": _bn_params(ks[1], STEM_CH),
        # layer1 basic block (stride 1)
        "l1_conv1_w": w(ks[2], (3, 3, STEM_CH, STEM_CH)),
        "l1_bn1": _bn_params(ks[3], STEM_CH),
        "l1_conv2_w": w(ks[4], (3, 3, STEM_CH, STEM_CH)),
        "l1_bn2": _bn_params(ks[5], STEM_CH),
        # layer2 basic block (stride 2, downsample)
        "l2_conv1_w": w(ks[6], (3, 3, STEM_CH, L2_CH)),
        "l2_bn1": _bn_params(ks[7], L2_CH),
        "l2_conv2_w": w(ks[8], (3, 3, L2_CH, L2_CH)),
        "l2_bn2": _bn_params(ks[9], L2_CH),
        "l2_down_w": w(ks[10], (1, 1, STEM_CH, L2_CH)),
        "l2_down_bn": _bn_params(ks[11], L2_CH),
        # FC head (stored (in, out); PyTorch stores (out, in))
        "fc1_w": w(ks[12], (IN_FEATURES, HIDDEN1)),
        "fc1_b": w(ks[13], (HIDDEN1,)),
        "fc2_w": w(ks[14], (HIDDEN1, HIDDEN2)),
        "fc2_b": w(ks[15], (HIDDEN2,)),
        "fc3_w": w(ks[16], (HIDDEN2, NUM_CLASSES)),
        "fc3_b": w(ks[17], (NUM_CLASSES,)),
    }


# ----------------------------------------------------------------------------- main

if __name__ == "__main__":
    key = jax.random.PRNGKey(0)
    x = jax.random.normal(key, (2, IN_CH, 16, 16), jnp.float32)        # NCHW, like PyTorch
    params = init_params(jax.random.PRNGKey(42))

    fwd = jax.jit(modified_resnet_forward)
    out = jax.block_until_ready(fwd(x, params))

    assert out.shape == (2, NUM_CLASSES), out.shape
    assert out.dtype == jnp.float32
    assert bool(jnp.all(jnp.isfinite(out)))

    # Sanity check against an independent pure-JAX reference (loose tolerance: both paths run
    # matmuls/convs at the TPU default precision, so only gross structural bugs are flagged).
    ref = jax.jit(reference_forward)(x, params)
    assert bool(jnp.allclose(out, ref, rtol=5e-2, atol=1e-2)), (
        "kernel/reference mismatch, max abs err = " + str(jnp.max(jnp.abs(out - ref))))

    print("KERNEL_OK")
</pallas_src>

<mosaic_0001>
module attributes {stable_mosaic.version = 11 : i64} {
  func.func @kernel(%arg0: memref<4x512xf32, #tpu.memory_space<vmem>>, %arg1: memref<128x145xf32, #tpu.memory_space<vmem>>, %arg2: memref<27x512xf32, #tpu.memory_space<vmem>>, %arg3: memref<512x128xf32, #tpu.memory_space<vmem>>, %arg4: memref<128x32xf32, #tpu.memory_space<vmem>>, %arg5: memref<32x2xf32, #tpu.memory_space<vmem>>, %arg6: memref<2x2xf32, #tpu.memory_space<vmem>>, %arg7: memref<16x768xf32, #tpu.memory_space<vmem>>, %arg8: memref<144x512xf32, #tpu.memory_space<vmem>>) attributes {dimension_semantics = [], scalar_prefetch = 0 : i64, scratch_operands = 2 : i64, tpu.core_type = #tpu.core_type<tc>} {
    %cst = arith.constant 0.000000e+00 : f32
    %0 = vector.broadcast %cst : f32 to vector<16x768xf32>
    %c0 = arith.constant 0 : index
    %c0_0 = arith.constant 0 : index
    %1 = vector.load %arg7[%c0, %c0_0] : memref<16x768xf32, #tpu.memory_space<vmem>>, vector<16x768xf32>
    tpu.vector_store %arg7[%c0, %c0_0], %0 {strides = array<i32>} : memref<16x768xf32, #tpu.memory_space<vmem>>, vector<16x768xf32>,
    %c0_1 = arith.constant 0 : index
    %c0_2 = arith.constant 0 : index
    %2 = vector.load %arg0[%c0_1, %c0_2] : memref<4x512xf32, #tpu.memory_space<vmem>>, vector<4x512xf32>
    %c0_3 = arith.constant 0 : index
    %c128 = arith.constant 128 : index
    %3 = vector.load %arg7[%c0_3, %c128] : memref<16x768xf32, #tpu.memory_space<vmem>>, vector<4x512xf32>
    tpu.vector_store %arg7[%c0_3, %c128], %2 {strides = array<i32>} : memref<16x768xf32, #tpu.memory_space<vmem>>, vector<4x512xf32>,
    %c0_4 = arith.constant 0 : index
    %c111 = arith.constant 111 : index
    %4 = vector.load %arg7[%c0_4, %c111] : memref<16x768xf32, #tpu.memory_space<vmem>>, vector<4x512xf32>
    %c0_5 = arith.constant 0 : index
    %c0_6 = arith.constant 0 : index
    %5 = vector.load %arg2[%c0_5, %c0_6] : memref<27x512xf32, #tpu.memory_space<vmem>>, vector<1x512xf32>
    %6 = vector.broadcast %5 : vector<1x512xf32> to vector<4x512xf32>
    %7 = arith.mulf %4, %6 : vector<4x512xf32>
    %c0_7 = arith.constant 0 : index
    %c0_8 = arith.constant 0 : index
    %8 = vector.load %arg8[%c0_7, %c0_8] : memref<144x512xf32, #tpu.memory_space<vmem>>, vector<4x512xf32>
    tpu.vector_store %arg8[%c0_7, %c0_8], %7 {strides = array<i32>} : memref<144x512xf32, #tpu.memory_space<vmem>>, vector<4x512xf32>,
    %c0_9 = arith.constant 0 : index
    %c112 = arith.constant 112 : index
    %9 = vector.load %arg7[%c0_9, %c112] : memref<16x768xf32, #tpu.memory_space<vmem>>, vector<4x512xf32>
    %c1 = arith.constant 1 : index
    %c0_10 = arith.constant 0 : index
    %10 = vector.load %arg2[%c1, %c0_10] : memref<27x512xf32, #tpu.memory_space<vmem>>, vector<1x512xf32>
    %11 = vector.broadcast %10 : vector<1x512xf32> to vector<4x512xf32>
    %12 = arith.mulf %9, %11 : vector<4x512xf32>
    %c4 = arith.constant 4 : index
    %c0_11 = arith.constant 0 : index
    %13 = vector.load %arg8[%c4, %c0_11] : memref<144x512xf32, #tpu.memory_space<vmem>>, vector<4x512xf32>
    tpu.vector_store %arg8[%c4, %c0_11], %12 {strides = array<i32>} : memref<144x512xf32, #tpu.memory_space<vmem>>, vector<4x512xf32>,
    %c0_12 = arith.constant 0 : index
    %c113 = arith.constant 113 : index
    %14 = vector.load %arg7[%c0_12, %c113] : memref<16x768xf32, #tpu.memory_space<vmem>>, vector<4x512xf32>
    %c2 = arith.constant 2 : index
    %c0_13 = arith.constant 0 : index
    %15 = vector.load %arg2[%c2, %c0_13] : memref<27x512xf32, #tpu.memory_space<vmem>>, vector<1x512xf32>
    %16 = vector.broadcast %15 : vector<1x512xf32> to vector<4x512xf32>
    %17 = arith.mulf %14, %16 : vector<4x512xf32>
    %c8 = arith.constant 8 : index
    %c0_14 = arith.constant 0 : index
    %18 = vector.load %arg8[%c8, %c0_14] : memref<144x512xf32, #tpu.memory_space<vmem>>, vector<4x512xf32>
    tpu.vector_store %arg8[%c8, %c0_14], %17 {strides = array<i32>} : memref<144x512xf32, #tpu.memory_space<vmem>>, vector<4x512xf32>,
    %c0_15 = arith.constant 0 : index
    %c127 = arith.constant 127 : index
    %19 = vector.load %arg7[%c0_15, %c127] : memref<16x768xf32, #tpu.memory_space<vmem>>, vector<4x512xf32>
    %c3 = arith.constant 3 : index
    %c0_16 = arith.constant 0 : index
    %20 = vector.load %arg2[%c3, %c0_16] : memref<27x512xf32, #tpu.memory_space<vmem>>, vector<1x512xf32>
    %21 = vector.broadcast %20 : vector<1x512xf32> to vector<4x512xf32>
    %22 = arith.mulf %19, %21 : vector<4x512xf32>
    %c12 = arith.constant 12 : index
    %c0_17 = arith.constant 0 : index
    %23 = vector.load %arg8[%c12, %c0_17] : memref<144x512xf32, #tpu.memory_space<vmem>>, vector<4x512xf32>
    tpu.vector_store %arg8[%c12, %c0_17], %22 {strides = array<i32>} : memref<144x512xf32, #tpu.memory_space<vmem>>, vector<4x512xf32>,
    %c0_18 = arith.constant 0 : index
    %c128_19 = arith.constant 128 : index
    %24 = vector.load %arg7[%c0_18, %c128_19] : memref<16x768xf32, #tpu.memory_space<vmem>>, vector<4x512xf32>
    %c16 = arith.constant 16 : index
    %c0_20 = arith.constant 0 : index
    %25 = vector.load %arg8[%c16, %c0_20] : memref<144x512xf32, #tpu.memory_space<vmem>>, vector<4x512xf32>
    tpu.vector_store %arg8[%c16, %c0_20], %24 {strides = array<i32>} : memref<144x512xf32, #tpu.memory_space<vmem>>, vector<4x512xf32>,
    %c0_21 = arith.constant 0 : index
    %c129 = arith.constant 129 : index
    %26 = vector.load %arg7[%c0_21, %c129] : memref<16x768xf32, #tpu.memory_space<vmem>>, vector<4x512xf32>
    %c5 = arith.constant 5 : index
    %c0_22 = arith.constant 0 : index
    %27 = vector.load %arg2[%c5, %c0_22] : memref<27x512xf32, #tpu.memory_space<vmem>>, vector<1x512xf32>
    %28 = vector.broadcast %27 : vector<1x512xf32> to vector<4x512xf32>
    %29 = arith.mulf %26, %28 : vector<4x512xf32>
    %c20 = arith.constant 20 : index
    %c0_23 = arith.constant 0 : index
    %30 = vector.load %arg8[%c20, %c0_23] : memref<144x512xf32, #tpu.memory_space<vmem>>, vector<4x512xf32>
    tpu.vector_store %arg8[%c20, %c0_23], %29 {strides = array<i32>} : memref<144x512xf32, #tpu.memory_space<vmem>>, vector<4x512xf32>,
    %c0_24 = arith.constant 0 : index
    %c143 = arith.constant 143 : index
    %31 = vector.load %arg7[%c0_24, %c143] : memref<16x768xf32, #tpu.memory_space<vmem>>, vector<4x512xf32>
    %c6 = arith.constant 6 : index
    %c0_25 = arith.constant 0 : index
    %32 = vector.load %arg2[%c6, %c0_25] : memref<27x512xf32, #tpu.memory_space<vmem>>, vector<1x512xf32>
    %33 = vector.broadcast %32 : vector<1x512xf32> to vector<4x512xf32>
    %34 = arith.mulf %31, %33 : vector<4x512xf32>
    %c24 = arith.constant 24 : index
    %c0_26 = arith.constant 0 : index
    %35 = vector.load %arg8[%c24, %c0_26] : memref<144x512xf32, #tpu.memory_space<vmem>>, vector<4x512xf32>
    tpu.vector_store %arg8[%c24, %c0_26], %34 {strides = array<i32>} : memref<144x512xf32, #tpu.memory_space<vmem>>, vector<4x512xf32>,
    %c0_27 = arith.constant 0 : index
    %c144 = arith.constant 144 : index
    %36 = vector.load %arg7[%c0_27, %c144] : memref<16x768xf32, #tpu.memory_space<vmem>>, vector<4x512xf32>
    %c7 = arith.constant 7 : index
    %c0_28 = arith.constant 0 : index
    %37 = vector.load %arg2[%c7, %c0_28] : memref<27x512xf32, #tpu.memory_space<vmem>>, vector<1x512xf32>
    %38 = vector.broadcast %37 : vector<1x512xf32> to vector<4x512xf32>
    %39 = arith.mulf %36, %38 : vector<4x512xf32>
    %c28 = arith.constant 28 : index
    %c0_29 = arith.constant 0 : index
    %40 = vector.load %arg8[%c28, %c0_29] : memref<144x512xf32, #tpu.memory_space<vmem>>, vector<4x512xf32>
    tpu.vector_store %arg8[%c28, %c0_29], %39 {strides = array<i32>} : memref<144x512xf32, #tpu.memory_space<vmem>>, vector<4x512xf32>,
    %c0_30 = arith.constant 0 : index
    %c145 = arith.constant 145 : index
    %41 = vector.load %arg7[%c0_30, %c145] : memref<16x768xf32, #tpu.memory_space<vmem>>, vector<4x512xf32>
    %c8_31 = arith.constant 8 : index
    %c0_32 = arith.constant 0 : index
    %42 = vector.load %arg2[%c8_31, %c0_32] : memref<27x512xf32, #tpu.memory_space<vmem>>, vector<1x512xf32>
    %43 = vector.broadcast %42 : vector<1x512xf32> to vector<4x512xf32>
    %44 = arith.mulf %41, %43 : vector<4x512xf32>
    %c32 = arith.constant 32 : index
    %c0_33 = arith.constant 0 : index
    %45 = vector.load %arg8[%c32, %c0_33] : memref<144x512xf32, #tpu.memory_space<vmem>>, vector<4x512xf32>
    tpu.vector_store %arg8[%c32, %c0_33], %44 {strides = array<i32>} : memref<144x512xf32, #tpu.memory_space<vmem>>, vector<4x512xf32>,
    %c0_34 = arith.constant 0 : index
    %c0_35 = arith.constant 0 : index
    %46 = vector.load %arg1[%c0_34, %c0_35] : memref<128x145xf32, #tpu.memory_space<vmem>>, vector<8x36xf32>
    %c0_36 = arith.constant 0 : index
    %c0_37 = arith.constant 0 : index
    %47 = vector.load %arg8[%c0_36, %c0_37] : memref<144x512xf32, #tpu.memory_space<vmem>>, vector<36x512xf32>
    %cst_38 = arith.constant dense<0.000000e+00> : vector<8x512xf32>
    %48 = tpu.matmul %46, %47, %cst_38 {dimension_numbers = #tpu.dot_dimension_numbers<[1], [0], [0], [1], [0, 0, 1, 1], [], []>} : vector<8x36xf32>, vector<36x512xf32>, vector<8x512xf32> -> vector<8x512xf32>
    %c0_39 = arith.constant 0 : index
    %c36 = arith.constant 36 : index
    %49 = vector.load %arg1[%c0_39, %c36] : memref<128x145xf32, #tpu.memory_space<vmem>>, vector<8x1xf32>
    %50 = vector.broadcast %49 : vector<8x1xf32> to vector<8x512xf32>
    %51 = arith.addf %48, %50 : vector<8x512xf32>
    %cst_40 = arith.constant 0.000000e+00 : f32
    %52 = vector.broadcast %cst_40 : f32 to vector<8x512xf32>
    %53 = arith.maximumf %51, %52 : vector<8x512xf32>
    %c0_41 = arith.constant 0 : index
    %c128_42 = arith.constant 128 : index
    %54 = vector.load %arg7[%c0_41, %c128_42] : memref<16x768xf32, #tpu.memory_space<vmem>>, vector<8x512xf32>
    tpu.vector_store %arg7[%c0_41, %c128_42], %53 {strides = array<i32>} : memref<16x768xf32, #tpu.memory_space<vmem>>, vector<8x512xf32>,
    %c0_43 = arith.constant 0 : index
    %c129_44 = arith.constant 129 : index
    %55 = vector.load %arg7[%c0_43, %c129_44] : memref<16x768xf32, #tpu.memory_space<vmem>>, vector<8x512xf32>
    %56 = arith.maximumf %53, %55 : vector<8x512xf32>
    %c0_45 = arith.constant 0 : index
    %c144_46 = arith.constant 144 : index
    %57 = vector.load %arg7[%c0_45, %c144_46] : memref<16x768xf32, #tpu.memory_space<vmem>>, vector<8x512xf32>
    %58 = arith.maximumf %56, %57 : vector<8x512xf32>
    %c0_47 = arith.constant 0 : index
    %c145_48 = arith.constant 145 : index
    %59 = vector.load %arg7[%c0_47, %c145_48] : memref<16x768xf32, #tpu.memory_space<vmem>>, vector<8x512xf32>
    %60 = arith.maximumf %58, %59 : vector<8x512xf32>
    %c0_49 = arith.constant 0 : index
    %c0_50 = arith.constant 0 : index
    %61 = vector.load %arg3[%c0_49, %c0_50] : memref<512x128xf32, #tpu.memory_space<vmem>>, vector<512x128xf32>
    %cst_51 = arith.constant dense<0.000000e+00> : vector<8x128xf32>
    %62 = tpu.matmul %60, %61, %cst_51 {dimension_numbers = #tpu.dot_dimension_numbers<[1], [0], [0], [1], [0, 0, 1, 1], [], []>} : vector<8x512xf32>, vector<512x128xf32>, vector<8x128xf32> -> vector<8x128xf32>
    %c0_52 = arith.constant 0 : index
    %c128_53 = arith.constant 128 : index
    %63 = vector.load %arg7[%c0_52, %c128_53] : memref<16x768xf32, #tpu.memory_space<vmem>>, vector<8x128xf32>
    tpu.vector_store %arg7[%c0_52, %c128_53], %62 {strides = array<i32>} : memref<16x768xf32, #tpu.memory_space<vmem>>, vector<8x128xf32>,
    %c0_54 = arith.constant 0 : index
    %c119 = arith.constant 119 : index
    %64 = vector.load %arg7[%c0_54, %c119] : memref<16x768xf32, #tpu.memory_space<vmem>>, vector<8x128xf32>
    %c9 = arith.constant 9 : index
    %c0_55 = arith.constant 0 : index
    %65 = vector.load %arg2[%c9, %c0_55] : memref<27x512xf32, #tpu.memory_space<vmem>>, vector<1x128xf32>
    %66 = vector.broadcast %65 : vector<1x128xf32> to vector<8x128xf32>
    %67 = arith.mulf %64, %66 : vector<8x128xf32>
    %c0_56 = arith.constant 0 : index
    %c0_57 = arith.constant 0 : index
    %68 = vector.load %arg8[%c0_56, %c0_57] : memref<144x512xf32, #tpu.memory_space<vmem>>, vector<8x128xf32>
    tpu.vector_store %arg8[%c0_56, %c0_57], %67 {strides = array<i32>} : memref<144x512xf32, #tpu.memory_space<vmem>>, vector<8x128xf32>,
    %c0_58 = arith.constant 0 : index
    %c120 = arith.constant 120 : index
    %69 = vector.load %arg7[%c0_58, %c120] : memref<16x768xf32, #tpu.memory_space<vmem>>, vector<8x128xf32>
    %c10 = arith.constant 10 : index
    %c0_59 = arith.constant 0 : index
    %70 = vector.load %arg2[%c10, %c0_59] : memref<27x512xf32, #tpu.memory_space<vmem>>, vector<1x128xf32>
    %71 = vector.broadcast %70 : vector<1x128xf32> to vector<8x128xf32>
    %72 = arith.mulf %69, %71 : vector<8x128xf32>
    %c8_60 = arith.constant 8 : index
    %c0_61 = arith.constant 0 : index
    %73 = vector.load %arg8[%c8_60, %c0_61] : memref<144x512xf32, #tpu.memory_space<vmem>>, vector<8x128xf32>
    tpu.vector_store %arg8[%c8_60, %c0_61], %72 {strides = array<i32>} : memref<144x512xf32, #tpu.memory_space<vmem>>, vector<8x128xf32>,
    %c0_62 = arith.constant 0 : index
    %c121 = arith.constant 121 : index
    %74 = vector.load %arg7[%c0_62, %c121] : memref<16x768xf32, #tpu.memory_space<vmem>>, vector<8x128xf32>
    %c11 = arith.constant 11 : index
    %c0_63 = arith.constant 0 : index
    %75 = vector.load %arg2[%c11, %c0_63] : memref<27x512xf32, #tpu.memory_space<vmem>>, vector<1x128xf32>
    %76 = vector.broadcast %75 : vector<1x128xf32> to vector<8x128xf32>
    %77 = arith.mulf %74, %76 : vector<8x128xf32>
    %c16_64 = arith.constant 16 : index
    %c0_65 = arith.constant 0 : index
    %78 = vector.load %arg8[%c16_64, %c0_65] : memref<144x512xf32, #tpu.memory_space<vmem>>, vector<8x128xf32>
    tpu.vector_store %arg8[%c16_64, %c0_65], %77 {strides = array<i32>} : memref<144x512xf32, #tpu.memory_space<vmem>>, vector<8x128xf32>,
    %c0_66 = arith.constant 0 : index
    %c127_67 = arith.constant 127 : index
    %79 = vector.load %arg7[%c0_66, %c127_67] : memref<16x768xf32, #tpu.memory_space<vmem>>, vector<8x128xf32>
    %c12_68 = arith.constant 12 : index
    %c0_69 = arith.constant 0 : index
    %80 = vector.load %arg2[%c12_68, %c0_69] : memref<27x512xf32, #tpu.memory_space<vmem>>, vector<1x128xf32>
    %81 = vector.broadcast %80 : vector<1x128xf32> to vector<8x128xf32>
    %82 = arith.mulf %79, %81 : vector<8x128xf32>
    %c24_70 = arith.constant 24 : index
    %c0_71 = arith.constant 0 : index
    %83 = vector.load %arg8[%c24_70, %c0_71] : memref<144x512xf32, #tpu.memory_space<vmem>>, vector<8x128xf32>
    tpu.vector_store %arg8[%c24_70, %c0_71], %82 {strides = array<i32>} : memref<144x512xf32, #tpu.memory_space<vmem>>, vector<8x128xf32>,
    %c0_72 = arith.constant 0 : index
    %c128_73 = arith.constant 128 : index
    %84 = vector.load %arg7[%c0_72, %c128_73] : memref<16x768xf32, #tpu.memory_space<vmem>>, vector<8x128xf32>
    %c32_74 = arith.constant 32 : index
    %c0_75 = arith.constant 0 : index
    %85 = vector.load %arg8[%c32_74, %c0_75] : memref<144x512xf32, #tpu.memory_space<vmem>>, vector<8x128xf32>
    tpu.vector_store %arg8[%c32_74, %c0_75], %84 {strides = array<i32>} : memref<144x512xf32, #tpu.memory_space<vmem>>, vector<8x128xf32>,
    %c0_76 = arith.constant 0 : index
    %c129_77 = arith.constant 129 : index
    %86 = vector.load %arg7[%c0_76, %c129_77] : memref<16x768xf32, #tpu.memory_space<vmem>>, vector<8x128xf32>
    %c14 = arith.constant 14 : index
    %c0_78 = arith.constant 0 : index
    %87 = vector.load %arg2[%c14, %c0_78] : memref<27x512xf32, #tpu.memory_space<vmem>>, vector<1x128xf32>
    %88 = vector.broadcast %87 : vector<1x128xf32> to vector<8x128xf32>
    %89 = arith.mulf %86, %88 : vector<8x128xf32>
    %c40 = arith.constant 40 : index
    %c0_79 = arith.constant 0 : index
    %90 = vector.load %arg8[%c40, %c0_79] : memref<144x512xf32, #tpu.memory_space<vmem>>, vector<8x128xf32>
    tpu.vector_store %arg8[%c40, %c0_79], %89 {strides = array<i32>} : memref<144x512xf32, #tpu.memory_space<vmem>>, vector<8x128xf32>,
    %c0_80 = arith.constant 0 : index
    %c135 = arith.constant 135 : index
    %91 = vector.load %arg7[%c0_80, %c135] : memref<16x768xf32, #tpu.memory_space<vmem>>, vector<8x128xf32>
    %c15 = arith.constant 15 : index
    %c0_81 = arith.constant 0 : index
    %92 = vector.load %arg2[%c15, %c0_81] : memref<27x512xf32, #tpu.memory_space<vmem>>, vector<1x128xf32>
    %93 = vector.broadcast %92 : vector<1x128xf32> to vector<8x128xf32>
    %94 = arith.mulf %91, %93 : vector<8x128xf32>
    %c48 = arith.constant 48 : index
    %c0_82 = arith.constant 0 : index
    %95 = vector.load %arg8[%c48, %c0_82] : memref<144x512xf32, #tpu.memory_space<vmem>>, vector<8x128xf32>
    tpu.vector_store %arg8[%c48, %c0_82], %94 {strides = array<i32>} : memref<144x512xf32, #tpu.memory_space<vmem>>, vector<8x128xf32>,
    %c0_83 = arith.constant 0 : index
    %c136 = arith.constant 136 : index
    %96 = vector.load %arg7[%c0_83, %c136] : memref<16x768xf32, #tpu.memory_space<vmem>>, vector<8x128xf32>
    %c16_84 = arith.constant 16 : index
    %c0_85 = arith.constant 0 : index
    %97 = vector.load %arg2[%c16_84, %c0_85] : memref<27x512xf32, #tpu.memory_space<vmem>>, vector<1x128xf32>
    %98 = vector.broadcast %97 : vector<1x128xf32> to vector<8x128xf32>
    %99 = arith.mulf %96, %98 : vector<8x128xf32>
    %c56 = arith.constant 56 : index
    %c0_86 = arith.constant 0 : index
    %100 = vector.load %arg8[%c56, %c0_86] : memref<144x512xf32, #tpu.memory_space<vmem>>, vector<8x128xf32>
    tpu.vector_store %arg8[%c56, %c0_86], %99 {strides = array<i32>} : memref<144x512xf32, #tpu.memory_space<vmem>>, vector<8x128xf32>,
    %c0_87 = arith.constant 0 : index
    %c137 = arith.constant 137 : index
    %101 = vector.load %arg7[%c0_87, %c137] : memref<16x768xf32, #tpu.memory_space<vmem>>, vector<8x128xf32>
    %c17 = arith.constant 17 : index
    %c0_88 = arith.constant 0 : index
    %102 = vector.load %arg2[%c17, %c0_88] : memref<27x512xf32, #tpu.memory_space<vmem>>, vector<1x128xf32>
    %103 = vector.broadcast %102 : vector<1x128xf32> to vector<8x128xf32>
    %104 = arith.mulf %101, %103 : vector<8x128xf32>
    %c64 = arith.constant 64 : index
    %c0_89 = arith.constant 0 : index
    %105 = vector.load %arg8[%c64, %c0_89] : memref<144x512xf32, #tpu.memory_space<vmem>>, vector<8x128xf32>
    tpu.vector_store %arg8[%c64, %c0_89], %104 {strides = array<i32>} : memref<144x512xf32, #tpu.memory_space<vmem>>, vector<8x128xf32>,
    %c8_90 = arith.constant 8 : index
    %c0_91 = arith.constant 0 : index
    %106 = vector.load %arg1[%c8_90, %c0_91] : memref<128x145xf32, #tpu.memory_space<vmem>>, vector<8x72xf32>
    %c0_92 = arith.constant 0 : index
    %c0_93 = arith.constant 0 : index
    %107 = vector.load %arg8[%c0_92, %c0_93] : memref<144x512xf32, #tpu.memory_space<vmem>>, vector<72x128xf32>
    %cst_94 = arith.constant dense<0.000000e+00> : vector<8x128xf32>
    %108 = tpu.matmul %106, %107, %cst_94 {dimension_numbers = #tpu.dot_dimension_numbers<[1], [0], [0], [1], [0, 0, 1, 1], [], []>} : vector<8x72xf32>, vector<72x128xf32>, vector<8x128xf32> -> vector<8x128xf32>
    %c8_95 = arith.constant 8 : index
    %c72 = arith.constant 72 : index
    %109 = vector.load %arg1[%c8_95, %c72] : memref<128x145xf32, #tpu.memory_space<vmem>>, vector<8x1xf32>
    %110 = vector.broadcast %109 : vector<8x1xf32> to vector<8x128xf32>
    %111 = arith.addf %108, %110 : vector<8x128xf32>
    %cst_96 = arith.constant 0.000000e+00 : f32
    %112 = vector.broadcast %cst_96 : f32 to vector<8x128xf32>
    %113 = arith.maximumf %111, %112 : vector<8x128xf32>
    %c0_97 = arith.constant 0 : index
    %c128_98 = arith.constant 128 : index
    %114 = vector.load %arg7[%c0_97, %c128_98] : memref<16x768xf32, #tpu.memory_space<vmem>>, vector<8x128xf32>
    tpu.vector_store %arg7[%c0_97, %c128_98], %113 {strides = array<i32>} : memref<16x768xf32, #tpu.memory_space<vmem>>, vector<8x128xf32>,
    %c0_99 = arith.constant 0 : index
    %c119_100 = arith.constant 119 : index
    %115 = vector.load %arg7[%c0_99, %c119_100] : memref<16x768xf32, #tpu.memory_space<vmem>>, vector<8x128xf32>
    %c9_101 = arith.constant 9 : index
    %c0_102 = arith.constant 0 : index
    %116 = vector.load %arg2[%c9_101, %c0_102] : memref<27x512xf32, #tpu.memory_space<vmem>>, vector<1x128xf32>
    %117 = vector.broadcast %116 : vector<1x128xf32> to vector<8x128xf32>
    %118 = arith.mulf %115, %117 : vector<8x128xf32>
    %c0_103 = arith.constant 0 : index
    %c0_104 = arith.constant 0 : index
    %119 = vector.load %arg8[%c0_103, %c0_104] : memref<144x512xf32, #tpu.memory_space<vmem>>, vector<8x128xf32>
    tpu.vector_store %arg8[%c0_103, %c0_104], %118 {strides = array<i32>} : memref<144x512xf32, #tpu.memory_space<vmem>>, vector<8x128xf32>,
    %c0_105 = arith.constant 0 : index
    %c120_106 = arith.constant 120 : index
    %120 = vector.load %arg7[%c0_105, %c120_106] : memref<16x768xf32, #tpu.memory_space<vmem>>, vector<8x128xf32>
    %c10_107 = arith.constant 10 : index
    %c0_108 = arith.constant 0 : index
    %121 = vector.load %arg2[%c10_107, %c0_108] : memref<27x512xf32, #tpu.memory_space<vmem>>, vector<1x128xf32>
    %122 = vector.broadcast %121 : vector<1x128xf32> to vector<8x128xf32>
    %123 = arith.mulf %120, %122 : vector<8x128xf32>
    %c8_109 = arith.constant 8 : index
    %c0_110 = arith.constant 0 : index
    %124 = vector.load %arg8[%c8_109, %c0_110] : memref<144x512xf32, #tpu.memory_space<vmem>>, vector<8x128xf32>
    tpu.vector_store %arg8[%c8_109, %c0_110], %123 {strides = array<i32>} : memref<144x512xf32, #tpu.memory_space<vmem>>, vector<8x128xf32>,
    %c0_111 = arith.constant 0 : index
    %c121_112 = arith.constant 121 : index
    %125 = vector.load %arg7[%c0_111, %c121_112] : memref<16x768xf32, #tpu.memory_space<vmem>>, vector<8x128xf32>
    %c11_113 = arith.constant 11 : index
    %c0_114 = arith.constant 0 : index
    %126 = vector.load %arg2[%c11_113, %c0_114] : memref<27x512xf32, #tpu.memory_space<vmem>>, vector<1x128xf32>
    %127 = vector.broadcast %126 : vector<1x128xf32> to vector<8x128xf32>
    %128 = arith.mulf %125, %127 : vector<8x128xf32>
    %c16_115 = arith.constant 16 : index
    %c0_116 = arith.constant 0 : index
    %129 = vector.load %arg8[%c16_115, %c0_116] : memref<144x512xf32, #tpu.memory_space<vmem>>, vector<8x128xf32>
    tpu.vector_store %arg8[%c16_115, %c0_116], %128 {strides = array<i32>} : memref<144x512xf32, #tpu.memory_space<vmem>>, vector<8x128xf32>,
    %c0_117 = arith.constant 0 : index
    %c127_118 = arith.constant 127 : index
    %130 = vector.load %arg7[%c0_117, %c127_118] : memref<16x768xf32, #tpu.memory_space<vmem>>, vector<8x128xf32>
    %c12_119 = arith.constant 12 : index
    %c0_120 = arith.constant 0 : index
    %131 = vector.load %arg2[%c12_119, %c0_120] : memref<27x512xf32, #tpu.memory_space<vmem>>, vector<1x128xf32>
    %132 = vector.broadcast %131 : vector<1x128xf32> to vector<8x128xf32>
    %133 = arith.mulf %130, %132 : vector<8x128xf32>
    %c24_121 = arith.constant 24 : index
    %c0_122 = arith.constant 0 : index
    %134 = vector.load %arg8[%c24_121, %c0_122] : memref<144x512xf32, #tpu.memory_space<vmem>>, vector<8x128xf32>
    tpu.vector_store %arg8[%c24_121, %c0_122], %133 {strides = array<i32>} : memref<144x512xf32, #tpu.memory_space<vmem>>, vector<8x128xf32>,
    %c0_123 = arith.constant 0 : index
    %c128_124 = arith.constant 128 : index
    %135 = vector.load %arg7[%c0_123, %c128_124] : memref<16x768xf32, #tpu.memory_space<vmem>>, vector<8x128xf32>
    %c32_125 = arith.constant 32 : index
    %c0_126 = arith.constant 0 : index
    %136 = vector.load %arg8[%c32_125, %c0_126] : memref<144x512xf32, #tpu.memory_space<vmem>>, vector<8x128xf32>
    tpu.vector_store %arg8[%c32_125, %c0_126], %135 {strides = array<i32>} : memref<144x512xf32, #tpu.memory_space<vmem>>, vector<8x128xf32>,
    %c0_127 = arith.constant 0 : index
    %c129_128 = arith.constant 129 : index
    %137 = vector.load %arg7[%c0_127, %c129_128] : memref<16x768xf32, #tpu.memory_space<vmem>>, vector<8x128xf32>
    %c14_129 = arith.constant 14 : index
    %c0_130 = arith.constant 0 : index
    %138 = vector.load %arg2[%c14_129, %c0_130] : memref<27x512xf32, #tpu.memory_space<vmem>>, vector<1x128xf32>
    %139 = vector.broadcast %138 : vector<1x128xf32> to vector<8x128xf32>
    %140 = arith.mulf %137, %139 : vector<8x128xf32>
    %c40_131 = arith.constant 40 : index
    %c0_132 = arith.constant 0 : index
    %141 = vector.load %arg8[%c40_131, %c0_132] : memref<144x512xf32, #tpu.memory_space<vmem>>, vector<8x128xf32>
    tpu.vector_store %arg8[%c40_131, %c0_132], %140 {strides = array<i32>} : memref<144x512xf32, #tpu.memory_space<vmem>>, vector<8x128xf32>,
    %c0_133 = arith.constant 0 : index
    %c135_134 = arith.constant 135 : index
    %142 = vector.load %arg7[%c0_133, %c135_134] : memref<16x768xf32, #tpu.memory_space<vmem>>, vector<8x128xf32>
    %c15_135 = arith.constant 15 : index
    %c0_136 = arith.constant 0 : index
    %143 = vector.load %arg2[%c15_135, %c0_136] : memref<27x512xf32, #tpu.memory_space<vmem>>, vector<1x128xf32>
    %144 = vector.broadcast %143 : vector<1x128xf32> to vector<8x128xf32>
    %145 = arith.mulf %142, %144 : vector<8x128xf32>
    %c48_137 = arith.constant 48 : index
    %c0_138 = arith.constant 0 : index
    %146 = vector.load %arg8[%c48_137, %c0_138] : memref<144x512xf32, #tpu.memory_space<vmem>>, vector<8x128xf32>
    tpu.vector_store %arg8[%c48_137, %c0_138], %145 {strides = array<i32>} : memref<144x512xf32, #tpu.memory_space<vmem>>, vector<8x128xf32>,
    %c0_139 = arith.constant 0 : index
    %c136_140 = arith.constant 136 : index
    %147 = vector.load %arg7[%c0_139, %c136_140] : memref<16x768xf32, #tpu.memory_space<vmem>>, vector<8x128xf32>
    %c16_141 = arith.constant 16 : index
    %c0_142 = arith.constant 0 : index
    %148 = vector.load %arg2[%c16_141, %c0_142] : memref<27x512xf32, #tpu.memory_space<vmem>>, vector<1x128xf32>
    %149 = vector.broadcast %148 : vector<1x128xf32> to vector<8x128xf32>
    %150 = arith.mulf %147, %149 : vector<8x128xf32>
    %c56_143 = arith.constant 56 : index
    %c0_144 = arith.constant 0 : index
    %151 = vector.load %arg8[%c56_143, %c0_144] : memref<144x512xf32, #tpu.memory_space<vmem>>, vector<8x128xf32>
    tpu.vector_store %arg8[%c56_143, %c0_144], %150 {strides = array<i32>} : memref<144x512xf32, #tpu.memory_space<vmem>>, vector<8x128xf32>,
    %c0_145 = arith.constant 0 : index
    %c137_146 = arith.constant 137 : index
    %152 = vector.load %arg7[%c0_145, %c137_146] : memref<16x768xf32, #tpu.memory_space<vmem>>, vector<8x128xf32>
    %c17_147 = arith.constant 17 : index
    %c0_148 = arith.constant 0 : index
    %153 = vector.load %arg2[%c17_147, %c0_148] : memref<27x512xf32, #tpu.memory_space<vmem>>, vector<1x128xf32>
    %154 = vector.broadcast %153 : vector<1x128xf32> to vector<8x128xf32>
    %155 = arith.mulf %152, %154 : vector<8x128xf32>
    %c64_149 = arith.constant 64 : index
    %c0_150 = arith.constant 0 : index
    %156 = vector.load %arg8[%c64_149, %c0_150] : memref<144x512xf32, #tpu.memory_space<vmem>>, vector<8x128xf32>
    tpu.vector_store %arg8[%c64_149, %c0_150], %155 {strides = array<i32>} : memref<144x512xf32, #tpu.memory_space<vmem>>, vector<8x128xf32>,
    %c16_151 = arith.constant 16 : index
    %c0_152 = arith.constant 0 : index
    %157 = vector.load %arg1[%c16_151, %c0_152] : memref<128x145xf32, #tpu.memory_space<vmem>>, vector<8x72xf32>
    %c0_153 = arith.constant 0 : index
    %c0_154 = arith.constant 0 : index
    %158 = vector.load %arg8[%c0_153, %c0_154] : memref<144x512xf32, #tpu.memory_space<vmem>>, vector<72x128xf32>
    %cst_155 = arith.constant dense<0.000000e+00> : vector<8x128xf32>
    %159 = tpu.matmul %157, %158, %cst_155 {dimension_numbers = #tpu.dot_dimension_numbers<[1], [0], [0], [1], [0, 0, 1, 1], [], []>} : vector<8x72xf32>, vector<72x128xf32>, vector<8x128xf32> -> vector<8x128xf32>
    %c16_156 = arith.constant 16 : index
    %c72_157 = arith.constant 72 : index
    %160 = vector.load %arg1[%c16_156, %c72_157] : memref<128x145xf32, #tpu.memory_space<vmem>>, vector<8x1xf32>
    %161 = vector.broadcast %160 : vector<8x1xf32> to vector<8x128xf32>
    %162 = arith.addf %159, %161 : vector<8x128xf32>
    %163 = arith.addf %62, %162 : vector<8x128xf32>
    %cst_158 = arith.constant 0.000000e+00 : f32
    %164 = vector.broadcast %cst_158 : f32 to vector<8x128xf32>
    %165 = arith.maximumf %163, %164 : vector<8x128xf32>
    %c0_159 = arith.constant 0 : index
    %c128_160 = arith.constant 128 : index
    %166 = vector.load %arg7[%c0_159, %c128_160] : memref<16x768xf32, #tpu.memory_space<vmem>>, vector<8x128xf32>
    tpu.vector_store %arg7[%c0_159, %c128_160], %165 {strides = array<i32>} : memref<16x768xf32, #tpu.memory_space<vmem>>, vector<8x128xf32>,
    %c0_161 = arith.constant 0 : index
    %c119_162 = arith.constant 119 : index
    %167 = vector.load %arg7[%c0_161, %c119_162] : memref<16x768xf32, #tpu.memory_space<vmem>>, vector<8x128xf32>
    %c9_163 = arith.constant 9 : index
    %c0_164 = arith.constant 0 : index
    %168 = vector.load %arg2[%c9_163, %c0_164] : memref<27x512xf32, #tpu.memory_space<vmem>>, vector<1x128xf32>
    %169 = vector.broadcast %168 : vector<1x128xf32> to vector<8x128xf32>
    %170 = arith.mulf %167, %169 : vector<8x128xf32>
    %c0_165 = arith.constant 0 : index
    %c0_166 = arith.constant 0 : index
    %171 = vector.load %arg8[%c0_165, %c0_166] : memref<144x512xf32, #tpu.memory_space<vmem>>, vector<8x128xf32>
    tpu.vector_store %arg8[%c0_165, %c0_166], %170 {strides = array<i32>} : memref<144x512xf32, #tpu.memory_space<vmem>>, vector<8x128xf32>,
    %c0_167 = arith.constant 0 : index
    %c120_168 = arith.constant 120 : index
    %172 = vector.load %arg7[%c0_167, %c120_168] : memref<16x768xf32, #tpu.memory_space<vmem>>, vector<8x128xf32>
    %c10_169 = arith.constant 10 : index
    %c0_170 = arith.constant 0 : index
    %173 = vector.load %arg2[%c10_169, %c0_170] : memref<27x512xf32, #tpu.memory_space<vmem>>, vector<1x128xf32>
    %174 = vector.broadcast %173 : vector<1x128xf32> to vector<8x128xf32>
    %175 = arith.mulf %172, %174 : vector<8x128xf32>
    %c8_171 = arith.constant 8 : index
    %c0_172 = arith.constant 0 : index
    %176 = vector.load %arg8[%c8_171, %c0_172] : memref<144x512xf32, #tpu.memory_space<vmem>>, vector<8x128xf32>
    tpu.vector_store %arg8[%c8_171, %c0_172], %175 {strides = array<i32>} : memref<144x512xf32, #tpu.memory_space<vmem>>, vector<8x128xf32>,
    %c0_173 = arith.constant 0 : index
    %c121_174 = arith.constant 121 : index
    %177 = vector.load %arg7[%c0_173, %c121_174] : memref<16x768xf32, #tpu.memory_space<vmem>>, vector<8x128xf32>
    %c11_175 = arith.constant 11 : index
    %c0_176 = arith.constant 0 : index
    %178 = vector.load %arg2[%c11_175, %c0_176] : memref<27x512xf32, #tpu.memory_space<vmem>>, vector<1x128xf32>
    %179 = vector.broadcast %178 : vector<1x128xf32> to vector<8x128xf32>
    %180 = arith.mulf %177, %179 : vector<8x128xf32>
    %c16_177 = arith.constant 16 : index
    %c0_178 = arith.constant 0 : index
    %181 = vector.load %arg8[%c16_177, %c0_178] : memref<144x512xf32, #tpu.memory_space<vmem>>, vector<8x128xf32>
    tpu.vector_store %arg8[%c16_177, %c0_178], %180 {strides = array<i32>} : memref<144x512xf32, #tpu.memory_space<vmem>>, vector<8x128xf32>,
    %c0_179 = arith.constant 0 : index
    %c127_180 = arith.constant 127 : index
    %182 = vector.load %arg7[%c0_179, %c127_180] : memref<16x768xf32, #tpu.memory_space<vmem>>, vector<8x128xf32>
    %c12_181 = arith.constant 12 : index
    %c0_182 = arith.constant 0 : index
    %183 = vector.load %arg2[%c12_181, %c0_182] : memref<27x512xf32, #tpu.memory_space<vmem>>, vector<1x128xf32>
    %184 = vector.broadcast %183 : vector<1x128xf32> to vector<8x128xf32>
    %185 = arith.mulf %182, %184 : vector<8x128xf32>
    %c24_183 = arith.constant 24 : index
    %c0_184 = arith.constant 0 : index
    %186 = vector.load %arg8[%c24_183, %c0_184] : memref<144x512xf32, #tpu.memory_space<vmem>>, vector<8x128xf32>
    tpu.vector_store %arg8[%c24_183, %c0_184], %185 {strides = array<i32>} : memref<144x512xf32, #tpu.memory_space<vmem>>, vector<8x128xf32>,
    %c0_185 = arith.constant 0 : index
    %c128_186 = arith.constant 128 : index
    %187 = vector.load %arg7[%c0_185, %c128_186] : memref<16x768xf32, #tpu.memory_space<vmem>>, vector<8x128xf32>
    %c32_187 = arith.constant 32 : index
    %c0_188 = arith.constant 0 : index
    %188 = vector.load %arg8[%c32_187, %c0_188] : memref<144x512xf32, #tpu.memory_space<vmem>>, vector<8x128xf32>
    tpu.vector_store %arg8[%c32_187, %c0_188], %187 {strides = array<i32>} : memref<144x512xf32, #tpu.memory_space<vmem>>, vector<8x128xf32>,
    %c0_189 = arith.constant 0 : index
    %c129_190 = arith.constant 129 : index
    %189 = vector.load %arg7[%c0_189, %c129_190] : memref<16x768xf32, #tpu.memory_space<vmem>>, vector<8x128xf32>
    %c14_191 = arith.constant 14 : index
    %c0_192 = arith.constant 0 : index
    %190 = vector.load %arg2[%c14_191, %c0_192] : memref<27x512xf32, #tpu.memory_space<vmem>>, vector<1x128xf32>
    %191 = vector.broadcast %190 : vector<1x128xf32> to vector<8x128xf32>
    %192 = arith.mulf %189, %191 : vector<8x128xf32>
    %c40_193 = arith.constant 40 : index
    %c0_194 = arith.constant 0 : index
    %193 = vector.load %arg8[%c40_193, %c0_194] : memref<144x512xf32, #tpu.memory_space<vmem>>, vector<8x128xf32>
    tpu.vector_store %arg8[%c40_193, %c0_194], %192 {strides = array<i32>} : memref<144x512xf32, #tpu.memory_space<vmem>>, vector<8x128xf32>,
    %c0_195 = arith.constant 0 : index
    %c135_196 = arith.constant 135 : index
    %194 = vector.load %arg7[%c0_195, %c135_196] : memref<16x768xf32, #tpu.memory_space<vmem>>, vector<8x128xf32>
    %c15_197 = arith.constant 15 : index
    %c0_198 = arith.constant 0 : index
    %195 = vector.load %arg2[%c15_197, %c0_198] : memref<27x512xf32, #tpu.memory_space<vmem>>, vector<1x128xf32>
    %196 = vector.broadcast %195 : vector<1x128xf32> to vector<8x128xf32>
    %197 = arith.mulf %194, %196 : vector<8x128xf32>
    %c48_199 = arith.constant 48 : index
    %c0_200 = arith.constant 0 : index
    %198 = vector.load %arg8[%c48_199, %c0_200] : memref<144x512xf32, #tpu.memory_space<vmem>>, vector<8x128xf32>
    tpu.vector_store %arg8[%c48_199, %c0_200], %197 {strides = array<i32>} : memref<144x512xf32, #tpu.memory_space<vmem>>, vector<8x128xf32>,
    %c0_201 = arith.constant 0 : index
    %c136_202 = arith.constant 136 : index
    %199 = vector.load %arg7[%c0_201, %c136_202] : memref<16x768xf32, #tpu.memory_space<vmem>>, vector<8x128xf32>
    %c16_203 = arith.constant 16 : index
    %c0_204 = arith.constant 0 : index
    %200 = vector.load %arg2[%c16_203, %c0_204] : memref<27x512xf32, #tpu.memory_space<vmem>>, vector<1x128xf32>
    %201 = vector.broadcast %200 : vector<1x128xf32> to vector<8x128xf32>
    %202 = arith.mulf %199, %201 : vector<8x128xf32>
    %c56_205 = arith.constant 56 : index
    %c0_206 = arith.constant 0 : index
    %203 = vector.load %arg8[%c56_205, %c0_206] : memref<144x512xf32, #tpu.memory_space<vmem>>, vector<8x128xf32>
    tpu.vector_store %arg8[%c56_205, %c0_206], %202 {strides = array<i32>} : memref<144x512xf32, #tpu.memory_space<vmem>>, vector<8x128xf32>,
    %c0_207 = arith.constant 0 : index
    %c137_208 = arith.constant 137 : index
    %204 = vector.load %arg7[%c0_207, %c137_208] : memref<16x768xf32, #tpu.memory_space<vmem>>, vector<8x128xf32>
    %c17_209 = arith.constant 17 : index
    %c0_210 = arith.constant 0 : index
    %205 = vector.load %arg2[%c17_209, %c0_210] : memref<27x512xf32, #tpu.memory_space<vmem>>, vector<1x128xf32>
    %206 = vector.broadcast %205 : vector<1x128xf32> to vector<8x128xf32>
    %207 = arith.mulf %204, %206 : vector<8x128xf32>
    %c64_211 = arith.constant 64 : index
    %c0_212 = arith.constant 0 : index
    %208 = vector.load %arg8[%c64_211, %c0_212] : memref<144x512xf32, #tpu.memory_space<vmem>>, vector<8x128xf32>
    tpu.vector_store %arg8[%c64_211, %c0_212], %207 {strides = array<i32>} : memref<144x512xf32, #tpu.memory_space<vmem>>, vector<8x128xf32>,
    %c24_213 = arith.constant 24 : index
    %c0_214 = arith.constant 0 : index
    %209 = vector.load %arg1[%c24_213, %c0_214] : memref<128x145xf32, #tpu.memory_space<vmem>>, vector<16x72xf32>
    %c0_215 = arith.constant 0 : index
    %c0_216 = arith.constant 0 : index
    %210 = vector.load %arg8[%c0_215, %c0_216] : memref<144x512xf32, #tpu.memory_space<vmem>>, vector<72x128xf32>
    %cst_217 = arith.constant dense<0.000000e+00> : vector<16x128xf32>
    %211 = tpu.matmul %209, %210, %cst_217 {dimension_numbers = #tpu.dot_dimension_numbers<[1], [0], [0], [1], [0, 0, 1, 1], [], []>} : vector<16x72xf32>, vector<72x128xf32>, vector<16x128xf32> -> vector<16x128xf32>
    %c24_218 = arith.constant 24 : index
    %c72_219 = arith.constant 72 : index
    %212 = vector.load %arg1[%c24_218, %c72_219] : memref<128x145xf32, #tpu.memory_space<vmem>>, vector<16x1xf32>
    %213 = vector.broadcast %212 : vector<16x1xf32> to vector<16x128xf32>
    %214 = arith.addf %211, %213 : vector<16x128xf32>
    %c0_220 = arith.constant 0 : index
    %c0_221 = arith.constant 0 : index
    %215 = vector.load %arg4[%c0_220, %c0_221] : memref<128x32xf32, #tpu.memory_space<vmem>>, vector<128x32xf32>
    %cst_222 = arith.constant dense<0.000000e+00> : vector<16x32xf32>
    %216 = tpu.matmul %214, %215, %cst_222 {dimension_numbers = #tpu.dot_dimension_numbers<[1], [0], [0], [1], [0, 0, 1, 1], [], []>} : vector<16x128xf32>, vector<128x32xf32>, vector<16x32xf32> -> vector<16x32xf32>
    %cst_223 = arith.constant 0.000000e+00 : f32
    %217 = vector.broadcast %cst_223 : f32 to vector<16x32xf32>
    %218 = arith.maximumf %216, %217 : vector<16x32xf32>
    %c0_224 = arith.constant 0 : index
    %c128_225 = arith.constant 128 : index
    %219 = vector.load %arg7[%c0_224, %c128_225] : memref<16x768xf32, #tpu.memory_space<vmem>>, vector<16x32xf32>
    tpu.vector_store %arg7[%c0_224, %c128_225], %218 {strides = array<i32>} : memref<16x768xf32, #tpu.memory_space<vmem>>, vector<16x32xf32>,
    %c0_226 = arith.constant 0 : index
    %c123 = arith.constant 123 : index
    %220 = vector.load %arg7[%c0_226, %c123] : memref<16x768xf32, #tpu.memory_space<vmem>>, vector<16x32xf32>
    %c18 = arith.constant 18 : index
    %c0_227 = arith.constant 0 : index
    %221 = vector.load %arg2[%c18, %c0_227] : memref<27x512xf32, #tpu.memory_space<vmem>>, vector<1x32xf32>
    %222 = vector.broadcast %221 : vector<1x32xf32> to vector<16x32xf32>
    %223 = arith.mulf %220, %222 : vector<16x32xf32>
    %c0_228 = arith.constant 0 : index
    %c0_229 = arith.constant 0 : index
    %224 = vector.load %arg8[%c0_228, %c0_229] : memref<144x512xf32, #tpu.memory_space<vmem>>, vector<16x32xf32>
    tpu.vector_store %arg8[%c0_228, %c0_229], %223 {strides = array<i32>} : memref<144x512xf32, #tpu.memory_space<vmem>>, vector<16x32xf32>,
    %c0_230 = arith.constant 0 : index
    %c124 = arith.constant 124 : index
    %225 = vector.load %arg7[%c0_230, %c124] : memref<16x768xf32, #tpu.memory_space<vmem>>, vector<16x32xf32>
    %c19 = arith.constant 19 : index
    %c0_231 = arith.constant 0 : index
    %226 = vector.load %arg2[%c19, %c0_231] : memref<27x512xf32, #tpu.memory_space<vmem>>, vector<1x32xf32>
    %227 = vector.broadcast %226 : vector<1x32xf32> to vector<16x32xf32>
    %228 = arith.mulf %225, %227 : vector<16x32xf32>
    %c16_232 = arith.constant 16 : index
    %c0_233 = arith.constant 0 : index
    %229 = vector.load %arg8[%c16_232, %c0_233] : memref<144x512xf32, #tpu.memory_space<vmem>>, vector<16x32xf32>
    tpu.vector_store %arg8[%c16_232, %c0_233], %228 {strides = array<i32>} : memref<144x512xf32, #tpu.memory_space<vmem>>, vector<16x32xf32>,
    %c0_234 = arith.constant 0 : index
    %c125 = arith.constant 125 : index
    %230 = vector.load %arg7[%c0_234, %c125] : memref<16x768xf32, #tpu.memory_space<vmem>>, vector<16x32xf32>
    %c20_235 = arith.constant 20 : index
    %c0_236 = arith.constant 0 : index
    %231 = vector.load %arg2[%c20_235, %c0_236] : memref<27x512xf32, #tpu.memory_space<vmem>>, vector<1x32xf32>
    %232 = vector.broadcast %231 : vector<1x32xf32> to vector<16x32xf32>
    %233 = arith.mulf %230, %232 : vector<16x32xf32>
    %c32_237 = arith.constant 32 : index
    %c0_238 = arith.constant 0 : index
    %234 = vector.load %arg8[%c32_237, %c0_238] : memref<144x512xf32, #tpu.memory_space<vmem>>, vector<16x32xf32>
    tpu.vector_store %arg8[%c32_237, %c0_238], %233 {strides = array<i32>} : memref<144x512xf32, #tpu.memory_space<vmem>>, vector<16x32xf32>,
    %c0_239 = arith.constant 0 : index
    %c127_240 = arith.constant 127 : index
    %235 = vector.load %arg7[%c0_239, %c127_240] : memref<16x768xf32, #tpu.memory_space<vmem>>, vector<16x32xf32>
    %c21 = arith.constant 21 : index
    %c0_241 = arith.constant 0 : index
    %236 = vector.load %arg2[%c21, %c0_241] : memref<27x512xf32, #tpu.memory_space<vmem>>, vector<1x32xf32>
    %237 = vector.broadcast %236 : vector<1x32xf32> to vector<16x32xf32>
    %238 = arith.mulf %235, %237 : vector<16x32xf32>
    %c48_242 = arith.constant 48 : index
    %c0_243 = arith.constant 0 : index
    %239 = vector.load %arg8[%c48_242, %c0_243] : memref<144x512xf32, #tpu.memory_space<vmem>>, vector<16x32xf32>
    tpu.vector_store %arg8[%c48_242, %c0_243], %238 {strides = array<i32>} : memref<144x512xf32, #tpu.memory_space<vmem>>, vector<16x32xf32>,
    %c0_244 = arith.constant 0 : index
    %c128_245 = arith.constant 128 : index
    %240 = vector.load %arg7[%c0_244, %c128_245] : memref<16x768xf32, #tpu.memory_space<vmem>>, vector<16x32xf32>
    %c64_246 = arith.constant 64 : index
    %c0_247 = arith.constant 0 : index
    %241 = vector.load %arg8[%c64_246, %c0_247] : memref<144x512xf32, #tpu.memory_space<vmem>>, vector<16x32xf32>
    tpu.vector_store %arg8[%c64_246, %c0_247], %240 {strides = array<i32>} : memref<144x512xf32, #tpu.memory_space<vmem>>, vector<16x32xf32>,
    %c0_248 = arith.constant 0 : index
    %c129_249 = arith.constant 129 : index
    %242 = vector.load %arg7[%c0_248, %c129_249] : memref<16x768xf32, #tpu.memory_space<vmem>>, vector<16x32xf32>
    %c23 = arith.constant 23 : index
    %c0_250 = arith.constant 0 : index
    %243 = vector.load %arg2[%c23, %c0_250] : memref<27x512xf32, #tpu.memory_space<vmem>>, vector<1x32xf32>
    %244 = vector.broadcast %243 : vector<1x32xf32> to vector<16x32xf32>
    %245 = arith.mulf %242, %244 : vector<16x32xf32>
    %c80 = arith.constant 80 : index
    %c0_251 = arith.constant 0 : index
    %246 = vector.load %arg8[%c80, %c0_251] : memref<144x512xf32, #tpu.memory_space<vmem>>, vector<16x32xf32>
    tpu.vector_store %arg8[%c80, %c0_251], %245 {strides = array<i32>} : memref<144x512xf32, #tpu.memory_space<vmem>>, vector<16x32xf32>,
    %c0_252 = arith.constant 0 : index
    %c131 = arith.constant 131 : index
    %247 = vector.load %arg7[%c0_252, %c131] : memref<16x768xf32, #tpu.memory_space<vmem>>, vector<16x32xf32>
    %c24_253 = arith.constant 24 : index
    %c0_254 = arith.constant 0 : index
    %248 = vector.load %arg2[%c24_253, %c0_254] : memref<27x512xf32, #tpu.memory_space<vmem>>, vector<1x32xf32>
    %249 = vector.broadcast %248 : vector<1x32xf32> to vector<16x32xf32>
    %250 = arith.mulf %247, %249 : vector<16x32xf32>
    %c96 = arith.constant 96 : index
    %c0_255 = arith.constant 0 : index
    %251 = vector.load %arg8[%c96, %c0_255] : memref<144x512xf32, #tpu.memory_space<vmem>>, vector<16x32xf32>
    tpu.vector_store %arg8[%c96, %c0_255], %250 {strides = array<i32>} : memref<144x512xf32, #tpu.memory_space<vmem>>, vector<16x32xf32>,
    %c0_256 = arith.constant 0 : index
    %c132 = arith.constant 132 : index
    %252 = vector.load %arg7[%c0_256, %c132] : memref<16x768xf32, #tpu.memory_space<vmem>>, vector<16x32xf32>
    %c25 = arith.constant 25 : index
    %c0_257 = arith.constant 0 : index
    %253 = vector.load %arg2[%c25, %c0_257] : memref<27x512xf32, #tpu.memory_space<vmem>>, vector<1x32xf32>
    %254 = vector.broadcast %253 : vector<1x32xf32> to vector<16x32xf32>
    %255 = arith.mulf %252, %254 : vector<16x32xf32>
    %c112_258 = arith.constant 112 : index
    %c0_259 = arith.constant 0 : index
    %256 = vector.load %arg8[%c112_258, %c0_259] : memref<144x512xf32, #tpu.memory_space<vmem>>, vector<16x32xf32>
    tpu.vector_store %arg8[%c112_258, %c0_259], %255 {strides = array<i32>} : memref<144x512xf32, #tpu.memory_space<vmem>>, vector<16x32xf32>,
    %c0_260 = arith.constant 0 : index
    %c133 = arith.constant 133 : index
    %257 = vector.load %arg7[%c0_260, %c133] : memref<16x768xf32, #tpu.memory_space<vmem>>, vector<16x32xf32>
    %c26 = arith.constant 26 : index
    %c0_261 = arith.constant 0 : index
    %258 = vector.load %arg2[%c26, %c0_261] : memref<27x512xf32, #tpu.memory_space<vmem>>, vector<1x32xf32>
    %259 = vector.broadcast %258 : vector<1x32xf32> to vector<16x32xf32>
    %260 = arith.mulf %257, %259 : vector<16x32xf32>
    %c128_262 = arith.constant 128 : index
    %c0_263 = arith.constant 0 : index
    %261 = vector.load %arg8[%c128_262, %c0_263] : memref<144x512xf32, #tpu.memory_space<vmem>>, vector<16x32xf32>
    tpu.vector_store %arg8[%c128_262, %c0_263], %260 {strides = array<i32>} : memref<144x512xf32, #tpu.memory_space<vmem>>, vector<16x32xf32>,
    %c40_264 = arith.constant 40 : index
    %c0_265 = arith.constant 0 : index
    %262 = vector.load %arg1[%c40_264, %c0_265] : memref<128x145xf32, #tpu.memory_space<vmem>>, vector<16x144xf32>
    %c0_266 = arith.constant 0 : index
    %c0_267 = arith.constant 0 : index
    %263 = vector.load %arg8[%c0_266, %c0_267] : memref<144x512xf32, #tpu.memory_space<vmem>>, vector<144x32xf32>
    %cst_268 = arith.constant dense<0.000000e+00> : vector<16x32xf32>
    %264 = tpu.matmul %262, %263, %cst_268 {dimension_numbers = #tpu.dot_dimension_numbers<[1], [0], [0], [1], [0, 0, 1, 1], [], []>} : vector<16x144xf32>, vector<144x32xf32>, vector<16x32xf32> -> vector<16x32xf32>
    %c40_269 = arith.constant 40 : index
    %c144_270 = arith.constant 144 : index
    %265 = vector.load %arg1[%c40_269, %c144_270] : memref<128x145xf32, #tpu.memory_space<vmem>>, vector<16x1xf32>
    %266 = vector.broadcast %265 : vector<16x1xf32> to vector<16x32xf32>
    %267 = arith.addf %264, %266 : vector<16x32xf32>
    %c56_271 = arith.constant 56 : index
    %c0_272 = arith.constant 0 : index
    %268 = vector.load %arg1[%c56_271, %c0_272] : memref<128x145xf32, #tpu.memory_space<vmem>>, vector<16x8xf32>
    %cst_273 = arith.constant dense<0.000000e+00> : vector<16x128xf32>
    %269 = tpu.matmul %268, %165, %cst_273 {dimension_numbers = #tpu.dot_dimension_numbers<[1], [0], [0], [1], [0, 0, 1, 1], [], []>} : vector<16x8xf32>, vector<8x128xf32>, vector<16x128xf32> -> vector<16x128xf32>
    %c0_274 = arith.constant 0 : index
    %c0_275 = arith.constant 0 : index
    %270 = vector.load %arg4[%c0_274, %c0_275] : memref<128x32xf32, #tpu.memory_space<vmem>>, vector<128x32xf32>
    %cst_276 = arith.constant dense<0.000000e+00> : vector<16x32xf32>
    %271 = tpu.matmul %269, %270, %cst_276 {dimension_numbers = #tpu.dot_dimension_numbers<[1], [0], [0], [1], [0, 0, 1, 1], [], []>} : vector<16x128xf32>, vector<128x32xf32>, vector<16x32xf32> -> vector<16x32xf32>
    %c56_277 = arith.constant 56 : index
    %c8_278 = arith.constant 8 : index
    %272 = vector.load %arg1[%c56_277, %c8_278] : memref<128x145xf32, #tpu.memory_space<vmem>>, vector<16x1xf32>
    %273 = vector.broadcast %272 : vector<16x1xf32> to vector<16x32xf32>
    %274 = arith.addf %271, %273 : vector<16x32xf32>
    %275 = arith.addf %267, %274 : vector<16x32xf32>
    %cst_279 = arith.constant 0.000000e+00 : f32
    %276 = vector.broadcast %cst_279 : f32 to vector<16x32xf32>
    %277 = arith.maximumf %275, %276 : vector<16x32xf32>
    %c0_280 = arith.constant 0 : index
    %c0_281 = arith.constant 0 : index
    %278 = vector.load %arg5[%c0_280, %c0_281] : memref<32x2xf32, #tpu.memory_space<vmem>>, vector<32x2xf32>
    %cst_282 = arith.constant dense<0.000000e+00> : vector<16x2xf32>
    %279 = tpu.matmul %277, %278, %cst_282 {dimension_numbers = #tpu.dot_dimension_numbers<[1], [0], [0], [1], [0, 0, 1, 1], [], []>} : vector<16x32xf32>, vector<32x2xf32>, vector<16x2xf32> -> vector<16x2xf32>
    %c72_283 = arith.constant 72 : index
    %c0_284 = arith.constant 0 : index
    %280 = vector.load %arg1[%c72_283, %c0_284] : memref<128x145xf32, #tpu.memory_space<vmem>>, vector<32x16xf32>
    %cst_285 = arith.constant dense<0.000000e+00> : vector<32x2xf32>
    %281 = tpu.matmul %280, %279, %cst_285 {dimension_numbers = #tpu.dot_dimension_numbers<[1], [0], [0], [1], [0, 0, 1, 1], [], []>} : vector<32x16xf32>, vector<16x2xf32>, vector<32x2xf32> -> vector<32x2xf32>
    %c72_286 = arith.constant 72 : index
    %c16_287 = arith.constant 16 : index
    %282 = vector.load %arg1[%c72_286, %c16_287] : memref<128x145xf32, #tpu.memory_space<vmem>>, vector<32x1xf32>
    %283 = vector.broadcast %282 : vector<32x1xf32> to vector<32x2xf32>
    %284 = arith.addf %281, %283 : vector<32x2xf32>
    %cst_288 = arith.constant 0.000000e+00 : f32
    %285 = vector.broadcast %cst_288 : f32 to vector<32x2xf32>
    %286 = arith.maximumf %284, %285 : vector<32x2xf32>
    %c104 = arith.constant 104 : index
    %c0_289 = arith.constant 0 : index
    %287 = vector.load %arg1[%c104, %c0_289] : memref<128x145xf32, #tpu.memory_space<vmem>>, vector<16x32xf32>
    %cst_290 = arith.constant dense<0.000000e+00> : vector<16x2xf32>
    %288 = tpu.matmul %287, %286, %cst_290 {dimension_numbers = #tpu.dot_dimension_numbers<[1], [0], [0], [1], [0, 0, 1, 1], [], []>} : vector<16x32xf32>, vector<32x2xf32>, vector<16x2xf32> -> vector<16x2xf32>
    %c104_291 = arith.constant 104 : index
    %c32_292 = arith.constant 32 : index
    %289 = vector.load %arg1[%c104_291, %c32_292] : memref<128x145xf32, #tpu.memory_space<vmem>>, vector<16x1xf32>
    %290 = vector.broadcast %289 : vector<16x1xf32> to vector<16x2xf32>
    %291 = arith.addf %288, %290 : vector<16x2xf32>
    %cst_293 = arith.constant 0.000000e+00 : f32
    %292 = vector.broadcast %cst_293 : f32 to vector<16x2xf32>
    %293 = arith.maximumf %291, %292 : vector<16x2xf32>
    %c120_294 = arith.constant 120 : index
    %c0_295 = arith.constant 0 : index
    %294 = vector.load %arg1[%c120_294, %c0_295] : memref<128x145xf32, #tpu.memory_space<vmem>>, vector<2x16xf32>
    %cst_296 = arith.constant dense<0.000000e+00> : vector<2x2xf32>
    %295 = tpu.matmul %294, %293, %cst_296 {dimension_numbers = #tpu.dot_dimension_numbers<[1], [0], [0], [1], [0, 0, 1, 1], [], []>} : vector<2x16xf32>, vector<16x2xf32>, vector<2x2xf32> -> vector<2x2xf32>
    %c120_297 = arith.constant 120 : index
    %c16_298 = arith.constant 16 : index
    %296 = vector.load %arg1[%c120_297, %c16_298] : memref<128x145xf32, #tpu.memory_space<vmem>>, vector<2x1xf32>
    %297 = vector.broadcast %296 : vector<2x1xf32> to vector<2x2xf32>
    %298 = arith.addf %295, %297 : vector<2x2xf32>
    %c0_299 = arith.constant 0 : index
    %c0_300 = arith.constant 0 : index
    %299 = vector.load %arg6[%c0_299, %c0_300] : memref<2x2xf32, #tpu.memory_space<vmem>>, vector<2x2xf32>
    tpu.vector_store %arg6[%c0_299, %c0_300], %298 {strides = array<i32>} : memref<2x2xf32, #tpu.memory_space<vmem>>, vector<2x2xf32>,
    return
  }
}

</mosaic_0001>

<llo_original>
// kernel: modified_resnet_forward.1
$region0: #{modified_resnet_forward.1}
  #allocation0 [shape = 'u32[]', space=smem, size = 0x4, offset = 0x4, fixed_abs, tag = 'smem constant byte address 0x4 - core index']
  #allocation1 [shape = 'u32[144,128]{1,0:T(1,128)}', space=vmem, size = 0x12000, scoped, tag = 'internal scratch']
  #allocation2 [shape = 'f32[16,768]{1,0:T(8,128)}', space=vmem, size = 0xc000, scoped, tag = 'scratch operand']
  #allocation3 [shape = 'f32[144,512]{1,0:T(8,128)}', space=vmem, size = 0x48000, scoped, tag = 'scratch operand']
  %s0 = inlined_call_operand.vmem [shape: f32[4,512], index: 0, kind: input, shape index: {}]
  %s1 = inlined_call_operand.vmem [shape: f32[128,145], index: 1, kind: input, shape index: {}]
  %s2 = inlined_call_operand.vmem [shape: f32[27,512], index: 2, kind: input, shape index: {}]
  %s3 = inlined_call_operand.vmem [shape: f32[512,128], index: 3, kind: input, shape index: {}]
  %s4 = inlined_call_operand.vmem [shape: f32[128,32], index: 4, kind: input, shape index: {}]
  %s5 = inlined_call_operand.vmem [shape: f32[32,2], index: 5, kind: input, shape index: {}]
  %s6 = inlined_call_operand.vmem [shape: f32[2,2], index: 6, kind: output, shape index: {}]
  %s7 = sld [smem:[#allocation0]]
  $region34: #{modified_resnet_forward.1} parent=0
    _
  %s9 = ssub.s32 1, %s7
  %s10 = scalar_select 0, %s9, %s7
  // Predicated region
  $region2: #{modified_resnet_forward.1} parent=0 // pred_check
    _
  $region3: #{modified_resnet_forward.1} parent=0 // pred_check_branch
    %12 = sbr.rel (0) target = $region5
  $region4: #{modified_resnet_forward.1} parent=0 // pred_region
    _
  $region5: #{modified_resnet_forward.1} parent=0 // pred_fallthru
    _
  // Predicated region
  $region6: #{modified_resnet_forward.1} parent=0 // pred_check
    _
  $region7: #{modified_resnet_forward.1} parent=0 // pred_check_branch
    %14 = sbr.rel (0) target = $region9
  $region8: #{modified_resnet_forward.1} parent=0 // pred_region
    _
  $region9: #{modified_resnet_forward.1} parent=0 // pred_fallthru
    _
  // Predicated region
  $region10: #{modified_resnet_forward.1} parent=0 // pred_check
    _
  $region11: #{modified_resnet_forward.1} parent=0 // pred_check_branch
    %16 = sbr.rel (0) target = $region13
  $region12: #{modified_resnet_forward.1} parent=0 // pred_region
    _
  $region13: #{modified_resnet_forward.1} parent=0 // pred_fallthru
    _
  // Predicated region
  $region14: #{modified_resnet_forward.1} parent=0 // pred_check
    _
  $region15: #{modified_resnet_forward.1} parent=0 // pred_check_branch
    %18 = sbr.rel (0) target = $region17
  $region16: #{modified_resnet_forward.1} parent=0 // pred_region
    _
  $region17: #{modified_resnet_forward.1} parent=0 // pred_fallthru
    _
  // Predicated region
  $region18: #{modified_resnet_forward.1} parent=0 // pred_check
    _
  $region19: #{modified_resnet_forward.1} parent=0 // pred_check_branch
    %20 = sbr.rel (0) target = $region21
  $region20: #{modified_resnet_forward.1} parent=0 // pred_region
    _
  $region21: #{modified_resnet_forward.1} parent=0 // pred_fallthru
    _
  // Predicated region
  $region22: #{modified_resnet_forward.1} parent=0 // pred_check
    _
  $region23: #{modified_resnet_forward.1} parent=0 // pred_check_branch
    %22 = sbr.rel (0) target = $region25
  $region24: #{modified_resnet_forward.1} parent=0 // pred_region
    _
  $region25: #{modified_resnet_forward.1} parent=0 // pred_fallthru
    _
  %23 = vst [vmem:[#allocation2] sm:$0xff] 0.0
  %24 = vst [vmem:[#allocation2 + $0x8] sm:$0xff] 0.0
  %25 = vst [vmem:[#allocation2 + $0x10] sm:$0xff] 0.0
  %26 = vst [vmem:[#allocation2 + $0x18] sm:$0xff] 0.0
  %27 = vst [vmem:[#allocation2 + $0x20] sm:$0xff] 0.0
  %28 = vst [vmem:[#allocation2 + $0x28] sm:$0xff] 0.0
  %29 = vst [vmem:[#allocation2 + $0x30] sm:$0xff] 0.0
  %30 = vst [vmem:[#allocation2 + $0x38] sm:$0xff] 0.0
  %31 = vst [vmem:[#allocation2 + $0x40] sm:$0xff] 0.0
  %32 = vst [vmem:[#allocation2 + $0x48] sm:$0xff] 0.0
  %33 = vst [vmem:[#allocation2 + $0x50] sm:$0xff] 0.0
  %34 = vst [vmem:[#allocation2 + $0x58] sm:$0xff] 0.0
  %v35 = vld [vmem:[%s0] sm:$0xff]
  %v36 = vld [vmem:[%s0 + $0x8] sm:$0xff]
  %v39 = vcombine.high %v35, %v35
  %v40 = vcombine.high %v36, %v36
  %43 = vst [vmem:[#allocation2 + $0x8] sm:$0xf] %v35
  %44 = vst [vmem:[#allocation2 + $0x10] sm:$0xf] %v39
  %45 = vst [vmem:[#allocation2 + $0x18] sm:$0xf] %v36
  %46 = vst [vmem:[#allocation2 + $0x20] sm:$0xf] %v40
  %v47 = vld [vmem:[#allocation2] sm:$0xf]
  %v48 = vld [vmem:[#allocation2 + $0x8] sm:$0xf]
  %v49 = vld [vmem:[#allocation2 + $0x10] sm:$0xf]
  %v50 = vld [vmem:[#allocation2 + $0x18] sm:$0xf]
  %v51 = vld [vmem:[#allocation2 + $0x20] sm:$0xf]
  %v52 = vld [vmem:[%s2] ss:$8 sm:$0xf]
  %v54 = vlaneseq
  %v55 = vshrl.u32 %v54, 7
  %v56 = vsub.s32 0, %v55
  %v57 = vrot.slane %v52, %v56
  %v58 = vlaneseq
  %v59 = vshrl.u32 %v58, 7
  %v60 = vsub.s32 1, %v59
  %v61 = vrot.slane %v52, %v60
  %v62 = vlaneseq
  %v63 = vshrl.u32 %v62, 7
  %v64 = vsub.s32 2, %v63
  %v65 = vrot.slane %v52, %v64
  %v66 = vlaneseq
  %v67 = vshrl.u32 %v66, 7
  %v68 = vsub.s32 3, %v67
  %v69 = vrot.slane %v52, %v68
  %70 = vrot.lane.b32.xlu0 %v57, 111
  %v71 = vpop.permute.xlu0 %70
  %72 = vrot.lane.b32.xlu0 %v61, 111
  %v73 = vpop.permute.xlu0 %72
  %74 = vrot.lane.b32.xlu0 %v65, 111
  %v75 = vpop.permute.xlu0 %74
  %76 = vrot.lane.b32.xlu0 %v69, 111
  %v77 = vpop.permute.xlu0 %76
  %vm78 = vcmask 908288
  %v79 = vsel %vm78, %v71, %v73
  %v80 = vsel %vm78, %v73, %v75
  %v81 = vsel %vm78, %v75, %v77
  %v87 = vmul.f32 %v47, %v71
  %v88 = vmul.f32 %v48, %v79
  %v89 = vmul.f32 %v49, %v80
  %v90 = vmul.f32 %v50, %v81
  %v91 = vmul.f32 %v51, %v77
  %97 = vrot.lane.b32.xlu0 %v87, 17
  %v98 = vpop.permute.xlu0 %97
  %99 = vrot.lane.b32.xlu0 %v88, 17
  %v100 = vpop.permute.xlu0 %99
  %101 = vrot.lane.b32.xlu0 %v89, 17
  %v102 = vpop.permute.xlu0 %101
  %103 = vrot.lane.b32.xlu0 %v90, 17
  %v104 = vpop.permute.xlu0 %103
  %105 = vrot.lane.b32.xlu0 %v91, 17
  %v106 = vpop.permute.xlu0 %105
  %vm107 = vcmask 138240
  %v108 = vsel %vm107, %v98, %v100
  %v109 = vsel %vm107, %v100, %v102
  %v110 = vsel %vm107, %v102, %v104
  %v111 = vsel %vm107, %v104, %v106
  %116 = vst [vmem:[#allocation3] sm:$0xf] %v108
  %117 = vst [vmem:[#allocation3 + $0x8] sm:$0xf] %v109
  %118 = vst [vmem:[#allocation3 + $0x10] sm:$0xf] %v110
  %119 = vst [vmem:[#allocation3 + $0x18] sm:$0xf] %v111
  %v120 = vld [vmem:[#allocation2] sm:$0xf]
  %v121 = vld [vmem:[#allocation2 + $0x8] sm:$0xf]
  %v122 = vld [vmem:[#allocation2 + $0x10] sm:$0xf]
  %v123 = vld [vmem:[#allocation2 + $0x18] sm:$0xf]
  %v124 = vld [vmem:[#allocation2 + $0x20] sm:$0xf]
  %s125 = scalar_lea.vmem %s2, 1
  %v126 = vld [vmem:[%s125] ss:$8 sm:$0xf]
  %v128 = vlaneseq
  %v129 = vshrl.u32 %v128, 7
  %v130 = vsub.s32 0, %v129
  %v131 = vrot.slane %v126, %v130
  %v132 = vlaneseq
  %v133 = vshrl.u32 %v132, 7
  %v134 = vsub.s32 1, %v133
  %v135 = vrot.slane %v126, %v134
  %v136 = vlaneseq
  %v137 = vshrl.u32 %v136, 7
  %v138 = vsub.s32 2, %v137
  %v139 = vrot.slane %v126, %v138
  %v140 = vlaneseq
  %v141 = vshrl.u32 %v140, 7
  %v142 = vsub.s32 3, %v141
  %v143 = vrot.slane %v126, %v142
  %144 = vrot.lane.b32.xlu0 %v131, 112
  %v145 = vpop.permute.xlu0 %144
  %146 = vrot.lane.b32.xlu0 %v135, 112
  %v147 = vpop.permute.xlu0 %146
  %148 = vrot.lane.b32.xlu0 %v139, 112
  %v149 = vpop.permute.xlu0 %148
  %150 = vrot.lane.b32.xlu0 %v143, 112
  %v151 = vpop.permute.xlu0 %150
  %vm152 = vcmask 916480
  %v153 = vsel %vm152, %v145, %v147
  %v154 = vsel %vm152, %v147, %v149
  %v155 = vsel %vm152, %v149, %v151
  %v161 = vmul.f32 %v120, %v145
  %v162 = vmul.f32 %v121, %v153
  %v163 = vmul.f32 %v122, %v154
  %v164 = vmul.f32 %v123, %v155
  %v165 = vmul.f32 %v124, %v151
  %v171 = vrot.slane %v161, 4
  %v172 = vrot.slane %v162, 4
  %v173 = vrot.slane %v163, 4
  %v174 = vrot.slane %v164, 4
  %v175 = vrot.slane %v165, 4
  %176 = vrot.lane.b32.xlu0 %v171, 16
  %v177 = vpop.permute.xlu0 %176
  %178 = vrot.lane.b32.xlu0 %v172, 16
  %v179 = vpop.permute.xlu0 %178
  %180 = vrot.lane.b32.xlu0 %v173, 16
  %v181 = vpop.permute.xlu0 %180
  %182 = vrot.lane.b32.xlu0 %v174, 16
  %v183 = vpop.permute.xlu0 %182
  %184 = vrot.lane.b32.xlu0 %v175, 16
  %v185 = vpop.permute.xlu0 %184
  %vm186 = vcmask 130048
  %v187 = vsel %vm186, %v177, %v179
  %v188 = vsel %vm186, %v179, %v181
  %v189 = vsel %vm186, %v181, %v183
  %v190 = vsel %vm186, %v183, %v185
  %195 = vst [vmem:[#allocation3] sm:$0xf0] %v187
  %196 = vst [vmem:[#allocation3 + $0x8] sm:$0xf0] %v188
  %197 = vst [vmem:[#allocation3 + $0x10] sm:$0xf0] %v189
  %198 = vst [vmem:[#allocation3 + $0x18] sm:$0xf0] %v190
  %v199 = vld [vmem:[#allocation2] sm:$0xf]
  %v200 = vld [vmem:[#allocation2 + $0x8] sm:$0xf]
  %v201 = vld [vmem:[#allocation2 + $0x10] sm:$0xf]
  %v202 = vld [vmem:[#allocation2 + $0x18] sm:$0xf]
  %v203 = vld [vmem:[#allocation2 + $0x20] sm:$0xf]
  %s204 = scalar_lea.vmem %s2, 2
  %v205 = vld [vmem:[%s204] ss:$8 sm:$0xf]
  %v207 = vlaneseq
  %v208 = vshrl.u32 %v207, 7
  %v209 = vsub.s32 0, %v208
  %v210 = vrot.slane %v205, %v209
  %v211 = vlaneseq
  %v212 = vshrl.u32 %v211, 7
  %v213 = vsub.s32 1, %v212
  %v214 = vrot.slane %v205, %v213
  %v215 = vlaneseq
  %v216 = vshrl.u32 %v215, 7
  %v217 = vsub.s32 2, %v216
  %v218 = vrot.slane %v205, %v217
  %v219 = vlaneseq
  %v220 = vshrl.u32 %v219, 7
  %v221 = vsub.s32 3, %v220
  %v222 = vrot.slane %v205, %v221
  %223 = vrot.lane.b32.xlu0 %v210, 113
  %v224 = vpop.permute.xlu0 %223
  %225 = vrot.lane.b32.xlu0 %v214, 113
  %v226 = vpop.permute.xlu0 %225
  %227 = vrot.lane.b32.xlu0 %v218, 113
  %v228 = vpop.permute.xlu0 %227
  %229 = vrot.lane.b32.xlu0 %v222, 113
  %v230 = vpop.permute.xlu0 %229
  %vm231 = vcmask 924672
  %v232 = vsel %vm231, %v224, %v226
  %v233 = vsel %vm231, %v226, %v228
  %v234 = vsel %vm231, %v228, %v230
  %v240 = vmul.f32 %v199, %v224
  %v241 = vmul.f32 %v200, %v232
  %v242 = vmul.f32 %v201, %v233
  %v243 = vmul.f32 %v202, %v234
  %v244 = vmul.f32 %v203, %v230
  %250 = vrot.lane.b32.xlu0 %v240, 15
  %v251 = vpop.permute.xlu0 %250
  %252 = vrot.lane.b32.xlu0 %v241, 15
  %v253 = vpop.permute.xlu0 %252
  %254 = vrot.lane.b32.xlu0 %v242, 15
  %v255 = vpop.permute.xlu0 %254
  %256 = vrot.lane.b32.xlu0 %v243, 15
  %v257 = vpop.permute.xlu0 %256
  %258 = vrot.lane.b32.xlu0 %v244, 15
  %v259 = vpop.permute.xlu0 %258
  %vm260 = vcmask 121856
  %v261 = vsel %vm260, %v251, %v253
  %v262 = vsel %vm260, %v253, %v255
  %v263 = vsel %vm260, %v255, %v257
  %v264 = vsel %vm260, %v257, %v259
  %269 = vst [vmem:[#allocation3 + $0x20] sm:$0xf] %v261
  %270 = vst [vmem:[#allocation3 + $0x28] sm:$0xf] %v262
  %271 = vst [vmem:[#allocation3 + $0x30] sm:$0xf] %v263
  %272 = vst [vmem:[#allocation3 + $0x38] sm:$0xf] %v264
  %v273 = vld [vmem:[#allocation2] sm:$0xf]
  %v274 = vld [vmem:[#allocation2 + $0x8] sm:$0xf]
  %v275 = vld [vmem:[#allocation2 + $0x10] sm:$0xf]
  %v276 = vld [vmem:[#allocation2 + $0x18] sm:$0xf]
  %v277 = vld [vmem:[#allocation2 + $0x20] sm:$0xf]
  %s278 = scalar_lea.vmem %s2, 3
  %v279 = vld [vmem:[%s278] ss:$8 sm:$0xf]
  %v281 = vlaneseq
  %v282 = vshrl.u32 %v281, 7
  %v283 = vsub.s32 0, %v282
  %v284 = vrot.slane %v279, %v283
  %v285 = vlaneseq
  %v286 = vshrl.u32 %v285, 7
  %v287 = vsub.s32 1, %v286
  %v288 = vrot.slane %v279, %v287
  %v289 = vlaneseq
  %v290 = vshrl.u32 %v289, 7
  %v291 = vsub.s32 2, %v290
  %v292 = vrot.slane %v279, %v291
  %v293 = vlaneseq
  %v294 = vshrl.u32 %v293, 7
  %v295 = vsub.s32 3, %v294
  %v296 = vrot.slane %v279, %v295
  %297 = vrot.lane.b32.xlu0 %v284, 127
  %v298 = vpop.permute.xlu0 %297
  %299 = vrot.lane.b32.xlu0 %v288, 127
  %v300 = vpop.permute.xlu0 %299
  %301 = vrot.lane.b32.xlu0 %v292, 127
  %v302 = vpop.permute.xlu0 %301
  %303 = vrot.lane.b32.xlu0 %v296, 127
  %v304 = vpop.permute.xlu0 %303
  %vm305 = vcmask 1039360
  %v306 = vsel %vm305, %v298, %v300
  %v307 = vsel %vm305, %v300, %v302
  %v308 = vsel %vm305, %v302, %v304
  %v314 = vmul.f32 %v273, %v298
  %v315 = vmul.f32 %v274, %v306
  %v316 = vmul.f32 %v275, %v307
  %v317 = vmul.f32 %v276, %v308
  %v318 = vmul.f32 %v277, %v304
  %v324 = vrot.slane %v314, 4
  %v325 = vrot.slane %v315, 4
  %v326 = vrot.slane %v316, 4
  %v327 = vrot.slane %v317, 4
  %v328 = vrot.slane %v318, 4
  %329 = vrot.lane.b32.xlu0 %v324, 1
  %v330 = vpop.permute.xlu0 %329
  %331 = vrot.lane.b32.xlu0 %v325, 1
  %v332 = vpop.permute.xlu0 %331
  %333 = vrot.lane.b32.xlu0 %v326, 1
  %v334 = vpop.permute.xlu0 %333
  %335 = vrot.lane.b32.xlu0 %v327, 1
  %v336 = vpop.permute.xlu0 %335
  %337 = vrot.lane.b32.xlu0 %v328, 1
  %v338 = vpop.permute.xlu0 %337
  %vm339 = vcmask 7168
  %v340 = vsel %vm339, %v330, %v332
  %v341 = vsel %vm339, %v332, %v334
  %v342 = vsel %vm339, %v334, %v336
  %v343 = vsel %vm339, %v336, %v338
  %348 = vst [vmem:[#allocation3 + $0x20] sm:$0xf0] %v340
  %349 = vst [vmem:[#allocation3 + $0x28] sm:$0xf0] %v341
  %350 = vst [vmem:[#allocation3 + $0x30] sm:$0xf0] %v342
  %351 = vst [vmem:[#allocation3 + $0x38] sm:$0xf0] %v343
  %v352 = vld [vmem:[#allocation2 + $0x8] sm:$0xf]
  %v353 = vld [vmem:[#allocation2 + $0x10] sm:$0xf]
  %v354 = vld [vmem:[#allocation2 + $0x18] sm:$0xf]
  %v355 = vld [vmem:[#allocation2 + $0x20] sm:$0xf]
  %356 = vst [vmem:[#allocation3 + $0x40] sm:$0xf] %v352
  %357 = vst [vmem:[#allocation3 + $0x48] sm:$0xf] %v353
  %358 = vst [vmem:[#allocation3 + $0x50] sm:$0xf] %v354
  %359 = vst [vmem:[#allocation3 + $0x58] sm:$0xf] %v355
  %v360 = vld [vmem:[#allocation2 + $0x8] sm:$0xf]
  %v361 = vld [vmem:[#allocation2 + $0x10] sm:$0xf]
  %v362 = vld [vmem:[#allocation2 + $0x18] sm:$0xf]
  %v363 = vld [vmem:[#allocation2 + $0x20] sm:$0xf]
  %v364 = vld [vmem:[#allocation2 + $0x28] sm:$0xf]
  %s365 = scalar_lea.vmem %s2, 5
  %v366 = vld [vmem:[%s365] ss:$8 sm:$0xf]
  %v368 = vlaneseq
  %v369 = vshrl.u32 %v368, 7
  %v370 = vsub.s32 0, %v369
  %v371 = vrot.slane %v366, %v370
  %v372 = vlaneseq
  %v373 = vshrl.u32 %v372, 7
  %v374 = vsub.s32 1, %v373
  %v375 = vrot.slane %v366, %v374
  %v376 = vlaneseq
  %v377 = vshrl.u32 %v376, 7
  %v378 = vsub.s32 2, %v377
  %v379 = vrot.slane %v366, %v378
  %v380 = vlaneseq
  %v381 = vshrl.u32 %v380, 7
  %v382 = vsub.s32 3, %v381
  %v383 = vrot.slane %v366, %v382
  %384 = vrot.lane.b32.xlu0 %v371, 1
  %v385 = vpop.permute.xlu0 %384
  %386 = vrot.lane.b32.xlu0 %v375, 1
  %v387 = vpop.permute.xlu0 %386
  %388 = vrot.lane.b32.xlu0 %v379, 1
  %v389 = vpop.permute.xlu0 %388
  %390 = vrot.lane.b32.xlu0 %v383, 1
  %v391 = vpop.permute.xlu0 %390
  %v392 = vsel %vm339, %v385, %v387
  %v393 = vsel %vm339, %v387, %v389
  %v394 = vsel %vm339, %v389, %v391
  %v400 = vmul.f32 %v360, %v385
  %v401 = vmul.f32 %v361, %v392
  %v402 = vmul.f32 %v362, %v393
  %v403 = vmul.f32 %v363, %v394
  %v404 = vmul.f32 %v364, %v391
  %v410 = vrot.slane %v400, 4
  %v411 = vrot.slane %v401, 4
  %v412 = vrot.slane %v402, 4
  %v413 = vrot.slane %v403, 4
  %v414 = vrot.slane %v404, 4
  %415 = vrot.lane.b32.xlu0 %v410, 127
  %v416 = vpop.permute.xlu0 %415
  %417 = vrot.lane.b32.xlu0 %v411, 127
  %v418 = vpop.permute.xlu0 %417
  %419 = vrot.lane.b32.xlu0 %v412, 127
  %v420 = vpop.permute.xlu0 %419
  %421 = vrot.lane.b32.xlu0 %v413, 127
  %v422 = vpop.permute.xlu0 %421
  %423 = vrot.lane.b32.xlu0 %v414, 127
  %v424 = vpop.permute.xlu0 %423
  %v425 = vsel %vm305, %v416, %v418
  %v426 = vsel %vm305, %v418, %v420
  %v427 = vsel %vm305, %v420, %v422
  %v428 = vsel %vm305, %v422, %v424
  %433 = vst [vmem:[#allocation3 + $0x40] sm:$0xf0] %v425
  %434 = vst [vmem:[#allocation3 + $0x48] sm:$0xf0] %v426
  %435 = vst [vmem:[#allocation3 + $0x50] sm:$0xf0] %v427
  %436 = vst [vmem:[#allocation3 + $0x58] sm:$0xf0] %v428
  %v437 = vld [vmem:[#allocation2 + $0x8] sm:$0xf]
  %v438 = vld [vmem:[#allocation2 + $0x10] sm:$0xf]
  %v439 = vld [vmem:[#allocation2 + $0x18] sm:$0xf]
  %v440 = vld [vmem:[#allocation2 + $0x20] sm:$0xf]
  %v441 = vld [vmem:[#allocation2 + $0x28] sm:$0xf]
  %s442 = scalar_lea.vmem %s2, 6
  %v443 = vld [vmem:[%s442] ss:$8 sm:$0xf]
  %v445 = vlaneseq
  %v446 = vshrl.u32 %v445, 7
  %v447 = vsub.s32 0, %v446
  %v448 = vrot.slane %v443, %v447
  %v449 = vlaneseq
  %v450 = vshrl.u32 %v449, 7
  %v451 = vsub.s32 1, %v450
  %v452 = vrot.slane %v443, %v451
  %v453 = vlaneseq
  %v454 = vshrl.u32 %v453, 7
  %v455 = vsub.s32 2, %v454
  %v456 = vrot.slane %v443, %v455
  %v457 = vlaneseq
  %v458 = vshrl.u32 %v457, 7
  %v459 = vsub.s32 3, %v458
  %v460 = vrot.slane %v443, %v459
  %461 = vrot.lane.b32.xlu0 %v448, 15
  %v462 = vpop.permute.xlu0 %461
  %463 = vrot.lane.b32.xlu0 %v452, 15
  %v464 = vpop.permute.xlu0 %463
  %465 = vrot.lane.b32.xlu0 %v456, 15
  %v466 = vpop.permute.xlu0 %465
  %467 = vrot.lane.b32.xlu0 %v460, 15
  %v468 = vpop.permute.xlu0 %467
  %v469 = vsel %vm260, %v462, %v464
  %v470 = vsel %vm260, %v464, %v466
  %v471 = vsel %vm260, %v466, %v468
  %v477 = vmul.f32 %v437, %v462
  %v478 = vmul.f32 %v438, %v469
  %v479 = vmul.f32 %v439, %v470
  %v480 = vmul.f32 %v440, %v471
  %v481 = vmul.f32 %v441, %v468
  %487 = vrot.lane.b32.xlu0 %v477, 113
  %v488 = vpop.permute.xlu0 %487
  %489 = vrot.lane.b32.xlu0 %v478, 113
  %v490 = vpop.permute.xlu0 %489
  %491 = vrot.lane.b32.xlu0 %v479, 113
  %v492 = vpop.permute.xlu0 %491
  %493 = vrot.lane.b32.xlu0 %v480, 113
  %v494 = vpop.permute.xlu0 %493
  %495 = vrot.lane.b32.xlu0 %v481, 113
  %v496 = vpop.permute.xlu0 %495
  %v497 = vsel %vm231, %v488, %v490
  %v498 = vsel %vm231, %v490, %v492
  %v499 = vsel %vm231, %v492, %v494
  %v500 = vsel %vm231, %v494, %v496
  %505 = vst [vmem:[#allocation3 + $0x60] sm:$0xf] %v497
  %506 = vst [vmem:[#allocation3 + $0x68] sm:$0xf] %v498
  %507 = vst [vmem:[#allocation3 + $0x70] sm:$0xf] %v499
  %508 = vst [vmem:[#allocation3 + $0x78] sm:$0xf] %v500
  %v509 = vld [vmem:[#allocation2 + $0x8] sm:$0xf]
  %v510 = vld [vmem:[#allocation2 + $0x10] sm:$0xf]
  %v511 = vld [vmem:[#allocation2 + $0x18] sm:$0xf]
  %v512 = vld [vmem:[#allocation2 + $0x20] sm:$0xf]
  %v513 = vld [vmem:[#allocation2 + $0x28] sm:$0xf]
  %s514 = scalar_lea.vmem %s2, 7
  %v515 = vld [vmem:[%s514] ss:$8 sm:$0xf]
  %v517 = vlaneseq
  %v518 = vshrl.u32 %v517, 7
  %v519 = vsub.s32 0, %v518
  %v520 = vrot.slane %v515, %v519
  %v521 = vlaneseq
  %v522 = vshrl.u32 %v521, 7
  %v523 = vsub.s32 1, %v522
  %v524 = vrot.slane %v515, %v523
  %v525 = vlaneseq
  %v526 = vshrl.u32 %v525, 7
  %v527 = vsub.s32 2, %v526
  %v528 = vrot.slane %v515, %v527
  %v529 = vlaneseq
  %v530 = vshrl.u32 %v529, 7
  %v531 = vsub.s32 3, %v530
  %v532 = vrot.slane %v515, %v531
  %533 = vrot.lane.b32.xlu0 %v520, 16
  %v534 = vpop.permute.xlu0 %533
  %535 = vrot.lane.b32.xlu0 %v524, 16
  %v536 = vpop.permute.xlu0 %535
  %537 = vrot.lane.b32.xlu0 %v528, 16
  %v538 = vpop.permute.xlu0 %537
  %539 = vrot.lane.b32.xlu0 %v532, 16
  %v540 = vpop.permute.xlu0 %539
  %v541 = vsel %vm186, %v534, %v536
  %v542 = vsel %vm186, %v536, %v538
  %v543 = vsel %vm186, %v538, %v540
  %v549 = vmul.f32 %v509, %v534
  %v550 = vmul.f32 %v510, %v541
  %v551 = vmul.f32 %v511, %v542
  %v552 = vmul.f32 %v512, %v543
  %v553 = vmul.f32 %v513, %v540
  %v559 = vrot.slane %v549, 4
  %v560 = vrot.slane %v550, 4
  %v561 = vrot.slane %v551, 4
  %v562 = vrot.slane %v552, 4
  %v563 = vrot.slane %v553, 4
  %564 = vrot.lane.b32.xlu0 %v559, 112
  %v565 = vpop.permute.xlu0 %564
  %566 = vrot.lane.b32.xlu0 %v560, 112
  %v567 = vpop.permute.xlu0 %566
  %568 = vrot.lane.b32.xlu0 %v561, 112
  %v569 = vpop.permute.xlu0 %568
  %570 = vrot.lane.b32.xlu0 %v562, 112
  %v571 = vpop.permute.xlu0 %570
  %572 = vrot.lane.b32.xlu0 %v563, 112
  %v573 = vpop.permute.xlu0 %572
  %v574 = vsel %vm152, %v565, %v567
  %v575 = vsel %vm152, %v567, %v569
  %v576 = vsel %vm152, %v569, %v571
  %v577 = vsel %vm152, %v571, %v573
  %582 = vst [vmem:[#allocation3 + $0x60] sm:$0xf0] %v574
  %583 = vst [vmem:[#allocation3 + $0x68] sm:$0xf0] %v575
  %584 = vst [vmem:[#allocation3 + $0x70] sm:$0xf0] %v576
  %585 = vst [vmem:[#allocation3 + $0x78] sm:$0xf0] %v577
  %v586 = vld [vmem:[#allocation2 + $0x8] sm:$0xf]
  %v587 = vld [vmem:[#allocation2 + $0x10] sm:$0xf]
  %v588 = vld [vmem:[#allocation2 + $0x18] sm:$0xf]
  %v589 = vld [vmem:[#allocation2 + $0x20] sm:$0xf]
  %v590 = vld [vmem:[#allocation2 + $0x28] sm:$0xf]
  %s591 = scalar_lea.vmem %s2, 32
  %v592 = vld [vmem:[%s591] ss:$8 sm:$0xf]
  %v594 = vlaneseq
  %v595 = vshrl.u32 %v594, 7
  %v596 = vsub.s32 0, %v595
  %v597 = vrot.slane %v592, %v596
  %v598 = vlaneseq
  %v599 = vshrl.u32 %v598, 7
  %v600 = vsub.s32 1, %v599
  %v601 = vrot.slane %v592, %v600
  %v602 = vlaneseq
  %v603 = vshrl.u32 %v602, 7
  %v604 = vsub.s32 2, %v603
  %v605 = vrot.slane %v592, %v604
  %v606 = vlaneseq
  %v607 = vshrl.u32 %v606, 7
  %v608 = vsub.s32 3, %v607
  %v609 = vrot.slane %v592, %v608
  %610 = vrot.lane.b32.xlu0 %v597, 17
  %v611 = vpop.permute.xlu0 %610
  %612 = vrot.lane.b32.xlu0 %v601, 17
  %v613 = vpop.permute.xlu0 %612
  %614 = vrot.lane.b32.xlu0 %v605, 17
  %v615 = vpop.permute.xlu0 %614
  %616 = vrot.lane.b32.xlu0 %v609, 17
  %v617 = vpop.permute.xlu0 %616
  %v618 = vsel %vm107, %v611, %v613
  %v619 = vsel %vm107, %v613, %v615
  %v620 = vsel %vm107, %v615, %v617
  %v626 = vmul.f32 %v586, %v611
  %v627 = vmul.f32 %v587, %v618
  %v628 = vmul.f32 %v588, %v619
  %v629 = vmul.f32 %v589, %v620
  %v630 = vmul.f32 %v590, %v617
  %636 = vrot.lane.b32.xlu0 %v626, 111
  %v637 = vpop.permute.xlu0 %636
  %638 = vrot.lane.b32.xlu0 %v627, 111
  %v639 = vpop.permute.xlu0 %638
  %640 = vrot.lane.b32.xlu0 %v628, 111
  %v641 = vpop.permute.xlu0 %640
  %642 = vrot.lane.b32.xlu0 %v629, 111
  %v643 = vpop.permute.xlu0 %642
  %644 = vrot.lane.b32.xlu0 %v630, 111
  %v645 = vpop.permute.xlu0 %644
  %v646 = vsel %vm78, %v637, %v639
  %v647 = vsel %vm78, %v639, %v641
  %v648 = vsel %vm78, %v641, %v643
  %v649 = vsel %vm78, %v643, %v645
  %654 = vst [vmem:[#allocation3 + $0x80] sm:$0xf] %v646
  %655 = vst [vmem:[#allocation3 + $0x88] sm:$0xf] %v647
  %656 = vst [vmem:[#allocation3 + $0x90] sm:$0xf] %v648
  %657 = vst [vmem:[#allocation3 + $0x98] sm:$0xf] %v649
  %v658 = vld [vmem:[%s1] sm:$0xff]
  %v659 = vld [vmem:[#allocation3] sm:$0xff]
  %v660 = vld [vmem:[#allocation3 + $0x8] sm:$0xff]
  %v661 = vld [vmem:[#allocation3 + $0x10] sm:$0xff]
  %v662 = vld [vmem:[#allocation3 + $0x18] sm:$0xff]
  %v663 = vld [vmem:[#allocation3 + $0x20] sm:$0xff]
  %v664 = vld [vmem:[#allocation3 + $0x28] sm:$0xff]
  %v665 = vld [vmem:[#allocation3 + $0x30] sm:$0xff]
  %v666 = vld [vmem:[#allocation3 + $0x38] sm:$0xff]
  %v667 = vld [vmem:[#allocation3 + $0x40] sm:$0xff]
  %v668 = vld [vmem:[#allocation3 + $0x48] sm:$0xff]
  %v669 = vld [vmem:[#allocation3 + $0x50] sm:$0xff]
  %v670 = vld [vmem:[#allocation3 + $0x58] sm:$0xff]
  %v671 = vld [vmem:[#allocation3 + $0x60] sm:$0xff]
  %v672 = vld [vmem:[#allocation3 + $0x68] sm:$0xff]
  %v673 = vld [vmem:[#allocation3 + $0x70] sm:$0xff]
  %v674 = vld [vmem:[#allocation3 + $0x78] sm:$0xff]
  %v675 = vld [vmem:[#allocation3 + $0x80] sm:$0xf]
  %v676 = vld [vmem:[#allocation3 + $0x88] sm:$0xf]
  %v677 = vld [vmem:[#allocation3 + $0x90] sm:$0xf]
  %v678 = vld [vmem:[#allocation3 + $0x98] sm:$0xf]
  %680 = vset.pattern.permute.xlu0 36
  %681 = vperm.xlu0 %680, %v658
  %v682 = vpop.permute.xlu0 %681
  %vm684 = vcmask 293888
  %v685 = vsel %vm684, %v658, 0
  %vm687 = vcmask 1043456
  %v689 = vsel %vm687, %v675, 0
  %v692 = vsel %vm687, %v676, 0
  %v695 = vsel %vm687, %v677, 0
  %v698 = vsel %vm687, %v678, 0
  %700 = vmatprep.subr.mxu0 0.0
  %701 = vmatpush1.msra.mxu0 0.0
  %702 = vmatprep.subr.mxu0 0.0
  %703 = vmatpush1.msra.mxu0 0.0
  %704 = vmatprep.subr.mxu0 0.0
  %705 = vmatpush1.msra.mxu0 0.0
  %706 = vmatprep.subr.mxu0 0.0
  %707 = vmatpush1.msra.mxu0 0.0
  %708 = vmatprep.subr.mxu0 0.0
  %709 = vmatpush1.msra.mxu0 0.0
  %710 = vmatprep.subr.mxu0 0.0
  %711 = vmatpush1.msra.mxu0 0.0
  %712 = vmatprep.subr.mxu0 0.0
  %713 = vmatpush1.msra.mxu0 0.0
  %714 = vmatprep.subr.mxu0 0.0
  %715 = vmatpush1.msra.mxu0 0.0
  %716 = vmatprep.subr.mxu0 0.0
  %717 = vmatpush1.msra.mxu0 0.0
  %718 = vmatprep.subr.mxu0 0.0
  %719 = vmatpush1.msra.mxu0 0.0
  %720 = vmatprep.subr.mxu0 0.0
  %721 = vmatpush1.msra.mxu0 0.0
  %722 = vmatprep.subr.mxu0 %v692
  %723 = vmatpush1.msra.mxu0 %v689
  %724 = vmatprep.subr.mxu0 %v672
  %725 = vmatpush1.msra.mxu0 %v671
  %726 = vmatprep.subr.mxu0 %v668
  %727 = vmatpush1.msra.mxu0 %v667
  %728 = vmatprep.subr.mxu0 %v664
  %729 = vmatpush1.msra.mxu0 %v663
  %730 = vmatprep.subr.mxu0 %v660
  %731 = vmatpush1.msra.mxu0 %v659
  %732 = vmatprep.subr.mxu0 0.0
  %733 = vmatpush2.msra.mxu0 0.0
  %734 = vmatprep.subr.mxu0 0.0
  %735 = vmatpush2.msra.mxu0 0.0
  %736 = vmatprep.subr.mxu0 0.0
  %737 = vmatpush2.msra.mxu0 0.0
  %738 = vmatprep.subr.mxu0 0.0
  %739 = vmatpush2.msra.mxu0 0.0
  %740 = vmatprep.subr.mxu0 0.0
  %741 = vmatpush2.msra.mxu0 0.0
  %742 = vmatprep.subr.mxu0 0.0
  %743 = vmatpush2.msra.mxu0 0.0
  %744 = vmatprep.subr.mxu0 0.0
  %745 = vmatpush2.msra.mxu0 0.0
  %746 = vmatprep.subr.mxu0 0.0
  %747 = vmatpush2.msra.mxu0 0.0
  %748 = vmatprep.subr.mxu0 0.0
  %749 = vmatpush2.msra.mxu0 0.0
  %750 = vmatprep.subr.mxu0 0.0
  %751 = vmatpush2.msra.mxu0 0.0
  %752 = vmatprep.subr.mxu0 0.0
  %753 = vmatpush2.msra.mxu0 0.0
  %754 = vmatprep.subr.mxu0 0.0
  %755 = vmatpush2.msra.mxu0 0.0
  %756 = vmatprep.subr.mxu0 0.0
  %757 = vmatpush2.msra.mxu0 0.0
  %758 = vmatprep.subr.mxu0 0.0
  %759 = vmatpush2.msra.mxu0 0.0
  %760 = vmatprep.subr.mxu0 0.0
  %761 = vmatpush2.msra.mxu0 0.0
  %762 = vmatprep.subr.mxu0 0.0
  %763 = vmatpush2.msra.mxu0 0.0
  %764 = vmatprep.mubr.f32.mxu0 0.0
  %765 = vmatmul.mubr.f32.gmra.mxu0 %v685
  %v766 = vpop.f32.mrf.mxu0
  %v767 = vadd.f32 %v682, %v766
  %v768 = vpop.f32.mrf.mxu0
  %v769 = vadd.f32 %v682, %v768
  %770 = vdwg.mxu0
  %771 = vmatprep.subr.mxu0 0.0
  %772 = vmatpush1.msra.mxu0 0.0
  %773 = vmatprep.subr.mxu0 0.0
  %774 = vmatpush1.msra.mxu0 0.0
  %775 = vmatprep.subr.mxu0 0.0
  %776 = vmatpush1.msra.mxu0 0.0
  %777 = vmatprep.subr.mxu0 0.0
  %778 = vmatpush1.msra.mxu0 0.0
  %779 = vmatprep.subr.mxu0 0.0
  %780 = vmatpush1.msra.mxu0 0.0
  %781 = vmatprep.subr.mxu0 0.0
  %782 = vmatpush1.msra.mxu0 0.0
  %783 = vmatprep.subr.mxu0 0.0
  %784 = vmatpush1.msra.mxu0 0.0
  %785 = vmatprep.subr.mxu0 0.0
  %786 = vmatpush1.msra.mxu0 0.0
  %787 = vmatprep.subr.mxu0 0.0
  %788 = vmatpush1.msra.mxu0 0.0
  %789 = vmatprep.subr.mxu0 0.0
  %790 = vmatpush1.msra.mxu0 0.0
  %791 = vmatprep.subr.mxu0 0.0
  %792 = vmatpush1.msra.mxu0 0.0
  %793 = vmatprep.subr.mxu0 %v698
  %794 = vmatpush1.msra.mxu0 %v695
  %795 = vmatprep.subr.mxu0 %v674
  %796 = vmatpush1.msra.mxu0 %v673
  %797 = vmatprep.subr.mxu0 %v670
  %798 = vmatpush1.msra.mxu0 %v669
  %799 = vmatprep.subr.mxu0 %v666
  %800 = vmatpush1.msra.mxu0 %v665
  %801 = vmatprep.subr.mxu0 %v662
  %802 = vmatpush1.msra.mxu0 %v661
  %803 = vmatprep.subr.mxu0 0.0
  %804 = vmatpush2.msra.mxu0 0.0
  %805 = vmatprep.subr.mxu0 0.0
  %806 = vmatpush2.msra.mxu0 0.0
  %807 = vmatprep.subr.mxu0 0.0
  %808 = vmatpush2.msra.mxu0 0.0
  %809 = vmatprep.subr.mxu0 0.0
  %810 = vmatpush2.msra.mxu0 0.0
  %811 = vmatprep.subr.mxu0 0.0
  %812 = vmatpush2.msra.mxu0 0.0
  %813 = vmatprep.subr.mxu0 0.0
  %814 = vmatpush2.msra.mxu0 0.0
  %815 = vmatprep.subr.mxu0 0.0
  %816 = vmatpush2.msra.mxu0 0.0
  %817 = vmatprep.subr.mxu0 0.0
  %818 = vmatpush2.msra.mxu0 0.0
  %819 = vmatprep.subr.mxu0 0.0
  %820 = vmatpush2.msra.mxu0 0.0
  %821 = vmatprep.subr.mxu0 0.0
  %822 = vmatpush2.msra.mxu0 0.0
  %823 = vmatprep.subr.mxu0 0.0
  %824 = vmatpush2.msra.mxu0 0.0
  %825 = vmatprep.subr.mxu0 0.0
  %826 = vmatpush2.msra.mxu0 0.0
  %827 = vmatprep.subr.mxu0 0.0
  %828 = vmatpush2.msra.mxu0 0.0
  %829 = vmatprep.subr.mxu0 0.0
  %830 = vmatpush2.msra.mxu0 0.0
  %831 = vmatprep.subr.mxu0 0.0
  %832 = vmatpush2.msra.mxu0 0.0
  %833 = vmatprep.subr.mxu0 0.0
  %834 = vmatpush2.msra.mxu0 0.0
  %835 = vmatprep.mubr.f32.mxu0 0.0
  %836 = vmatmul.mubr.f32.gmra.mxu0 %v685
  %v837 = vpop.f32.mrf.mxu0
  %v838 = vadd.f32 %v682, %v837
  %v839 = vpop.f32.mrf.mxu0
  %v840 = vadd.f32 %v682, %v839
  %841 = vdwg.mxu0
  %v842 = vmax.f32 %v767, 0.0
  %v843 = vmax.f32 %v769, 0.0
  %v844 = vmax.f32 %v838, 0.0
  %v845 = vmax.f32 %v840, 0.0
  %846 = vst [vmem:[#allocation2 + $0x8] sm:$0xff] %v842
  %847 = vst [vmem:[#allocation2 + $0x10] sm:$0xff] %v843
  %848 = vst [vmem:[#allocation2 + $0x18] sm:$0xff] %v844
  %849 = vst [vmem:[#allocation2 + $0x20] sm:$0xff] %v845
  %v850 = vld [vmem:[#allocation2 + $0x8] sm:$0xff]
  %v851 = vld [vmem:[#allocation2 + $0x10] sm:$0xff]
  %v852 = vld [vmem:[#allocation2 + $0x18] sm:$0xff]
  %v853 = vld [vmem:[#allocation2 + $0x20] sm:$0xff]
  %v854 = vld [vmem:[#allocation2 + $0x28] sm:$0xff]
  %860 = vrot.lane.b32.xlu0 %v850, 127
  %v861 = vpop.permute.xlu0 %860
  %862 = vrot.lane.b32.xlu0 %v851, 127
  %v863 = vpop.permute.xlu0 %862
  %864 = vrot.lane.b32.xlu0 %v852, 127
  %v865 = vpop.permute.xlu0 %864
  %866 = vrot.lane.b32.xlu0 %v853, 127
  %v867 = vpop.permute.xlu0 %866
  %868 = vrot.lane.b32.xlu0 %v854, 127
  %v869 = vpop.permute.xlu0 %868
  %v870 = vsel %vm305, %v861, %v863
  %v871 = vsel %vm305, %v863, %v865
  %v872 = vsel %vm305, %v865, %v867
  %v873 = vsel %vm305, %v867, %v869
  %v878 = vmax.f32 %v842, %v870
  %v879 = vmax.f32 %v843, %v871
  %v880 = vmax.f32 %v844, %v872
  %v881 = vmax.f32 %v845, %v873
  %882 = vrot.lane.b32.xlu0 %v850, 112
  %v883 = vpop.permute.xlu0 %882
  %884 = vrot.lane.b32.xlu0 %v851, 112
  %v885 = vpop.permute.xlu0 %884
  %886 = vrot.lane.b32.xlu0 %v852, 112
  %v887 = vpop.permute.xlu0 %886
  %888 = vrot.lane.b32.xlu0 %v853, 112
  %v889 = vpop.permute.xlu0 %888
  %890 = vrot.lane.b32.xlu0 %v854, 112
  %v891 = vpop.permute.xlu0 %890
  %v892 = vsel %vm152, %v883, %v885
  %v893 = vsel %vm152, %v885, %v887
  %v894 = vsel %vm152, %v887, %v889
  %v895 = vsel %vm152, %v889, %v891
  %v900 = vmax.f32 %v878, %v892
  %v901 = vmax.f32 %v879, %v893
  %v902 = vmax.f32 %v880, %v894
  %v903 = vmax.f32 %v881, %v895
  %904 = vrot.lane.b32.xlu0 %v850, 111
  %v905 = vpop.permute.xlu0 %904
  %906 = vrot.lane.b32.xlu0 %v851, 111
  %v907 = vpop.permute.xlu0 %906
  %908 = vrot.lane.b32.xlu0 %v852, 111
  %v909 = vpop.permute.xlu0 %908
  %910 = vrot.lane.b32.xlu0 %v853, 111
  %v911 = vpop.permute.xlu0 %910
  %912 = vrot.lane.b32.xlu0 %v854, 111
  %v913 = vpop.permute.xlu0 %912
  %v914 = vsel %vm78, %v905, %v907
  %v915 = vsel %vm78, %v907, %v909
  %v916 = vsel %vm78, %v909, %v911
  %v917 = vsel %vm78, %v911, %v913
  %v922 = vmax.f32 %v900, %v914
  %v923 = vmax.f32 %v901, %v915
  %v924 = vmax.f32 %v902, %v916
  %v925 = vmax.f32 %v903, %v917
  %v926 = vld [vmem:[%s3] sm:$0xff]
  %v927 = vld [vmem:[%s3 + $0x8] sm:$0xff]
  %v928 = vld [vmem:[%s3 + $0x10] sm:$0xff]
  %v929 = vld [vmem:[%s3 + $0x18] sm:$0xff]
  %v930 = vld [vmem:[%s3 + $0x20] sm:$0xff]
  %v931 = vld [vmem:[%s3 + $0x28] sm:$0xff]
  %v932 = vld [vmem:[%s3 + $0x30] sm:$0xff]
  %v933 = vld [vmem:[%s3 + $0x38] sm:$0xff]
  %v934 = vld [vmem:[%s3 + $0x40] sm:$0xff]
  %v935 = vld [vmem:[%s3 + $0x48] sm:$0xff]
  %v936 = vld [vmem:[%s3 + $0x50] sm:$0xff]
  %v937 = vld [vmem:[%s3 + $0x58] sm:$0xff]
  %v938 = vld [vmem:[%s3 + $0x60] sm:$0xff]
  %v939 = vld [vmem:[%s3 + $0x68] sm:$0xff]
  %v940 = vld [vmem:[%s3 + $0x70] sm:$0xff]
  %v941 = vld [vmem:[%s3 + $0x78] sm:$0xff]
  %v942 = vld [vmem:[%s3 + $0x80] sm:$0xff]
  %v943 = vld [vmem:[%s3 + $0x88] sm:$0xff]
  %v944 = vld [vmem:[%s3 + $0x90] sm:$0xff]
  %v945 = vld [vmem:[%s3 + $0x98] sm:$0xff]
  %v946 = vld [vmem:[%s3 + $0xa0] sm:$0xff]
  %v947 = vld [vmem:[%s3 + $0xa8] sm:$0xff]
  %v948 = vld [vmem:[%s3 + $0xb0] sm:$0xff]
  %v949 = vld [vmem:[%s3 + $0xb8] sm:$0xff]
  %v950 = vld [vmem:[%s3 + $0xc0] sm:$0xff]
  %v951 = vld [vmem:[%s3 + $0xc8] sm:$0xff]
  %v952 = vld [vmem:[%s3 + $0xd0] sm:$0xff]
  %v953 = vld [vmem:[%s3 + $0xd8] sm:$0xff]
  %v954 = vld [vmem:[%s3 + $0xe0] sm:$0xff]
  %v955 = vld [vmem:[%s3 + $0xe8] sm:$0xff]
  %v956 = vld [vmem:[%s3 + $0xf0] sm:$0xff]
  %v957 = vld [vmem:[%s3 + $0xf8] sm:$0xff]
  %v958 = vld [vmem:[%s3 + $0x100] sm:$0xff]
  %v959 = vld [vmem:[%s3 + $0x108] sm:$0xff]
  %v960 = vld [vmem:[%s3 + $0x110] sm:$0xff]
  %v961 = vld [vmem:[%s3 + $0x118] sm:$0xff]
  %v962 = vld [vmem:[%s3 + $0x120] sm:$0xff]
  %v963 = vld [vmem:[%s3 + $0x128] sm:$0xff]
  %v964 = vld [vmem:[%s3 + $0x130] sm:$0xff]
  %v965 = vld [vmem:[%s3 + $0x138] sm:$0xff]
  %v966 = vld [vmem:[%s3 + $0x140] sm:$0xff]
  %v967 = vld [vmem:[%s3 + $0x148] sm:$0xff]
  %v968 = vld [vmem:[%s3 + $0x150] sm:$0xff]
  %v969 = vld [vmem:[%s3 + $0x158] sm:$0xff]
  %v970 = vld [vmem:[%s3 + $0x160] sm:$0xff]
  %v971 = vld [vmem:[%s3 + $0x168] sm:$0xff]
  %v972 = vld [vmem:[%s3 + $0x170] sm:$0xff]
  %v973 = vld [vmem:[%s3 + $0x178] sm:$0xff]
  %v974 = vld [vmem:[%s3 + $0x180] sm:$0xff]
  %v975 = vld [vmem:[%s3 + $0x188] sm:$0xff]
  %v976 = vld [vmem:[%s3 + $0x190] sm:$0xff]
  %v977 = vld [vmem:[%s3 + $0x198] sm:$0xff]
  %v978 = vld [vmem:[%s3 + $0x1a0] sm:$0xff]
  %v979 = vld [vmem:[%s3 + $0x1a8] sm:$0xff]
  %v980 = vld [vmem:[%s3 + $0x1b0] sm:$0xff]
  %v981 = vld [vmem:[%s3 + $0x1b8] sm:$0xff]
  %v982 = vld [vmem:[%s3 + $0x1c0] sm:$0xff]
  %v983 = vld [vmem:[%s3 + $0x1c8] sm:$0xff]
  %v984 = vld [vmem:[%s3 + $0x1d0] sm:$0xff]
  %v985 = vld [vmem:[%s3 + $0x1d8] sm:$0xff]
  %v986 = vld [vmem:[%s3 + $0x1e0] sm:$0xff]
  %v987 = vld [vmem:[%s3 + $0x1e8] sm:$0xff]
  %v988 = vld [vmem:[%s3 + $0x1f0] sm:$0xff]
  %v989 = vld [vmem:[%s3 + $0x1f8] sm:$0xff]
  %990 = vmatprep.subr.mxu0 0.0
  %991 = vmatpush1.msra.mxu0 %v941
  %992 = vmatprep.subr.mxu0 0.0
  %993 = vmatpush1.msra.mxu0 %v940
  %994 = vmatprep.subr.mxu0 0.0
  %995 = vmatpush1.msra.mxu0 %v939
  %996 = vmatprep.subr.mxu0 0.0
  %997 = vmatpush1.msra.mxu0 %v938
  %998 = vmatprep.subr.mxu0 0.0
  %999 = vmatpush1.msra.mxu0 %v937
  %1000 = vmatprep.subr.mxu0 0.0
  %1001 = vmatpush1.msra.mxu0 %v936
  %1002 = vmatprep.subr.mxu0 0.0
  %1003 = vmatpush1.msra.mxu0 %v935
  %1004 = vmatprep.subr.mxu0 0.0
  %1005 = vmatpush1.msra.mxu0 %v934
  %1006 = vmatprep.subr.mxu0 0.0
  %1007 = vmatpush1.msra.mxu0 %v933
  %1008 = vmatprep.subr.mxu0 0.0
  %1009 = vmatpush1.msra.mxu0 %v932
  %1010 = vmatprep.subr.mxu0 0.0
  %1011 = vmatpush1.msra.mxu0 %v931
  %1012 = vmatprep.subr.mxu0 0.0
  %1013 = vmatpush1.msra.mxu0 %v930
  %1014 = vmatprep.subr.mxu0 0.0
  %1015 = vmatpush1.msra.mxu0 %v929
  %1016 = vmatprep.subr.mxu0 0.0
  %1017 = vmatpush1.msra.mxu0 %v928
  %1018 = vmatprep.subr.mxu0 0.0
  %1019 = vmatpush1.msra.mxu0 %v927
  %1020 = vmatprep.subr.mxu0 0.0
  %1021 = vmatpush1.msra.mxu0 %v926
  %1022 = vmatprep.subr.mxu0 0.0
  %1023 = vmatpush2.msra.mxu0 %v957
  %1024 = vmatprep.subr.mxu0 0.0
  %1025 = vmatpush2.msra.mxu0 %v956
  %1026 = vmatprep.subr.mxu0 0.0
  %1027 = vmatpush2.msra.mxu0 %v955
  %1028 = vmatprep.subr.mxu0 0.0
  %1029 = vmatpush2.msra.mxu0 %v954
  %1030 = vmatprep.subr.mxu0 0.0
  %1031 = vmatpush2.msra.mxu0 %v953
  %1032 = vmatprep.subr.mxu0 0.0
  %1033 = vmatpush2.msra.mxu0 %v952
  %1034 = vmatprep.subr.mxu0 0.0
  %1035 = vmatpush2.msra.mxu0 %v951
  %1036 = vmatprep.subr.mxu0 0.0
  %1037 = vmatpush2.msra.mxu0 %v950
  %1038 = vmatprep.subr.mxu0 0.0
  %1039 = vmatpush2.msra.mxu0 %v949
  %1040 = vmatprep.subr.mxu0 0.0
  %1041 = vmatpush2.msra.mxu0 %v948
  %1042 = vmatprep.subr.mxu0 0.0
  %1043 = vmatpush2.msra.mxu0 %v947
  %1044 = vmatprep.subr.mxu0 0.0
  %1045 = vmatpush2.msra.mxu0 %v946
  %1046 = vmatprep.subr.mxu0 0.0
  %1047 = vmatpush2.msra.mxu0 %v945
  %1048 = vmatprep.subr.mxu0 0.0
  %1049 = vmatpush2.msra.mxu0 %v944
  %1050 = vmatprep.subr.mxu0 0.0
  %1051 = vmatpush2.msra.mxu0 %v943
  %1052 = vmatprep.subr.mxu0 0.0
  %1053 = vmatpush2.msra.mxu0 %v942
  %1054 = vmatprep.mubr.f32.mxu0 %v923
  %1055 = vmatmul.mubr.f32.gmra.mxu0 %v922
  %v1056 = vpop.f32.mrf.mxu0
  %v1057 = vadd.f32 0.0, %v1056
  %v1058 = vpop.f32.mrf.mxu0
  %1059 = vdwg.mxu0
  %1060 = vmatprep.subr.mxu0 0.0
  %1061 = vmatpush1.msra.mxu0 %v973
  %1062 = vmatprep.subr.mxu0 0.0
  %1063 = vmatpush1.msra.mxu0 %v972
  %1064 = vmatprep.subr.mxu0 0.0
  %1065 = vmatpush1.msra.mxu0 %v971
  %1066 = vmatprep.subr.mxu0 0.0
  %1067 = vmatpush1.msra.mxu0 %v970
  %1068 = vmatprep.subr.mxu0 0.0
  %1069 = vmatpush1.msra.mxu0 %v969
  %1070 = vmatprep.subr.mxu0 0.0
  %1071 = vmatpush1.msra.mxu0 %v968
  %1072 = vmatprep.subr.mxu0 0.0
  %1073 = vmatpush1.msra.mxu0 %v967
  %1074 = vmatprep.subr.mxu0 0.0
  %1075 = vmatpush1.msra.mxu0 %v966
  %1076 = vmatprep.subr.mxu0 0.0
  %1077 = vmatpush1.msra.mxu0 %v965
  %1078 = vmatprep.subr.mxu0 0.0
  %1079 = vmatpush1.msra.mxu0 %v964
  %1080 = vmatprep.subr.mxu0 0.0
  %1081 = vmatpush1.msra.mxu0 %v963
  %1082 = vmatprep.subr.mxu0 0.0
  %1083 = vmatpush1.msra.mxu0 %v962
  %1084 = vmatprep.subr.mxu0 0.0
  %1085 = vmatpush1.msra.mxu0 %v961
  %1086 = vmatprep.subr.mxu0 0.0
  %1087 = vmatpush1.msra.mxu0 %v960
  %1088 = vmatprep.subr.mxu0 0.0
  %1089 = vmatpush1.msra.mxu0 %v959
  %1090 = vmatprep.subr.mxu0 0.0
  %1091 = vmatpush1.msra.mxu0 %v958
  %1092 = vmatprep.subr.mxu0 0.0
  %1093 = vmatpush2.msra.mxu0 %v989
  %1094 = vmatprep.subr.mxu0 0.0
  %1095 = vmatpush2.msra.mxu0 %v988
  %1096 = vmatprep.subr.mxu0 0.0
  %1097 = vmatpush2.msra.mxu0 %v987
  %1098 = vmatprep.subr.mxu0 0.0
  %1099 = vmatpush2.msra.mxu0 %v986
  %1100 = vmatprep.subr.mxu0 0.0
  %1101 = vmatpush2.msra.mxu0 %v985
  %1102 = vmatprep.subr.mxu0 0.0
  %1103 = vmatpush2.msra.mxu0 %v984
  %1104 = vmatprep.subr.mxu0 0.0
  %1105 = vmatpush2.msra.mxu0 %v983
  %1106 = vmatprep.subr.mxu0 0.0
  %1107 = vmatpush2.msra.mxu0 %v982
  %1108 = vmatprep.subr.mxu0 0.0
  %1109 = vmatpush2.msra.mxu0 %v981
  %1110 = vmatprep.subr.mxu0 0.0
  %1111 = vmatpush2.msra.mxu0 %v980
  %1112 = vmatprep.subr.mxu0 0.0
  %1113 = vmatpush2.msra.mxu0 %v979
  %1114 = vmatprep.subr.mxu0 0.0
  %1115 = vmatpush2.msra.mxu0 %v978
  %1116 = vmatprep.subr.mxu0 0.0
  %1117 = vmatpush2.msra.mxu0 %v977
  %1118 = vmatprep.subr.mxu0 0.0
  %1119 = vmatpush2.msra.mxu0 %v976
  %1120 = vmatprep.subr.mxu0 0.0
  %1121 = vmatpush2.msra.mxu0 %v975
  %1122 = vmatprep.subr.mxu0 0.0
  %1123 = vmatpush2.msra.mxu0 %v974
  %1124 = vmatprep.mubr.f32.mxu0 %v925
  %1125 = vmatmul.mubr.f32.gmra.mxu0 %v924
  %v1126 = vpop.f32.mrf.mxu0
  %v1127 = vadd.f32 %v1057, %v1126
  %v1128 = vpop.f32.mrf.mxu0
  %1129 = vdwg.mxu0
  %1130 = vst [vmem:[#allocation2 + $0x8] sm:$0xff] %v1127
  %v1131 = vld [vmem:[#allocation2] sm:$0xff]
  %v1132 = vld [vmem:[#allocation2 + $0x8] sm:$0xff]
  %v1133 = vld [vmem:[%s2 + $0x21] ss:$0 sm:$0xff]
  %1135 = vrot.lane.b32.xlu0 %v1133, 119
  %v1136 = vpop.permute.xlu0 %1135
  %v1138 = vmul.f32 %v1131, %v1136
  %v1139 = vmul.f32 %v1132, %v1136
  %1142 = vrot.lane.b32.xlu0 %v1138, 9
  %v1143 = vpop.permute.xlu0 %1142
  %1144 = vrot.lane.b32.xlu0 %v1139, 9
  %v1145 = vpop.permute.xlu0 %1144
  %vm1146 = vcmask 72704
  %v1147 = vsel %vm1146, %v1143, %v1145
  %1149 = vst [vmem:[#allocation3] sm:$0xff] %v1147
  %v1150 = vld [vmem:[#allocation2] sm:$0xff]
  %v1151 = vld [vmem:[#allocation2 + $0x8] sm:$0xff]
  %v1152 = vld [vmem:[%s2 + $0x22] ss:$0 sm:$0xff]
  %1154 = vrot.lane.b32.xlu0 %v1152, 120
  %v1155 = vpop.permute.xlu0 %1154
  %v1157 = vmul.f32 %v1150, %v1155
  %v1158 = vmul.f32 %v1151, %v1155
  %1161 = vrot.lane.b32.xlu0 %v1157, 8
  %v1162 = vpop.permute.xlu0 %1161
  %1163 = vrot.lane.b32.xlu0 %v1158, 8
  %v1164 = vpop.permute.xlu0 %1163
  %vm1165 = vcmask 64512
  %v1166 = vsel %vm1165, %v1162, %v1164
  %1168 = vst [vmem:[#allocation3 + $0x20] sm:$0xff] %v1166
  %v1169 = vld [vmem:[#allocation2] sm:$0xff]
  %v1170 = vld [vmem:[#allocation2 + $0x8] sm:$0xff]
  %v1171 = vld [vmem:[%s2 + $0x23] ss:$0 sm:$0xff]
  %1173 = vrot.lane.b32.xlu0 %v1171, 121
  %v1174 = vpop.permute.xlu0 %1173
  %v1176 = vmul.f32 %v1169, %v1174
  %v1177 = vmul.f32 %v1170, %v1174
  %1180 = vrot.lane.b32.xlu0 %v1176, 7
  %v1181 = vpop.permute.xlu0 %1180
  %1182 = vrot.lane.b32.xlu0 %v1177, 7
  %v1183 = vpop.permute.xlu0 %1182
  %vm1184 = vcmask 56320
  %v1185 = vsel %vm1184, %v1181, %v1183
  %1187 = vst [vmem:[#allocation3 + $0x40] sm:$0xff] %v1185
  %v1188 = vld [vmem:[#allocation2] sm:$0xff]
  %v1189 = vld [vmem:[#allocation2 + $0x8] sm:$0xff]
  %v1190 = vld [vmem:[%s2 + $0x24] ss:$0 sm:$0xff]
  %1192 = vrot.lane.b32.xlu0 %v1190, 127
  %v1193 = vpop.permute.xlu0 %1192
  %v1195 = vmul.f32 %v1188, %v1193
  %v1196 = vmul.f32 %v1189, %v1193
  %1199 = vrot.lane.b32.xlu0 %v1195, 1
  %v1200 = vpop.permute.xlu0 %1199
  %1201 = vrot.lane.b32.xlu0 %v1196, 1
  %v1202 = vpop.permute.xlu0 %1201
  %v1203 = vsel %vm339, %v1200, %v1202
  %1205 = vst [vmem:[#allocation3 + $0x60] sm:$0xff] %v1203
  %v1206 = vld [vmem:[#allocation2 + $0x8] sm:$0xff]
  %1207 = vst [vmem:[#allocation3 + $0x80] sm:$0xff] %v1206
  %v1208 = vld [vmem:[#allocation2 + $0x8] sm:$0xff]
  %v1209 = vld [vmem:[#allocation2 + $0x10] sm:$0xff]
  %v1210 = vld [vmem:[%s2 + $0x26] ss:$0 sm:$0xff]
  %1212 = vrot.lane.b32.xlu0 %v1210, 1
  %v1213 = vpop.permute.xlu0 %1212
  %v1215 = vmul.f32 %v1208, %v1213
  %v1216 = vmul.f32 %v1209, %v1213
  %1219 = vrot.lane.b32.xlu0 %v1215, 127
  %v1220 = vpop.permute.xlu0 %1219
  %1221 = vrot.lane.b32.xlu0 %v1216, 127
  %v1222 = vpop.permute.xlu0 %1221
  %v1223 = vsel %vm305, %v1220, %v1222
  %1225 = vst [vmem:[#allocation3 + $0xa0] sm:$0xff] %v1223
  %v1226 = vld [vmem:[#allocation2 + $0x8] sm:$0xff]
  %v1227 = vld [vmem:[#allocation2 + $0x10] sm:$0xff]
  %v1228 = vld [vmem:[%s2 + $0x27] ss:$0 sm:$0xff]
  %1230 = vrot.lane.b32.xlu0 %v1228, 7
  %v1231 = vpop.permute.xlu0 %1230
  %v1233 = vmul.f32 %v1226, %v1231
  %v1234 = vmul.f32 %v1227, %v1231
  %1237 = vrot.lane.b32.xlu0 %v1233, 121
  %v1238 = vpop.permute.xlu0 %1237
  %1239 = vrot.lane.b32.xlu0 %v1234, 121
  %v1240 = vpop.permute.xlu0 %1239
  %vm1241 = vcmask 990208
  %v1242 = vsel %vm1241, %v1238, %v1240
  %1244 = vst [vmem:[#allocation3 + $0xc0] sm:$0xff] %v1242
  %v1245 = vld [vmem:[#allocation2 + $0x8] sm:$0xff]
  %v1246 = vld [vmem:[#allocation2 + $0x10] sm:$0xff]
  %v1247 = vld [vmem:[%s2 + $0x40] ss:$0 sm:$0xff]
  %1249 = vrot.lane.b32.xlu0 %v1247, 8
  %v1250 = vpop.permute.xlu0 %1249
  %v1252 = vmul.f32 %v1245, %v1250
  %v1253 = vmul.f32 %v1246, %v1250
  %1256 = vrot.lane.b32.xlu0 %v1252, 120
  %v1257 = vpop.permute.xlu0 %1256
  %1258 = vrot.lane.b32.xlu0 %v1253, 120
  %v1259 = vpop.permute.xlu0 %1258
  %vm1260 = vcmask 982016
  %v1261 = vsel %vm1260, %v1257, %v1259
  %1263 = vst [vmem:[#allocation3 + $0xe0] sm:$0xff] %v1261
  %v1264 = vld [vmem:[#allocation2 + $0x8] sm:$0xff]
  %v1265 = vld [vmem:[#allocation2 + $0x10] sm:$0xff]
  %v1266 = vld [vmem:[%s2 + $0x41] ss:$0 sm:$0xff]
  %1268 = vrot.lane.b32.xlu0 %v1266, 9
  %v1269 = vpop.permute.xlu0 %1268
  %v1271 = vmul.f32 %v1264, %v1269
  %v1272 = vmul.f32 %v1265, %v1269
  %1275 = vrot.lane.b32.xlu0 %v1271, 119
  %v1276 = vpop.permute.xlu0 %1275
  %1277 = vrot.lane.b32.xlu0 %v1272, 119
  %v1278 = vpop.permute.xlu0 %1277
  %vm1279 = vcmask 973824
  %v1280 = vsel %vm1279, %v1276, %v1278
  %1282 = vst [vmem:[#allocation3 + $0x100] sm:$0xff] %v1280
  %v1283 = vld [vmem:[%s1 + $0x10] sm:$0xff]
  %v1284 = vld [vmem:[#allocation3] sm:$0xff]
  %v1285 = vld [vmem:[#allocation3 + $0x20] sm:$0xff]
  %v1286 = vld [vmem:[#allocation3 + $0x40] sm:$0xff]
  %v1287 = vld [vmem:[#allocation3 + $0x60] sm:$0xff]
  %v1288 = vld [vmem:[#allocation3 + $0x80] sm:$0xff]
  %v1289 = vld [vmem:[#allocation3 + $0xa0] sm:$0xff]
  %v1290 = vld [vmem:[#allocation3 + $0xc0] sm:$0xff]
  %v1291 = vld [vmem:[#allocation3 + $0xe0] sm:$0xff]
  %v1292 = vld [vmem:[#allocation3 + $0x100] sm:$0xff]
  %1294 = vset.pattern.permute.xlu0 72
  %1295 = vperm.xlu0 %1294, %v1283
  %v1296 = vpop.permute.xlu0 %1295
  %vm1298 = vcmask 588800
  %v1299 = vsel %vm1298, %v1283, 0
  %1301 = vmatprep.subr.mxu0 0.0
  %1302 = vmatpush1.msra.mxu0 0.0
  %1303 = vmatprep.subr.mxu0 0.0
  %1304 = vmatpush1.msra.mxu0 0.0
  %1305 = vmatprep.subr.mxu0 0.0
  %1306 = vmatpush1.msra.mxu0 0.0
  %1307 = vmatprep.subr.mxu0 0.0
  %1308 = vmatpush1.msra.mxu0 0.0
  %1309 = vmatprep.subr.mxu0 0.0
  %1310 = vmatpush1.msra.mxu0 0.0
  %1311 = vmatprep.subr.mxu0 0.0
  %1312 = vmatpush1.msra.mxu0 0.0
  %1313 = vmatprep.subr.mxu0 0.0
  %1314 = vmatpush1.msra.mxu0 0.0
  %1315 = vmatprep.subr.mxu0 0.0
  %1316 = vmatpush1.msra.mxu0 %v1292
  %1317 = vmatprep.subr.mxu0 0.0
  %1318 = vmatpush1.msra.mxu0 %v1291
  %1319 = vmatprep.subr.mxu0 0.0
  %1320 = vmatpush1.msra.mxu0 %v1290
  %1321 = vmatprep.subr.mxu0 0.0
  %1322 = vmatpush1.msra.mxu0 %v1289
  %1323 = vmatprep.subr.mxu0 0.0
  %1324 = vmatpush1.msra.mxu0 %v1288
  %1325 = vmatprep.subr.mxu0 0.0
  %1326 = vmatpush1.msra.mxu0 %v1287
  %1327 = vmatprep.subr.mxu0 0.0
  %1328 = vmatpush1.msra.mxu0 %v1286
  %1329 = vmatprep.subr.mxu0 0.0
  %1330 = vmatpush1.msra.mxu0 %v1285
  %1331 = vmatprep.subr.mxu0 0.0
  %1332 = vmatpush1.msra.mxu0 %v1284
  %1333 = vmatprep.subr.mxu0 0.0
  %1334 = vmatpush2.msra.mxu0 0.0
  %1335 = vmatprep.subr.mxu0 0.0
  %1336 = vmatpush2.msra.mxu0 0.0
  %1337 = vmatprep.subr.mxu0 0.0
  %1338 = vmatpush2.msra.mxu0 0.0
  %1339 = vmatprep.subr.mxu0 0.0
  %1340 = vmatpush2.msra.mxu0 0.0
  %1341 = vmatprep.subr.mxu0 0.0
  %1342 = vmatpush2.msra.mxu0 0.0
  %1343 = vmatprep.subr.mxu0 0.0
  %1344 = vmatpush2.msra.mxu0 0.0
  %1345 = vmatprep.subr.mxu0 0.0
  %1346 = vmatpush2.msra.mxu0 0.0
  %1347 = vmatprep.subr.mxu0 0.0
  %1348 = vmatpush2.msra.mxu0 0.0
  %1349 = vmatprep.subr.mxu0 0.0
  %1350 = vmatpush2.msra.mxu0 0.0
  %1351 = vmatprep.subr.mxu0 0.0
  %1352 = vmatpush2.msra.mxu0 0.0
  %1353 = vmatprep.subr.mxu0 0.0
  %1354 = vmatpush2.msra.mxu0 0.0
  %1355 = vmatprep.subr.mxu0 0.0
  %1356 = vmatpush2.msra.mxu0 0.0
  %1357 = vmatprep.subr.mxu0 0.0
  %1358 = vmatpush2.msra.mxu0 0.0
  %1359 = vmatprep.subr.mxu0 0.0
  %1360 = vmatpush2.msra.mxu0 0.0
  %1361 = vmatprep.subr.mxu0 0.0
  %1362 = vmatpush2.msra.mxu0 0.0
  %1363 = vmatprep.subr.mxu0 0.0
  %1364 = vmatpush2.msra.mxu0 0.0
  %1365 = vmatprep.mubr.f32.mxu0 0.0
  %1366 = vmatmul.mubr.f32.gmra.mxu0 %v1299
  %v1367 = vpop.f32.mrf.mxu0
  %v1368 = vadd.f32 %v1296, %v1367
  %v1369 = vpop.f32.mrf.mxu0
  %1370 = vdwg.mxu0
  %v1371 = vmax.f32 %v1368, 0.0
  %1372 = vst [vmem:[#allocation2 + $0x8] sm:$0xff] %v1371
  %v1373 = vld [vmem:[#allocation2] sm:$0xff]
  %v1374 = vld [vmem:[#allocation2 + $0x8] sm:$0xff]
  %v1375 = vld [vmem:[%s2 + $0x21] ss:$0 sm:$0xff]
  %1377 = vrot.lane.b32.xlu0 %v1375, 119
  %v1378 = vpop.permute.xlu0 %1377
  %v1380 = vmul.f32 %v1373, %v1378
  %v1381 = vmul.f32 %v1374, %v1378
  %1384 = vrot.lane.b32.xlu0 %v1380, 9
  %v1385 = vpop.permute.xlu0 %1384
  %1386 = vrot.lane.b32.xlu0 %v1381, 9
  %v1387 = vpop.permute.xlu0 %1386
  %v1388 = vsel %vm1146, %v1385, %v1387
  %1390 = vst [vmem:[#allocation3] sm:$0xff] %v1388
  %v1391 = vld [vmem:[#allocation2] sm:$0xff]
  %v1392 = vld [vmem:[#allocation2 + $0x8] sm:$0xff]
  %v1393 = vld [vmem:[%s2 + $0x22] ss:$0 sm:$0xff]
  %1395 = vrot.lane.b32.xlu0 %v1393, 120
  %v1396 = vpop.permute.xlu0 %1395
  %v1398 = vmul.f32 %v1391, %v1396
  %v1399 = vmul.f32 %v1392, %v1396
  %1402 = vrot.lane.b32.xlu0 %v1398, 8
  %v1403 = vpop.permute.xlu0 %1402
  %1404 = vrot.lane.b32.xlu0 %v1399, 8
  %v1405 = vpop.permute.xlu0 %1404
  %v1406 = vsel %vm1165, %v1403, %v1405
  %1408 = vst [vmem:[#allocation3 + $0x20] sm:$0xff] %v1406
  %v1409 = vld [vmem:[#allocation2] sm:$0xff]
  %v1410 = vld [vmem:[#allocation2 + $0x8] sm:$0xff]
  %v1411 = vld [vmem:[%s2 + $0x23] ss:$0 sm:$0xff]
  %1413 = vrot.lane.b32.xlu0 %v1411, 121
  %v1414 = vpop.permute.xlu0 %1413
  %v1416 = vmul.f32 %v1409, %v1414
  %v1417 = vmul.f32 %v1410, %v1414
  %1420 = vrot.lane.b32.xlu0 %v1416, 7
  %v1421 = vpop.permute.xlu0 %1420
  %1422 = vrot.lane.b32.xlu0 %v1417, 7
  %v1423 = vpop.permute.xlu0 %1422
  %v1424 = vsel %vm1184, %v1421, %v1423
  %1426 = vst [vmem:[#allocation3 + $0x40] sm:$0xff] %v1424
  %v1427 = vld [vmem:[#allocation2] sm:$0xff]
  %v1428 = vld [vmem:[#allocation2 + $0x8] sm:$0xff]
  %v1429 = vld [vmem:[%s2 + $0x24] ss:$0 sm:$0xff]
  %1431 = vrot.lane.b32.xlu0 %v1429, 127
  %v1432 = vpop.permute.xlu0 %1431
  %v1434 = vmul.f32 %v1427, %v1432
  %v1435 = vmul.f32 %v1428, %v1432
  %1438 = vrot.lane.b32.xlu0 %v1434, 1
  %v1439 = vpop.permute.xlu0 %1438
  %1440 = vrot.lane.b32.xlu0 %v1435, 1
  %v1441 = vpop.permute.xlu0 %1440
  %v1442 = vsel %vm339, %v1439, %v1441
  %1444 = vst [vmem:[#allocation3 + $0x60] sm:$0xff] %v1442
  %v1445 = vld [vmem:[#allocation2 + $0x8] sm:$0xff]
  %1446 = vst [vmem:[#allocation3 + $0x80] sm:$0xff] %v1445
  %v1447 = vld [vmem:[#allocation2 + $0x8] sm:$0xff]
  %v1448 = vld [vmem:[#allocation2 + $0x10] sm:$0xff]
  %v1449 = vld [vmem:[%s2 + $0x26] ss:$0 sm:$0xff]
  %1451 = vrot.lane.b32.xlu0 %v1449, 1
  %v1452 = vpop.permute.xlu0 %1451
  %v1454 = vmul.f32 %v1447, %v1452
  %v1455 = vmul.f32 %v1448, %v1452
  %1458 = vrot.lane.b32.xlu0 %v1454, 127
  %v1459 = vpop.permute.xlu0 %1458
  %1460 = vrot.lane.b32.xlu0 %v1455, 127
  %v1461 = vpop.permute.xlu0 %1460
  %v1462 = vsel %vm305, %v1459, %v1461
  %1464 = vst [vmem:[#allocation3 + $0xa0] sm:$0xff] %v1462
  %v1465 = vld [vmem:[#allocation2 + $0x8] sm:$0xff]
  %v1466 = vld [vmem:[#allocation2 + $0x10] sm:$0xff]
  %v1467 = vld [vmem:[%s2 + $0x27] ss:$0 sm:$0xff]
  %1469 = vrot.lane.b32.xlu0 %v1467, 7
  %v1470 = vpop.permute.xlu0 %1469
  %v1472 = vmul.f32 %v1465, %v1470
  %v1473 = vmul.f32 %v1466, %v1470
  %1476 = vrot.lane.b32.xlu0 %v1472, 121
  %v1477 = vpop.permute.xlu0 %1476
  %1478 = vrot.lane.b32.xlu0 %v1473, 121
  %v1479 = vpop.permute.xlu0 %1478
  %v1480 = vsel %vm1241, %v1477, %v1479
  %1482 = vst [vmem:[#allocation3 + $0xc0] sm:$0xff] %v1480
  %v1483 = vld [vmem:[#allocation2 + $0x8] sm:$0xff]
  %v1484 = vld [vmem:[#allocation2 + $0x10] sm:$0xff]
  %v1485 = vld [vmem:[%s2 + $0x40] ss:$0 sm:$0xff]
  %1487 = vrot.lane.b32.xlu0 %v1485, 8
  %v1488 = vpop.permute.xlu0 %1487
  %v1490 = vmul.f32 %v1483, %v1488
  %v1491 = vmul.f32 %v1484, %v1488
  %1494 = vrot.lane.b32.xlu0 %v1490, 120
  %v1495 = vpop.permute.xlu0 %1494
  %1496 = vrot.lane.b32.xlu0 %v1491, 120
  %v1497 = vpop.permute.xlu0 %1496
  %v1498 = vsel %vm1260, %v1495, %v1497
  %1500 = vst [vmem:[#allocation3 + $0xe0] sm:$0xff] %v1498
  %v1501 = vld [vmem:[#allocation2 + $0x8] sm:$0xff]
  %v1502 = vld [vmem:[#allocation2 + $0x10] sm:$0xff]
  %v1503 = vld [vmem:[%s2 + $0x41] ss:$0 sm:$0xff]
  %1505 = vrot.lane.b32.xlu0 %v1503, 9
  %v1506 = vpop.permute.xlu0 %1505
  %v1508 = vmul.f32 %v1501, %v1506
  %v1509 = vmul.f32 %v1502, %v1506
  %1512 = vrot.lane.b32.xlu0 %v1508, 119
  %v1513 = vpop.permute.xlu0 %1512
  %1514 = vrot.lane.b32.xlu0 %v1509, 119
  %v1515 = vpop.permute.xlu0 %1514
  %v1516 = vsel %vm1279, %v1513, %v1515
  %1518 = vst [vmem:[#allocation3 + $0x100] sm:$0xff] %v1516
  %v1519 = vld [vmem:[%s1 + $0x20] sm:$0xff]
  %v1520 = vld [vmem:[#allocation3] sm:$0xff]
  %v1521 = vld [vmem:[#allocation3 + $0x20] sm:$0xff]
  %v1522 = vld [vmem:[#allocation3 + $0x40] sm:$0xff]
  %v1523 = vld [vmem:[#allocation3 + $0x60] sm:$0xff]
  %v1524 = vld [vmem:[#allocation3 + $0x80] sm:$0xff]
  %v1525 = vld [vmem:[#allocation3 + $0xa0] sm:$0xff]
  %v1526 = vld [vmem:[#allocation3 + $0xc0] sm:$0xff]
  %v1527 = vld [vmem:[#allocation3 + $0xe0] sm:$0xff]
  %v1528 = vld [vmem:[#allocation3 + $0x100] sm:$0xff]
  %1530 = vset.pattern.permute.xlu0 72
  %1531 = vperm.xlu0 %1530, %v1519
  %v1532 = vpop.permute.xlu0 %1531
  %v1534 = vsel %vm1298, %v1519, 0
  %1536 = vmatprep.subr.mxu0 0.0
  %1537 = vmatpush1.msra.mxu0 0.0
  %1538 = vmatprep.subr.mxu0 0.0
  %1539 = vmatpush1.msra.mxu0 0.0
  %1540 = vmatprep.subr.mxu0 0.0
  %1541 = vmatpush1.msra.mxu0 0.0
  %1542 = vmatprep.subr.mxu0 0.0
  %1543 = vmatpush1.msra.mxu0 0.0
  %1544 = vmatprep.subr.mxu0 0.0
  %1545 = vmatpush1.msra.mxu0 0.0
  %1546 = vmatprep.subr.mxu0 0.0
  %1547 = vmatpush1.msra.mxu0 0.0
  %1548 = vmatprep.subr.mxu0 0.0
  %1549 = vmatpush1.msra.mxu0 0.0
  %1550 = vmatprep.subr.mxu0 0.0
  %1551 = vmatpush1.msra.mxu0 %v1528
  %1552 = vmatprep.subr.mxu0 0.0
  %1553 = vmatpush1.msra.mxu0 %v1527
  %1554 = vmatprep.subr.mxu0 0.0
  %1555 = vmatpush1.msra.mxu0 %v1526
  %1556 = vmatprep.subr.mxu0 0.0
  %1557 = vmatpush1.msra.mxu0 %v1525
  %1558 = vmatprep.subr.mxu0 0.0
  %1559 = vmatpush1.msra.mxu0 %v1524
  %1560 = vmatprep.subr.mxu0 0.0
  %1561 = vmatpush1.msra.mxu0 %v1523
  %1562 = vmatprep.subr.mxu0 0.0
  %1563 = vmatpush1.msra.mxu0 %v1522
  %1564 = vmatprep.subr.mxu0 0.0
  %1565 = vmatpush1.msra.mxu0 %v1521
  %1566 = vmatprep.subr.mxu0 0.0
  %1567 = vmatpush1.msra.mxu0 %v1520
  %1568 = vmatprep.subr.mxu0 0.0
  %1569 = vmatpush2.msra.mxu0 0.0
  %1570 = vmatprep.subr.mxu0 0.0
  %1571 = vmatpush2.msra.mxu0 0.0
  %1572 = vmatprep.subr.mxu0 0.0
  %1573 = vmatpush2.msra.mxu0 0.0
  %1574 = vmatprep.subr.mxu0 0.0
  %1575 = vmatpush2.msra.mxu0 0.0
  %1576 = vmatprep.subr.mxu0 0.0
  %1577 = vmatpush2.msra.mxu0 0.0
  %1578 = vmatprep.subr.mxu0 0.0
  %1579 = vmatpush2.msra.mxu0 0.0
  %1580 = vmatprep.subr.mxu0 0.0
  %1581 = vmatpush2.msra.mxu0 0.0
  %1582 = vmatprep.subr.mxu0 0.0
  %1583 = vmatpush2.msra.mxu0 0.0
  %1584 = vmatprep.subr.mxu0 0.0
  %1585 = vmatpush2.msra.mxu0 0.0
  %1586 = vmatprep.subr.mxu0 0.0
  %1587 = vmatpush2.msra.mxu0 0.0
  %1588 = vmatprep.subr.mxu0 0.0
  %1589 = vmatpush2.msra.mxu0 0.0
  %1590 = vmatprep.subr.mxu0 0.0
  %1591 = vmatpush2.msra.mxu0 0.0
  %1592 = vmatprep.subr.mxu0 0.0
  %1593 = vmatpush2.msra.mxu0 0.0
  %1594 = vmatprep.subr.mxu0 0.0
  %1595 = vmatpush2.msra.mxu0 0.0
  %1596 = vmatprep.subr.mxu0 0.0
  %1597 = vmatpush2.msra.mxu0 0.0
  %1598 = vmatprep.subr.mxu0 0.0
  %1599 = vmatpush2.msra.mxu0 0.0
  %1600 = vmatprep.mubr.f32.mxu0 0.0
  %1601 = vmatmul.mubr.f32.gmra.mxu0 %v1534
  %v1602 = vpop.f32.mrf.mxu0
  %v1603 = vadd.f32 %v1532, %v1602
  %v1604 = vpop.f32.mrf.mxu0
  %1605 = vdwg.mxu0
  %v1606 = vadd.f32 %v1127, %v1603
  %v1607 = vmax.f32 %v1606, 0.0
  %1608 = vst [vmem:[#allocation2 + $0x8] sm:$0xff] %v1607
  %v1609 = vld [vmem:[#allocation2] sm:$0xff]
  %v1610 = vld [vmem:[#allocation2 + $0x8] sm:$0xff]
  %v1611 = vld [vmem:[%s2 + $0x21] ss:$0 sm:$0xff]
  %1613 = vrot.lane.b32.xlu0 %v1611, 119
  %v1614 = vpop.permute.xlu0 %1613
  %v1616 = vmul.f32 %v1609, %v1614
  %v1617 = vmul.f32 %v1610, %v1614
  %1620 = vrot.lane.b32.xlu0 %v1616, 9
  %v1621 = vpop.permute.xlu0 %1620
  %1622 = vrot.lane.b32.xlu0 %v1617, 9
  %v1623 = vpop.permute.xlu0 %1622
  %v1624 = vsel %vm1146, %v1621, %v1623
  %1626 = vst [vmem:[#allocation3] sm:$0xff] %v1624
  %v1627 = vld [vmem:[#allocation2] sm:$0xff]
  %v1628 = vld [vmem:[#allocation2 + $0x8] sm:$0xff]
  %v1629 = vld [vmem:[%s2 + $0x22] ss:$0 sm:$0xff]
  %1631 = vrot.lane.b32.xlu0 %v1629, 120
  %v1632 = vpop.permute.xlu0 %1631
  %v1634 = vmul.f32 %v1627, %v1632
  %v1635 = vmul.f32 %v1628, %v1632
  %1638 = vrot.lane.b32.xlu0 %v1634, 8
  %v1639 = vpop.permute.xlu0 %1638
  %1640 = vrot.lane.b32.xlu0 %v1635, 8
  %v1641 = vpop.permute.xlu0 %1640
  %v1642 = vsel %vm1165, %v1639, %v1641
  %1644 = vst [vmem:[#allocation3 + $0x20] sm:$0xff] %v1642
  %v1645 = vld [vmem:[#allocation2] sm:$0xff]
  %v1646 = vld [vmem:[#allocation2 + $0x8] sm:$0xff]
  %v1647 = vld [vmem:[%s2 + $0x23] ss:$0 sm:$0xff]
  %1649 = vrot.lane.b32.xlu0 %v1647, 121
  %v1650 = vpop.permute.xlu0 %1649
  %v1652 = vmul.f32 %v1645, %v1650
  %v1653 = vmul.f32 %v1646, %v1650
  %1656 = vrot.lane.b32.xlu0 %v1652, 7
  %v1657 = vpop.permute.xlu0 %1656
  %1658 = vrot.lane.b32.xlu0 %v1653, 7
  %v1659 = vpop.permute.xlu0 %1658
  %v1660 = vsel %vm1184, %v1657, %v1659
  %1662 = vst [vmem:[#allocation3 + $0x40] sm:$0xff] %v1660
  %v1663 = vld [vmem:[#allocation2] sm:$0xff]
  %v1664 = vld [vmem:[#allocation2 + $0x8] sm:$0xff]
  %v1665 = vld [vmem:[%s2 + $0x24] ss:$0 sm:$0xff]
  %1667 = vrot.lane.b32.xlu0 %v1665, 127
  %v1668 = vpop.permute.xlu0 %1667
  %v1670 = vmul.f32 %v1663, %v1668
  %v1671 = vmul.f32 %v1664, %v1668
  %1674 = vrot.lane.b32.xlu0 %v1670, 1
  %v1675 = vpop.permute.xlu0 %1674
  %1676 = vrot.lane.b32.xlu0 %v1671, 1
  %v1677 = vpop.permute.xlu0 %1676
  %v1678 = vsel %vm339, %v1675, %v1677
  %1680 = vst [vmem:[#allocation3 + $0x60] sm:$0xff] %v1678
  %v1681 = vld [vmem:[#allocation2 + $0x8] sm:$0xff]
  %1682 = vst [vmem:[#allocation3 + $0x80] sm:$0xff] %v1681
  %v1683 = vld [vmem:[#allocation2 + $0x8] sm:$0xff]
  %v1684 = vld [vmem:[#allocation2 + $0x10] sm:$0xff]
  %v1685 = vld [vmem:[%s2 + $0x26] ss:$0 sm:$0xff]
  %1687 = vrot.lane.b32.xlu0 %v1685, 1
  %v1688 = vpop.permute.xlu0 %1687
  %v1690 = vmul.f32 %v1683, %v1688
  %v1691 = vmul.f32 %v1684, %v1688
  %1694 = vrot.lane.b32.xlu0 %v1690, 127
  %v1695 = vpop.permute.xlu0 %1694
  %1696 = vrot.lane.b32.xlu0 %v1691, 127
  %v1697 = vpop.permute.xlu0 %1696
  %v1698 = vsel %vm305, %v1695, %v1697
  %1700 = vst [vmem:[#allocation3 + $0xa0] sm:$0xff] %v1698
  %v1701 = vld [vmem:[#allocation2 + $0x8] sm:$0xff]
  %v1702 = vld [vmem:[#allocation2 + $0x10] sm:$0xff]
  %v1703 = vld [vmem:[%s2 + $0x27] ss:$0 sm:$0xff]
  %1705 = vrot.lane.b32.xlu0 %v1703, 7
  %v1706 = vpop.permute.xlu0 %1705
  %v1708 = vmul.f32 %v1701, %v1706
  %v1709 = vmul.f32 %v1702, %v1706
  %1712 = vrot.lane.b32.xlu0 %v1708, 121
  %v1713 = vpop.permute.xlu0 %1712
  %1714 = vrot.lane.b32.xlu0 %v1709, 121
  %v1715 = vpop.permute.xlu0 %1714
  %v1716 = vsel %vm1241, %v1713, %v1715
  %1718 = vst [vmem:[#allocation3 + $0xc0] sm:$0xff] %v1716
  %v1719 = vld [vmem:[#allocation2 + $0x8] sm:$0xff]
  %v1720 = vld [vmem:[#allocation2 + $0x10] sm:$0xff]
  %v1721 = vld [vmem:[%s2 + $0x40] ss:$0 sm:$0xff]
  %1723 = vrot.lane.b32.xlu0 %v1721, 8
  %v1724 = vpop.permute.xlu0 %1723
  %v1726 = vmul.f32 %v1719, %v1724
  %v1727 = vmul.f32 %v1720, %v1724
  %1730 = vrot.lane.b32.xlu0 %v1726, 120
  %v1731 = vpop.permute.xlu0 %1730
  %1732 = vrot.lane.b32.xlu0 %v1727, 120
  %v1733 = vpop.permute.xlu0 %1732
  %v1734 = vsel %vm1260, %v1731, %v1733
  %1736 = vst [vmem:[#allocation3 + $0xe0] sm:$0xff] %v1734
  %v1737 = vld [vmem:[#allocation2 + $0x8] sm:$0xff]
  %v1738 = vld [vmem:[#allocation2 + $0x10] sm:$0xff]
  %v1739 = vld [vmem:[%s2 + $0x41] ss:$0 sm:$0xff]
  %1741 = vrot.lane.b32.xlu0 %v1739, 9
  %v1742 = vpop.permute.xlu0 %1741
  %v1744 = vmul.f32 %v1737, %v1742
  %v1745 = vmul.f32 %v1738, %v1742
  %1748 = vrot.lane.b32.xlu0 %v1744, 119
  %v1749 = vpop.permute.xlu0 %1748
  %1750 = vrot.lane.b32.xlu0 %v1745, 119
  %v1751 = vpop.permute.xlu0 %1750
  %v1752 = vsel %vm1279, %v1749, %v1751
  %1754 = vst [vmem:[#allocation3 + $0x100] sm:$0xff] %v1752
  %v1755 = vld [vmem:[%s1 + $0x30] sm:$0xff]
  %v1756 = vld [vmem:[%s1 + $0x40] sm:$0xff]
  %v1757 = vld [vmem:[#allocation3] sm:$0xff]
  %v1758 = vld [vmem:[#allocation3 + $0x20] sm:$0xff]
  %v1759 = vld [vmem:[#allocation3 + $0x40] sm:$0xff]
  %v1760 = vld [vmem:[#allocation3 + $0x60] sm:$0xff]
  %v1761 = vld [vmem:[#allocation3 + $0x80] sm:$0xff]
  %v1762 = vld [vmem:[#allocation3 + $0xa0] sm:$0xff]
  %v1763 = vld [vmem:[#allocation3 + $0xc0] sm:$0xff]
  %v1764 = vld [vmem:[#allocation3 + $0xe0] sm:$0xff]
  %v1765 = vld [vmem:[#allocation3 + $0x100] sm:$0xff]
  %1767 = vset.pattern.permute.xlu0 72
  %1768 = vperm.xlu0 %1767, %v1755
  %v1769 = vpop.permute.xlu0 %1768
  %1772 = vset.pattern.permute.xlu0 72
  %1773 = vperm.xlu0 %1772, %v1756
  %v1774 = vpop.permute.xlu0 %1773
  %v1776 = vsel %vm1298, %v1755, 0
  %v1778 = vsel %vm1298, %v1756, 0
  %1780 = vmatprep.subr.mxu0 0.0
  %1781 = vmatpush1.msra.mxu0 0.0
  %1782 = vmatprep.subr.mxu0 0.0
  %1783 = vmatpush1.msra.mxu0 0.0
  %1784 = vmatprep.subr.mxu0 0.0
  %1785 = vmatpush1.msra.mxu0 0.0
  %1786 = vmatprep.subr.mxu0 0.0
  %1787 = vmatpush1.msra.mxu0 0.0
  %1788 = vmatprep.subr.mxu0 0.0
  %1789 = vmatpush1.msra.mxu0 0.0
  %1790 = vmatprep.subr.mxu0 0.0
  %1791 = vmatpush1.msra.mxu0 0.0
  %1792 = vmatprep.subr.mxu0 0.0
  %1793 = vmatpush1.msra.mxu0 0.0
  %1794 = vmatprep.subr.mxu0 0.0
  %1795 = vmatpush1.msra.mxu0 %v1765
  %1796 = vmatprep.subr.mxu0 0.0
  %1797 = vmatpush1.msra.mxu0 %v1764
  %1798 = vmatprep.subr.mxu0 0.0
  %1799 = vmatpush1.msra.mxu0 %v1763
  %1800 = vmatprep.subr.mxu0 0.0
  %1801 = vmatpush1.msra.mxu0 %v1762
  %1802 = vmatprep.subr.mxu0 0.0
  %1803 = vmatpush1.msra.mxu0 %v1761
  %1804 = vmatprep.subr.mxu0 0.0
  %1805 = vmatpush1.msra.mxu0 %v1760
  %1806 = vmatprep.subr.mxu0 0.0
  %1807 = vmatpush1.msra.mxu0 %v1759
  %1808 = vmatprep.subr.mxu0 0.0
  %1809 = vmatpush1.msra.mxu0 %v1758
  %1810 = vmatprep.subr.mxu0 0.0
  %1811 = vmatpush1.msra.mxu0 %v1757
  %1812 = vmatprep.subr.mxu0 0.0
  %1813 = vmatpush2.msra.mxu0 0.0
  %1814 = vmatprep.subr.mxu0 0.0
  %1815 = vmatpush2.msra.mxu0 0.0
  %1816 = vmatprep.subr.mxu0 0.0
  %1817 = vmatpush2.msra.mxu0 0.0
  %1818 = vmatprep.subr.mxu0 0.0
  %1819 = vmatpush2.msra.mxu0 0.0
  %1820 = vmatprep.subr.mxu0 0.0
  %1821 = vmatpush2.msra.mxu0 0.0
  %1822 = vmatprep.subr.mxu0 0.0
  %1823 = vmatpush2.msra.mxu0 0.0
  %1824 = vmatprep.subr.mxu0 0.0
  %1825 = vmatpush2.msra.mxu0 0.0
  %1826 = vmatprep.subr.mxu0 0.0
  %1827 = vmatpush2.msra.mxu0 0.0
  %1828 = vmatprep.subr.mxu0 0.0
  %1829 = vmatpush2.msra.mxu0 0.0
  %1830 = vmatprep.subr.mxu0 0.0
  %1831 = vmatpush2.msra.mxu0 0.0
  %1832 = vmatprep.subr.mxu0 0.0
  %1833 = vmatpush2.msra.mxu0 0.0
  %1834 = vmatprep.subr.mxu0 0.0
  %1835 = vmatpush2.msra.mxu0 0.0
  %1836 = vmatprep.subr.mxu0 0.0
  %1837 = vmatpush2.msra.mxu0 0.0
  %1838 = vmatprep.subr.mxu0 0.0
  %1839 = vmatpush2.msra.mxu0 0.0
  %1840 = vmatprep.subr.mxu0 0.0
  %1841 = vmatpush2.msra.mxu0 0.0
  %1842 = vmatprep.subr.mxu0 0.0
  %1843 = vmatpush2.msra.mxu0 0.0
  %1844 = vmatprep.mubr.f32.mxu0 0.0
  %1845 = vmatmul.mubr.f32.gmra.mxu0 %v1776
  %v1846 = vpop.f32.mrf.mxu0
  %v1847 = vadd.f32 %v1769, %v1846
  %v1848 = vpop.f32.mrf.mxu0
  %1849 = vmatprep.mubr.f32.mxu0 0.0
  %1850 = vmatmul.mubr.f32.gmra.mxu0 %v1778
  %v1851 = vpop.f32.mrf.mxu0
  %v1852 = vadd.f32 %v1774, %v1851
  %v1853 = vpop.f32.mrf.mxu0
  %1854 = vdwg.mxu0
  %v1855 = vld [vmem:[%s4] sm:$0xff]
  %v1856 = vld [vmem:[%s4 + $0x8] sm:$0xff]
  %v1857 = vld [vmem:[%s4 + $0x10] sm:$0xff]
  %v1858 = vld [vmem:[%s4 + $0x18] sm:$0xff]
  %v1859 = vld [vmem:[%s4 + $0x20] sm:$0xff]
  %v1860 = vld [vmem:[%s4 + $0x28] sm:$0xff]
  %v1861 = vld [vmem:[%s4 + $0x30] sm:$0xff]
  %v1862 = vld [vmem:[%s4 + $0x38] sm:$0xff]
  %v1863 = vld [vmem:[%s4 + $0x40] sm:$0xff]
  %v1864 = vld [vmem:[%s4 + $0x48] sm:$0xff]
  %v1865 = vld [vmem:[%s4 + $0x50] sm:$0xff]
  %v1866 = vld [vmem:[%s4 + $0x58] sm:$0xff]
  %v1867 = vld [vmem:[%s4 + $0x60] sm:$0xff]
  %v1868 = vld [vmem:[%s4 + $0x68] sm:$0xff]
  %v1869 = vld [vmem:[%s4 + $0x70] sm:$0xff]
  %v1870 = vld [vmem:[%s4 + $0x78] sm:$0xff]
  %1871 = vmatprep.subr.mxu0 0.0
  %1872 = vmatpush1.msra.mxu0 %v1870
  %1873 = vmatprep.subr.mxu0 0.0
  %1874 = vmatpush1.msra.mxu0 %v1869
  %1875 = vmatprep.subr.mxu0 0.0
  %1876 = vmatpush1.msra.mxu0 %v1868
  %1877 = vmatprep.subr.mxu0 0.0
  %1878 = vmatpush1.msra.mxu0 %v1867
  %1879 = vmatprep.subr.mxu0 0.0
  %1880 = vmatpush1.msra.mxu0 %v1866
  %1881 = vmatprep.subr.mxu0 0.0
  %1882 = vmatpush1.msra.mxu0 %v1865
  %1883 = vmatprep.subr.mxu0 0.0
  %1884 = vmatpush1.msra.mxu0 %v1864
  %1885 = vmatprep.subr.mxu0 0.0
  %1886 = vmatpush1.msra.mxu0 %v1863
  %1887 = vmatprep.subr.mxu0 0.0
  %1888 = vmatpush1.msra.mxu0 %v1862
  %1889 = vmatprep.subr.mxu0 0.0
  %1890 = vmatpush1.msra.mxu0 %v1861
  %1891 = vmatprep.subr.mxu0 0.0
  %1892 = vmatpush1.msra.mxu0 %v1860
  %1893 = vmatprep.subr.mxu0 0.0
  %1894 = vmatpush1.msra.mxu0 %v1859
  %1895 = vmatprep.subr.mxu0 0.0
  %1896 = vmatpush1.msra.mxu0 %v1858
  %1897 = vmatprep.subr.mxu0 0.0
  %1898 = vmatpush1.msra.mxu0 %v1857
  %1899 = vmatprep.subr.mxu0 0.0
  %1900 = vmatpush1.msra.mxu0 %v1856
  %1901 = vmatprep.subr.mxu0 0.0
  %1902 = vmatpush1.msra.mxu0 %v1855
  %1903 = vmatprep.subr.mxu0 0.0
  %1904 = vmatpush2.msra.mxu0 0.0
  %1905 = vmatprep.subr.mxu0 0.0
  %1906 = vmatpush2.msra.mxu0 0.0
  %1907 = vmatprep.subr.mxu0 0.0
  %1908 = vmatpush2.msra.mxu0 0.0
  %1909 = vmatprep.subr.mxu0 0.0
  %1910 = vmatpush2.msra.mxu0 0.0
  %1911 = vmatprep.subr.mxu0 0.0
  %1912 = vmatpush2.msra.mxu0 0.0
  %1913 = vmatprep.subr.mxu0 0.0
  %1914 = vmatpush2.msra.mxu0 0.0
  %1915 = vmatprep.subr.mxu0 0.0
  %1916 = vmatpush2.msra.mxu0 0.0
  %1917 = vmatprep.subr.mxu0 0.0
  %1918 = vmatpush2.msra.mxu0 0.0
  %1919 = vmatprep.subr.mxu0 0.0
  %1920 = vmatpush2.msra.mxu0 0.0
  %1921 = vmatprep.subr.mxu0 0.0
  %1922 = vmatpush2.msra.mxu0 0.0
  %1923 = vmatprep.subr.mxu0 0.0
  %1924 = vmatpush2.msra.mxu0 0.0
  %1925 = vmatprep.subr.mxu0 0.0
  %1926 = vmatpush2.msra.mxu0 0.0
  %1927 = vmatprep.subr.mxu0 0.0
  %1928 = vmatpush2.msra.mxu0 0.0
  %1929 = vmatprep.subr.mxu0 0.0
  %1930 = vmatpush2.msra.mxu0 0.0
  %1931 = vmatprep.subr.mxu0 0.0
  %1932 = vmatpush2.msra.mxu0 0.0
  %1933 = vmatprep.subr.mxu0 0.0
  %1934 = vmatpush2.msra.mxu0 0.0
  %1935 = vmatprep.mubr.f32.mxu0 0.0
  %1936 = vmatmul.mubr.f32.gmra.mxu0 %v1847
  %v1937 = vpop.f32.mrf.mxu0
  %v1938 = vadd.f32 0.0, %v1937
  %v1939 = vpop.f32.mrf.mxu0
  %1940 = vmatprep.mubr.f32.mxu0 0.0
  %1941 = vmatmul.mubr.f32.gmra.mxu0 %v1852
  %v1942 = vpop.f32.mrf.mxu0
  %v1943 = vadd.f32 0.0, %v1942
  %v1944 = vpop.f32.mrf.mxu0
  %1945 = vdwg.mxu0
  %v1946 = vmax.f32 %v1938, 0.0
  %v1947 = vmax.f32 %v1943, 0.0
  %vm1948 = vcmask 261120
  %1949 = vst.msk [vmem:[#allocation2 + $0x8] sm:$0xff] %vm1948, %v1946
  %1950 = vst.msk [vmem:[#allocation2 + $0x38] sm:$0xff] %vm1948, %v1947
  %v1951 = vld [vmem:[#allocation2] sm:$0xff]
  %v1952 = vld [vmem:[#allocation2 + $0x8] sm:$0xff]
  %v1953 = vld [vmem:[#allocation2 + $0x30] sm:$0xff]
  %v1954 = vld [vmem:[#allocation2 + $0x38] sm:$0xff]
  %v1955 = vld [vmem:[%s2 + $0x42] ss:$0 sm:$0xff]
  %1957 = vrot.lane.b32.xlu0 %v1955, 123
  %v1958 = vpop.permute.xlu0 %1957
  %v1960 = vmul.f32 %v1951, %v1958
  %v1961 = vmul.f32 %v1952, %v1958
  %v1962 = vmul.f32 %v1953, %v1958
  %v1963 = vmul.f32 %v1954, %v1958
  %1968 = vrot.lane.b32.xlu0 %v1960, 5
  %v1969 = vpop.permute.xlu0 %1968
  %1970 = vrot.lane.b32.xlu0 %v1961, 5
  %v1971 = vpop.permute.xlu0 %1970
  %1972 = vrot.lane.b32.xlu0 %v1962, 5
  %v1973 = vpop.permute.xlu0 %1972
  %1974 = vrot.lane.b32.xlu0 %v1963, 5
  %v1975 = vpop.permute.xlu0 %1974
  %vm1976 = vcmask 39936
  %v1977 = vsel %vm1976, %v1969, %v1971
  %v1978 = vsel %vm1976, %v1973, %v1975
  %1981 = vst.msk [vmem:[#allocation3] sm:$0xff] %vm1948, %v1977
  %1982 = vst.msk [vmem:[#allocation3 + $0x20] sm:$0xff] %vm1948, %v1978
  %v1983 = vld [vmem:[#allocation2] sm:$0xff]
  %v1984 = vld [vmem:[#allocation2 + $0x8] sm:$0xff]
  %v1985 = vld [vmem:[#allocation2 + $0x30] sm:$0xff]
  %v1986 = vld [vmem:[#allocation2 + $0x38] sm:$0xff]
  %v1987 = vld [vmem:[%s2 + $0x43] ss:$0 sm:$0xff]
  %1989 = vrot.lane.b32.xlu0 %v1987, 124
  %v1990 = vpop.permute.xlu0 %1989
  %v1992 = vmul.f32 %v1983, %v1990
  %v1993 = vmul.f32 %v1984, %v1990
  %v1994 = vmul.f32 %v1985, %v1990
  %v1995 = vmul.f32 %v1986, %v1990
  %2000 = vrot.lane.b32.xlu0 %v1992, 4
  %v2001 = vpop.permute.xlu0 %2000
  %2002 = vrot.lane.b32.xlu0 %v1993, 4
  %v2003 = vpop.permute.xlu0 %2002
  %2004 = vrot.lane.b32.xlu0 %v1994, 4
  %v2005 = vpop.permute.xlu0 %2004
  %2006 = vrot.lane.b32.xlu0 %v1995, 4
  %v2007 = vpop.permute.xlu0 %2006
  %vm2008 = vcmask 31744
  %v2009 = vsel %vm2008, %v2001, %v2003
  %v2010 = vsel %vm2008, %v2005, %v2007
  %2013 = vst.msk [vmem:[#allocation3 + $0x40] sm:$0xff] %vm1948, %v2009
  %2014 = vst.msk [vmem:[#allocation3 + $0x60] sm:$0xff] %vm1948, %v2010
  %v2015 = vld [vmem:[#allocation2] sm:$0xff]
  %v2016 = vld [vmem:[#allocation2 + $0x8] sm:$0xff]
  %v2017 = vld [vmem:[#allocation2 + $0x30] sm:$0xff]
  %v2018 = vld [vmem:[#allocation2 + $0x38] sm:$0xff]
  %v2019 = vld [vmem:[%s2 + $0x44] ss:$0 sm:$0xff]
  %2021 = vrot.lane.b32.xlu0 %v2019, 125
  %v2022 = vpop.permute.xlu0 %2021
  %v2024 = vmul.f32 %v2015, %v2022
  %v2025 = vmul.f32 %v2016, %v2022
  %v2026 = vmul.f32 %v2017, %v2022
  %v2027 = vmul.f32 %v2018, %v2022
  %2032 = vrot.lane.b32.xlu0 %v2024, 3
  %v2033 = vpop.permute.xlu0 %2032
  %2034 = vrot.lane.b32.xlu0 %v2025, 3
  %v2035 = vpop.permute.xlu0 %2034
  %2036 = vrot.lane.b32.xlu0 %v2026, 3
  %v2037 = vpop.permute.xlu0 %2036
  %2038 = vrot.lane.b32.xlu0 %v2027, 3
  %v2039 = vpop.permute.xlu0 %2038
  %vm2040 = vcmask 23552
  %v2041 = vsel %vm2040, %v2033, %v2035
  %v2042 = vsel %vm2040, %v2037, %v2039
  %2045 = vst.msk [vmem:[#allocation3 + $0x80] sm:$0xff] %vm1948, %v2041
  %2046 = vst.msk [vmem:[#allocation3 + $0xa0] sm:$0xff] %vm1948, %v2042
  %v2047 = vld [vmem:[#allocation2] sm:$0xff]
  %v2048 = vld [vmem:[#allocation2 + $0x8] sm:$0xff]
  %v2049 = vld [vmem:[#allocation2 + $0x30] sm:$0xff]
  %v2050 = vld [vmem:[#allocation2 + $0x38] sm:$0xff]
  %v2051 = vld [vmem:[%s2 + $0x45] ss:$0 sm:$0xff]
  %2053 = vrot.lane.b32.xlu0 %v2051, 127
  %v2054 = vpop.permute.xlu0 %2053
  %v2056 = vmul.f32 %v2047, %v2054
  %v2057 = vmul.f32 %v2048, %v2054
  %v2058 = vmul.f32 %v2049, %v2054
  %v2059 = vmul.f32 %v2050, %v2054
  %2064 = vrot.lane.b32.xlu0 %v2056, 1
  %v2065 = vpop.permute.xlu0 %2064
  %2066 = vrot.lane.b32.xlu0 %v2057, 1
  %v2067 = vpop.permute.xlu0 %2066
  %2068 = vrot.lane.b32.xlu0 %v2058, 1
  %v2069 = vpop.permute.xlu0 %2068
  %2070 = vrot.lane.b32.xlu0 %v2059, 1
  %v2071 = vpop.permute.xlu0 %2070
  %v2072 = vsel %vm339, %v2065, %v2067
  %v2073 = vsel %vm339, %v2069, %v2071
  %2076 = vst.msk [vmem:[#allocation3 + $0xc0] sm:$0xff] %vm1948, %v2072
  %2077 = vst.msk [vmem:[#allocation3 + $0xe0] sm:$0xff] %vm1948, %v2073
  %v2078 = vld [vmem:[#allocation2 + $0x8] sm:$0xff]
  %v2079 = vld [vmem:[#allocation2 + $0x38] sm:$0xff]
  %2080 = vst.msk [vmem:[#allocation3 + $0x100] sm:$0xff] %vm1948, %v2078
  %2081 = vst.msk [vmem:[#allocation3 + $0x120] sm:$0xff] %vm1948, %v2079
  %v2082 = vld [vmem:[#allocation2 + $0x8] sm:$0xff]
  %v2083 = vld [vmem:[#allocation2 + $0x38] sm:$0xff]
  %v2084 = vld [vmem:[%s2 + $0x47] ss:$0 sm:$0xff]
  %2086 = vrot.lane.b32.xlu0 %v2084, 1
  %v2087 = vpop.permute.xlu0 %2086
  %v2089 = vmul.f32 %v2082, %v2087
  %v2090 = vmul.f32 %v2083, %v2087
  %2093 = vrot.lane.b32.xlu0 %v2089, 127
  %v2094 = vpop.permute.xlu0 %2093
  %2095 = vrot.lane.b32.xlu0 %v2090, 127
  %v2096 = vpop.permute.xlu0 %2095
  %2099 = vst.msk [vmem:[#allocation3 + $0x140] sm:$0xff] %vm1948, %v2094
  %2100 = vst.msk [vmem:[#allocation3 + $0x160] sm:$0xff] %vm1948, %v2096
  %v2101 = vld [vmem:[#allocation2 + $0x8] sm:$0xff]
  %v2102 = vld [vmem:[#allocation2 + $0x38] sm:$0xff]
  %v2103 = vld [vmem:[%s2 + $0x60] ss:$0 sm:$0xff]
  %2105 = vrot.lane.b32.xlu0 %v2103, 3
  %v2106 = vpop.permute.xlu0 %2105
  %v2108 = vmul.f32 %v2101, %v2106
  %v2109 = vmul.f32 %v2102, %v2106
  %2112 = vrot.lane.b32.xlu0 %v2108, 125
  %v2113 = vpop.permute.xlu0 %2112
  %2114 = vrot.lane.b32.xlu0 %v2109, 125
  %v2115 = vpop.permute.xlu0 %2114
  %2118 = vst.msk [vmem:[#allocation3 + $0x180] sm:$0xff] %vm1948, %v2113
  %2119 = vst.msk [vmem:[#allocation3 + $0x1a0] sm:$0xff] %vm1948, %v2115
  %v2120 = vld [vmem:[#allocation2 + $0x8] sm:$0xff]
  %v2121 = vld [vmem:[#allocation2 + $0x38] sm:$0xff]
  %v2122 = vld [vmem:[%s2 + $0x61] ss:$0 sm:$0xff]
  %2124 = vrot.lane.b32.xlu0 %v2122, 4
  %v2125 = vpop.permute.xlu0 %2124
  %v2127 = vmul.f32 %v2120, %v2125
  %v2128 = vmul.f32 %v2121, %v2125
  %2131 = vrot.lane.b32.xlu0 %v2127, 124
  %v2132 = vpop.permute.xlu0 %2131
  %2133 = vrot.lane.b32.xlu0 %v2128, 124
  %v2134 = vpop.permute.xlu0 %2133
  %2137 = vst.msk [vmem:[#allocation3 + $0x1c0] sm:$0xff] %vm1948, %v2132
  %2138 = vst.msk [vmem:[#allocation3 + $0x1e0] sm:$0xff] %vm1948, %v2134
  %v2139 = vld [vmem:[#allocation2 + $0x8] sm:$0xff]
  %v2140 = vld [vmem:[#allocation2 + $0x38] sm:$0xff]
  %v2141 = vld [vmem:[%s2 + $0x62] ss:$0 sm:$0xff]
  %2143 = vrot.lane.b32.xlu0 %v2141, 5
  %v2144 = vpop.permute.xlu0 %2143
  %v2146 = vmul.f32 %v2139, %v2144
  %v2147 = vmul.f32 %v2140, %v2144
  %2150 = vrot.lane.b32.xlu0 %v2146, 123
  %v2151 = vpop.permute.xlu0 %2150
  %2152 = vrot.lane.b32.xlu0 %v2147, 123
  %v2153 = vpop.permute.xlu0 %2152
  %2156 = vst.msk [vmem:[#allocation3 + $0x200] sm:$0xff] %vm1948, %v2151
  %2157 = vst.msk [vmem:[#allocation3 + $0x220] sm:$0xff] %vm1948, %v2153
  %v2158 = vld [vmem:[%s1 + $0x50] sm:$0xff]
  %v2159 = vld [vmem:[%s1 + $0x58] sm:$0xff]
  %v2160 = vld [vmem:[%s1 + $0x60] sm:$0xff]
  %v2161 = vld [vmem:[%s1 + $0x68] sm:$0xff]
  %v2162 = vld [vmem:[#allocation3] sm:$0xff]
  %v2163 = vld [vmem:[#allocation3 + $0x20] sm:$0xff]
  %v2164 = vld [vmem:[#allocation3 + $0x40] sm:$0xff]
  %v2165 = vld [vmem:[#allocation3 + $0x60] sm:$0xff]
  %v2166 = vld [vmem:[#allocation3 + $0x80] sm:$0xff]
  %v2167 = vld [vmem:[#allocation3 + $0xa0] sm:$0xff]
  %v2168 = vld [vmem:[#allocation3 + $0xc0] sm:$0xff]
  %v2169 = vld [vmem:[#allocation3 + $0xe0] sm:$0xff]
  %v2170 = vld [vmem:[#allocation3 + $0x100] sm:$0xff]
  %v2171 = vld [vmem:[#allocation3 + $0x120] sm:$0xff]
  %v2172 = vld [vmem:[#allocation3 + $0x140] sm:$0xff]
  %v2173 = vld [vmem:[#allocation3 + $0x160] sm:$0xff]
  %v2174 = vld [vmem:[#allocation3 + $0x180] sm:$0xff]
  %v2175 = vld [vmem:[#allocation3 + $0x1a0] sm:$0xff]
  %v2176 = vld [vmem:[#allocation3 + $0x1c0] sm:$0xff]
  %v2177 = vld [vmem:[#allocation3 + $0x1e0] sm:$0xff]
  %v2178 = vld [vmem:[#allocation3 + $0x200] sm:$0xff]
  %v2179 = vld [vmem:[#allocation3 + $0x220] sm:$0xff]
  %2181 = vset.pattern.permute.xlu0 16
  %2182 = vperm.xlu0 %2181, %v2159
  %v2183 = vpop.permute.xlu0 %2182
  %2186 = vset.pattern.permute.xlu0 16
  %2187 = vperm.xlu0 %2186, %v2161
  %v2188 = vpop.permute.xlu0 %2187
  %v2190 = vsel %vm186, %v2159, 0
  %v2192 = vsel %vm186, %v2161, 0
  %2194 = vmatprep.subr.mxu0 0.0
  %2195 = vmatpush1.msra.mxu0 %v2177
  %2196 = vmatprep.subr.mxu0 0.0
  %2197 = vmatpush1.msra.mxu0 %v2176
  %2198 = vmatprep.subr.mxu0 0.0
  %2199 = vmatpush1.msra.mxu0 %v2175
  %2200 = vmatprep.subr.mxu0 0.0
  %2201 = vmatpush1.msra.mxu0 %v2174
  %2202 = vmatprep.subr.mxu0 0.0
  %2203 = vmatpush1.msra.mxu0 %v2173
  %2204 = vmatprep.subr.mxu0 0.0
  %2205 = vmatpush1.msra.mxu0 %v2172
  %2206 = vmatprep.subr.mxu0 0.0
  %2207 = vmatpush1.msra.mxu0 %v2171
  %2208 = vmatprep.subr.mxu0 0.0
  %2209 = vmatpush1.msra.mxu0 %v2170
  %2210 = vmatprep.subr.mxu0 0.0
  %2211 = vmatpush1.msra.mxu0 %v2169
  %2212 = vmatprep.subr.mxu0 0.0
  %2213 = vmatpush1.msra.mxu0 %v2168
  %2214 = vmatprep.subr.mxu0 0.0
  %2215 = vmatpush1.msra.mxu0 %v2167
  %2216 = vmatprep.subr.mxu0 0.0
  %2217 = vmatpush1.msra.mxu0 %v2166
  %2218 = vmatprep.subr.mxu0 0.0
  %2219 = vmatpush1.msra.mxu0 %v2165
  %2220 = vmatprep.subr.mxu0 0.0
  %2221 = vmatpush1.msra.mxu0 %v2164
  %2222 = vmatprep.subr.mxu0 0.0
  %2223 = vmatpush1.msra.mxu0 %v2163
  %2224 = vmatprep.subr.mxu0 0.0
  %2225 = vmatpush1.msra.mxu0 %v2162
  %2226 = vmatprep.subr.mxu0 0.0
  %2227 = vmatpush2.msra.mxu0 0.0
  %2228 = vmatprep.subr.mxu0 0.0
  %2229 = vmatpush2.msra.mxu0 0.0
  %2230 = vmatprep.subr.mxu0 0.0
  %2231 = vmatpush2.msra.mxu0 0.0
  %2232 = vmatprep.subr.mxu0 0.0
  %2233 = vmatpush2.msra.mxu0 0.0
  %2234 = vmatprep.subr.mxu0 0.0
  %2235 = vmatpush2.msra.mxu0 0.0
  %2236 = vmatprep.subr.mxu0 0.0
  %2237 = vmatpush2.msra.mxu0 0.0
  %2238 = vmatprep.subr.mxu0 0.0
  %2239 = vmatpush2.msra.mxu0 0.0
  %2240 = vmatprep.subr.mxu0 0.0
  %2241 = vmatpush2.msra.mxu0 0.0
  %2242 = vmatprep.subr.mxu0 0.0
  %2243 = vmatpush2.msra.mxu0 0.0
  %2244 = vmatprep.subr.mxu0 0.0
  %2245 = vmatpush2.msra.mxu0 0.0
  %2246 = vmatprep.subr.mxu0 0.0
  %2247 = vmatpush2.msra.mxu0 0.0
  %2248 = vmatprep.subr.mxu0 0.0
  %2249 = vmatpush2.msra.mxu0 0.0
  %2250 = vmatprep.subr.mxu0 0.0
  %2251 = vmatpush2.msra.mxu0 0.0
  %2252 = vmatprep.subr.mxu0 0.0
  %2253 = vmatpush2.msra.mxu0 0.0
  %2254 = vmatprep.subr.mxu0 0.0
  %2255 = vmatpush2.msra.mxu0 %v2179
  %2256 = vmatprep.subr.mxu0 0.0
  %2257 = vmatpush2.msra.mxu0 %v2178
  %2258 = vmatprep.mubr.f32.mxu0 %v2190
  %2259 = vmatmul.mubr.f32.gmra.mxu0 %v2158
  %v2260 = vpop.f32.mrf.mxu0
  %v2261 = vadd.f32 %v2183, %v2260
  %v2262 = vpop.f32.mrf.mxu0
  %2263 = vmatprep.mubr.f32.mxu0 %v2192
  %2264 = vmatmul.mubr.f32.gmra.mxu0 %v2160
  %v2265 = vpop.f32.mrf.mxu0
  %v2266 = vadd.f32 %v2188, %v2265
  %v2267 = vpop.f32.mrf.mxu0
  %2268 = vdwg.mxu0
  %v2269 = vld [vmem:[%s1 + $0x70] sm:$0xff]
  %v2270 = vld [vmem:[%s1 + $0x80] sm:$0xff]
  %v2272 = vsel %vm1165, %v2269, 0
  %v2275 = vsel %vm1165, %v2270, 0
  %2277 = vmatprep.subr.mxu0 0.0
  %2278 = vmatpush1.msra.mxu0 0.0
  %2279 = vmatprep.subr.mxu0 0.0
  %2280 = vmatpush1.msra.mxu0 0.0
  %2281 = vmatprep.subr.mxu0 0.0
  %2282 = vmatpush1.msra.mxu0 0.0
  %2283 = vmatprep.subr.mxu0 0.0
  %2284 = vmatpush1.msra.mxu0 0.0
  %2285 = vmatprep.subr.mxu0 0.0
  %2286 = vmatpush1.msra.mxu0 0.0
  %2287 = vmatprep.subr.mxu0 0.0
  %2288 = vmatpush1.msra.mxu0 0.0
  %2289 = vmatprep.subr.mxu0 0.0
  %2290 = vmatpush1.msra.mxu0 0.0
  %2291 = vmatprep.subr.mxu0 0.0
  %2292 = vmatpush1.msra.mxu0 0.0
  %2293 = vmatprep.subr.mxu0 0.0
  %2294 = vmatpush1.msra.mxu0 0.0
  %2295 = vmatprep.subr.mxu0 0.0
  %2296 = vmatpush1.msra.mxu0 0.0
  %2297 = vmatprep.subr.mxu0 0.0
  %2298 = vmatpush1.msra.mxu0 0.0
  %2299 = vmatprep.subr.mxu0 0.0
  %2300 = vmatpush1.msra.mxu0 0.0
  %2301 = vmatprep.subr.mxu0 0.0
  %2302 = vmatpush1.msra.mxu0 0.0
  %2303 = vmatprep.subr.mxu0 0.0
  %2304 = vmatpush1.msra.mxu0 0.0
  %2305 = vmatprep.subr.mxu0 0.0
  %2306 = vmatpush1.msra.mxu0 0.0
  %2307 = vmatprep.subr.mxu0 0.0
  %2308 = vmatpush1.msra.mxu0 %v1607
  %2309 = vmatprep.subr.mxu0 0.0
  %2310 = vmatpush2.msra.mxu0 0.0
  %2311 = vmatprep.subr.mxu0 0.0
  %2312 = vmatpush2.msra.mxu0 0.0
  %2313 = vmatprep.subr.mxu0 0.0
  %2314 = vmatpush2.msra.mxu0 0.0
  %2315 = vmatprep.subr.mxu0 0.0
  %2316 = vmatpush2.msra.mxu0 0.0
  %2317 = vmatprep.subr.mxu0 0.0
  %2318 = vmatpush2.msra.mxu0 0.0
  %2319 = vmatprep.subr.mxu0 0.0
  %2320 = vmatpush2.msra.mxu0 0.0
  %2321 = vmatprep.subr.mxu0 0.0
  %2322 = vmatpush2.msra.mxu0 0.0
  %2323 = vmatprep.subr.mxu0 0.0
  %2324 = vmatpush2.msra.mxu0 0.0
  %2325 = vmatprep.subr.mxu0 0.0
  %2326 = vmatpush2.msra.mxu0 0.0
  %2327 = vmatprep.subr.mxu0 0.0
  %2328 = vmatpush2.msra.mxu0 0.0
  %2329 = vmatprep.subr.mxu0 0.0
  %2330 = vmatpush2.msra.mxu0 0.0
  %2331 = vmatprep.subr.mxu0 0.0
  %2332 = vmatpush2.msra.mxu0 0.0
  %2333 = vmatprep.subr.mxu0 0.0
  %2334 = vmatpush2.msra.mxu0 0.0
  %2335 = vmatprep.subr.mxu0 0.0
  %2336 = vmatpush2.msra.mxu0 0.0
  %2337 = vmatprep.subr.mxu0 0.0
  %2338 = vmatpush2.msra.mxu0 0.0
  %2339 = vmatprep.subr.mxu0 0.0
  %2340 = vmatpush2.msra.mxu0 0.0
  %2341 = vmatprep.mubr.f32.mxu0 0.0
  %2342 = vmatmul.mubr.f32.gmra.mxu0 %v2272
  %v2343 = vpop.f32.mrf.mxu0
  %v2344 = vadd.f32 0.0, %v2343
  %v2345 = vpop.f32.mrf.mxu0
  %2346 = vmatprep.mubr.f32.mxu0 0.0
  %2347 = vmatmul.mubr.f32.gmra.mxu0 %v2275
  %v2348 = vpop.f32.mrf.mxu0
  %v2349 = vadd.f32 0.0, %v2348
  %v2350 = vpop.f32.mrf.mxu0
  %2351 = vdwg.mxu0
  %v2352 = vld [vmem:[%s4] sm:$0xff]
  %v2353 = vld [vmem:[%s4 + $0x8] sm:$0xff]
  %v2354 = vld [vmem:[%s4 + $0x10] sm:$0xff]
  %v2355 = vld [vmem:[%s4 + $0x18] sm:$0xff]
  %v2356 = vld [vmem:[%s4 + $0x20] sm:$0xff]
  %v2357 = vld [vmem:[%s4 + $0x28] sm:$0xff]
  %v2358 = vld [vmem:[%s4 + $0x30] sm:$0xff]
  %v2359 = vld [vmem:[%s4 + $0x38] sm:$0xff]
  %v2360 = vld [vmem:[%s4 + $0x40] sm:$0xff]
  %v2361 = vld [vmem:[%s4 + $0x48] sm:$0xff]
  %v2362 = vld [vmem:[%s4 + $0x50] sm:$0xff]
  %v2363 = vld [vmem:[%s4 + $0x58] sm:$0xff]
  %v2364 = vld [vmem:[%s4 + $0x60] sm:$0xff]
  %v2365 = vld [vmem:[%s4 + $0x68] sm:$0xff]
  %v2366 = vld [vmem:[%s4 + $0x70] sm:$0xff]
  %v2367 = vld [vmem:[%s4 + $0x78] sm:$0xff]
  %2368 = vset.pattern.permute.xlu0 8
  %2369 = vperm.xlu0 %2368, %v2269
  %v2370 = vpop.permute.xlu0 %2369
  %2372 = vset.pattern.permute.xlu0 8
  %2373 = vperm.xlu0 %2372, %v2270
  %v2374 = vpop.permute.xlu0 %2373
  %2376 = vmatprep.subr.mxu0 0.0
  %2377 = vmatpush1.msra.mxu0 %v2367
  %2378 = vmatprep.subr.mxu0 0.0
  %2379 = vmatpush1.msra.mxu0 %v2366
  %2380 = vmatprep.subr.mxu0 0.0
  %2381 = vmatpush1.msra.mxu0 %v2365
  %2382 = vmatprep.subr.mxu0 0.0
  %2383 = vmatpush1.msra.mxu0 %v2364
  %2384 = vmatprep.subr.mxu0 0.0
  %2385 = vmatpush1.msra.mxu0 %v2363
  %2386 = vmatprep.subr.mxu0 0.0
  %2387 = vmatpush1.msra.mxu0 %v2362
  %2388 = vmatprep.subr.mxu0 0.0
  %2389 = vmatpush1.msra.mxu0 %v2361
  %2390 = vmatprep.subr.mxu0 0.0
  %2391 = vmatpush1.msra.mxu0 %v2360
  %2392 = vmatprep.subr.mxu0 0.0
  %2393 = vmatpush1.msra.mxu0 %v2359
  %2394 = vmatprep.subr.mxu0 0.0
  %2395 = vmatpush1.msra.mxu0 %v2358
  %2396 = vmatprep.subr.mxu0 0.0
  %2397 = vmatpush1.msra.mxu0 %v2357
  %2398 = vmatprep.subr.mxu0 0.0
  %2399 = vmatpush1.msra.mxu0 %v2356
  %2400 = vmatprep.subr.mxu0 0.0
  %2401 = vmatpush1.msra.mxu0 %v2355
  %2402 = vmatprep.subr.mxu0 0.0
  %2403 = vmatpush1.msra.mxu0 %v2354
  %2404 = vmatprep.subr.mxu0 0.0
  %2405 = vmatpush1.msra.mxu0 %v2353
  %2406 = vmatprep.subr.mxu0 0.0
  %2407 = vmatpush1.msra.mxu0 %v2352
  %2408 = vmatprep.subr.mxu0 0.0
  %2409 = vmatpush2.msra.mxu0 0.0
  %2410 = vmatprep.subr.mxu0 0.0
  %2411 = vmatpush2.msra.mxu0 0.0
  %2412 = vmatprep.subr.mxu0 0.0
  %2413 = vmatpush2.msra.mxu0 0.0
  %2414 = vmatprep.subr.mxu0 0.0
  %2415 = vmatpush2.msra.mxu0 0.0
  %2416 = vmatprep.subr.mxu0 0.0
  %2417 = vmatpush2.msra.mxu0 0.0
  %2418 = vmatprep.subr.mxu0 0.0
  %2419 = vmatpush2.msra.mxu0 0.0
  %2420 = vmatprep.subr.mxu0 0.0
  %2421 = vmatpush2.msra.mxu0 0.0
  %2422 = vmatprep.subr.mxu0 0.0
  %2423 = vmatpush2.msra.mxu0 0.0
  %2424 = vmatprep.subr.mxu0 0.0
  %2425 = vmatpush2.msra.mxu0 0.0
  %2426 = vmatprep.subr.mxu0 0.0
  %2427 = vmatpush2.msra.mxu0 0.0
  %2428 = vmatprep.subr.mxu0 0.0
  %2429 = vmatpush2.msra.mxu0 0.0
  %2430 = vmatprep.subr.mxu0 0.0
  %2431 = vmatpush2.msra.mxu0 0.0
  %2432 = vmatprep.subr.mxu0 0.0
  %2433 = vmatpush2.msra.mxu0 0.0
  %2434 = vmatprep.subr.mxu0 0.0
  %2435 = vmatpush2.msra.mxu0 0.0
  %2436 = vmatprep.subr.mxu0 0.0
  %2437 = vmatpush2.msra.mxu0 0.0
  %2438 = vmatprep.subr.mxu0 0.0
  %2439 = vmatpush2.msra.mxu0 0.0
  %2440 = vmatprep.mubr.f32.mxu0 0.0
  %2441 = vmatmul.mubr.f32.gmra.mxu0 %v2344
  %v2442 = vpop.f32.mrf.mxu0
  %v2443 = vadd.f32 %v2370, %v2442
  %v2444 = vpop.f32.mrf.mxu0
  %2445 = vmatprep.mubr.f32.mxu0 0.0
  %2446 = vmatmul.mubr.f32.gmra.mxu0 %v2349
  %v2447 = vpop.f32.mrf.mxu0
  %v2448 = vadd.f32 %v2374, %v2447
  %v2449 = vpop.f32.mrf.mxu0
  %2450 = vdwg.mxu0
  %v2451 = vadd.f32 %v2261, %v2443
  %v2452 = vadd.f32 %v2266, %v2448
  %v2453 = vmax.f32 %v2451, 0.0
  %v2454 = vmax.f32 %v2452, 0.0
  %v2455 = vld [vmem:[%s5] sm:$0xff]
  %v2456 = vld [vmem:[%s5 + $0x8] sm:$0xff]
  %v2457 = vld [vmem:[%s5 + $0x10] sm:$0xff]
  %v2458 = vld [vmem:[%s5 + $0x18] sm:$0xff]
  %v2460 = vsel %vm1948, %v2453, 0
  %v2463 = vsel %vm1948, %v2454, 0
  %2465 = vmatprep.subr.mxu0 0.0
  %2466 = vmatpush1.msra.mxu0 0.0
  %2467 = vmatprep.subr.mxu0 0.0
  %2468 = vmatpush1.msra.mxu0 0.0
  %2469 = vmatprep.subr.mxu0 0.0
  %2470 = vmatpush1.msra.mxu0 0.0
  %2471 = vmatprep.subr.mxu0 0.0
  %2472 = vmatpush1.msra.mxu0 0.0
  %2473 = vmatprep.subr.mxu0 0.0
  %2474 = vmatpush1.msra.mxu0 0.0
  %2475 = vmatprep.subr.mxu0 0.0
  %2476 = vmatpush1.msra.mxu0 0.0
  %2477 = vmatprep.subr.mxu0 0.0
  %2478 = vmatpush1.msra.mxu0 0.0
  %2479 = vmatprep.subr.mxu0 0.0
  %2480 = vmatpush1.msra.mxu0 0.0
  %2481 = vmatprep.subr.mxu0 0.0
  %2482 = vmatpush1.msra.mxu0 0.0
  %2483 = vmatprep.subr.mxu0 0.0
  %2484 = vmatpush1.msra.mxu0 0.0
  %2485 = vmatprep.subr.mxu0 0.0
  %2486 = vmatpush1.msra.mxu0 0.0
  %2487 = vmatprep.subr.mxu0 0.0
  %2488 = vmatpush1.msra.mxu0 0.0
  %2489 = vmatprep.subr.mxu0 0.0
  %2490 = vmatpush1.msra.mxu0 %v2458
  %2491 = vmatprep.subr.mxu0 0.0
  %2492 = vmatpush1.msra.mxu0 %v2457
  %2493 = vmatprep.subr.mxu0 0.0
  %2494 = vmatpush1.msra.mxu0 %v2456
  %2495 = vmatprep.subr.mxu0 0.0
  %2496 = vmatpush1.msra.mxu0 %v2455
  %2497 = vmatprep.subr.mxu0 0.0
  %2498 = vmatpush2.msra.mxu0 0.0
  %2499 = vmatprep.subr.mxu0 0.0
  %2500 = vmatpush2.msra.mxu0 0.0
  %2501 = vmatprep.subr.mxu0 0.0
  %2502 = vmatpush2.msra.mxu0 0.0
  %2503 = vmatprep.subr.mxu0 0.0
  %2504 = vmatpush2.msra.mxu0 0.0
  %2505 = vmatprep.subr.mxu0 0.0
  %2506 = vmatpush2.msra.mxu0 0.0
  %2507 = vmatprep.subr.mxu0 0.0
  %2508 = vmatpush2.msra.mxu0 0.0
  %2509 = vmatprep.subr.mxu0 0.0
  %2510 = vmatpush2.msra.mxu0 0.0
  %2511 = vmatprep.subr.mxu0 0.0
  %2512 = vmatpush2.msra.mxu0 0.0
  %2513 = vmatprep.subr.mxu0 0.0
  %2514 = vmatpush2.msra.mxu0 0.0
  %2515 = vmatprep.subr.mxu0 0.0
  %2516 = vmatpush2.msra.mxu0 0.0
  %2517 = vmatprep.subr.mxu0 0.0
  %2518 = vmatpush2.msra.mxu0 0.0
  %2519 = vmatprep.subr.mxu0 0.0
  %2520 = vmatpush2.msra.mxu0 0.0
  %2521 = vmatprep.subr.mxu0 0.0
  %2522 = vmatpush2.msra.mxu0 0.0
  %2523 = vmatprep.subr.mxu0 0.0
  %2524 = vmatpush2.msra.mxu0 0.0
  %2525 = vmatprep.subr.mxu0 0.0
  %2526 = vmatpush2.msra.mxu0 0.0
  %2527 = vmatprep.subr.mxu0 0.0
  %2528 = vmatpush2.msra.mxu0 0.0
  %2529 = vmatprep.mubr.f32.mxu0 0.0
  %2530 = vmatmul.mubr.f32.gmra.mxu0 %v2460
  %v2531 = vpop.f32.mrf.mxu0
  %v2532 = vadd.f32 0.0, %v2531
  %v2533 = vpop.f32.mrf.mxu0
  %2534 = vmatprep.mubr.f32.mxu0 0.0
  %2535 = vmatmul.mubr.f32.gmra.mxu0 %v2463
  %v2536 = vpop.f32.mrf.mxu0
  %v2537 = vadd.f32 0.0, %v2536
  %v2538 = vpop.f32.mrf.mxu0
  %2539 = vdwg.mxu0
  %v2540 = vld [vmem:[%s1 + $0x90] sm:$0xff]
  %v2541 = vld [vmem:[%s1 + $0xa0] sm:$0xff]
  %v2542 = vld [vmem:[%s1 + $0xb0] sm:$0xff]
  %v2543 = vld [vmem:[%s1 + $0xc0] sm:$0xff]
  %2545 = vset.pattern.permute.xlu0 16
  %2546 = vperm.xlu0 %2545, %v2540
  %v2547 = vpop.permute.xlu0 %2546
  %2550 = vset.pattern.permute.xlu0 16
  %2551 = vperm.xlu0 %2550, %v2541
  %v2552 = vpop.permute.xlu0 %2551
  %2555 = vset.pattern.permute.xlu0 16
  %2556 = vperm.xlu0 %2555, %v2542
  %v2557 = vpop.permute.xlu0 %2556
  %2560 = vset.pattern.permute.xlu0 16
  %2561 = vperm.xlu0 %2560, %v2543
  %v2562 = vpop.permute.xlu0 %2561
  %v2564 = vsel %vm186, %v2540, 0
  %v2566 = vsel %vm186, %v2541, 0
  %v2568 = vsel %vm186, %v2542, 0
  %v2570 = vsel %vm186, %v2543, 0
  %2572 = vmatprep.subr.mxu0 0.0
  %2573 = vmatpush1.msra.mxu0 0.0
  %2574 = vmatprep.subr.mxu0 0.0
  %2575 = vmatpush1.msra.mxu0 0.0
  %2576 = vmatprep.subr.mxu0 0.0
  %2577 = vmatpush1.msra.mxu0 0.0
  %2578 = vmatprep.subr.mxu0 0.0
  %2579 = vmatpush1.msra.mxu0 0.0
  %2580 = vmatprep.subr.mxu0 0.0
  %2581 = vmatpush1.msra.mxu0 0.0
  %2582 = vmatprep.subr.mxu0 0.0
  %2583 = vmatpush1.msra.mxu0 0.0
  %2584 = vmatprep.subr.mxu0 0.0
  %2585 = vmatpush1.msra.mxu0 0.0
  %2586 = vmatprep.subr.mxu0 0.0
  %2587 = vmatpush1.msra.mxu0 0.0
  %2588 = vmatprep.subr.mxu0 0.0
  %2589 = vmatpush1.msra.mxu0 0.0
  %2590 = vmatprep.subr.mxu0 0.0
  %2591 = vmatpush1.msra.mxu0 0.0
  %2592 = vmatprep.subr.mxu0 0.0
  %2593 = vmatpush1.msra.mxu0 0.0
  %2594 = vmatprep.subr.mxu0 0.0
  %2595 = vmatpush1.msra.mxu0 0.0
  %2596 = vmatprep.subr.mxu0 0.0
  %2597 = vmatpush1.msra.mxu0 0.0
  %2598 = vmatprep.subr.mxu0 0.0
  %2599 = vmatpush1.msra.mxu0 0.0
  %2600 = vmatprep.subr.mxu0 0.0
  %2601 = vmatpush1.msra.mxu0 %v2537
  %2602 = vmatprep.subr.mxu0 0.0
  %2603 = vmatpush1.msra.mxu0 %v2532
  %2604 = vmatprep.subr.mxu0 0.0
  %2605 = vmatpush2.msra.mxu0 0.0
  %2606 = vmatprep.subr.mxu0 0.0
  %2607 = vmatpush2.msra.mxu0 0.0
  %2608 = vmatprep.subr.mxu0 0.0
  %2609 = vmatpush2.msra.mxu0 0.0
  %2610 = vmatprep.subr.mxu0 0.0
  %2611 = vmatpush2.msra.mxu0 0.0
  %2612 = vmatprep.subr.mxu0 0.0
  %2613 = vmatpush2.msra.mxu0 0.0
  %2614 = vmatprep.subr.mxu0 0.0
  %2615 = vmatpush2.msra.mxu0 0.0
  %2616 = vmatprep.subr.mxu0 0.0
  %2617 = vmatpush2.msra.mxu0 0.0
  %2618 = vmatprep.subr.mxu0 0.0
  %2619 = vmatpush2.msra.mxu0 0.0
  %2620 = vmatprep.subr.mxu0 0.0
  %2621 = vmatpush2.msra.mxu0 0.0
  %2622 = vmatprep.subr.mxu0 0.0
  %2623 = vmatpush2.msra.mxu0 0.0
  %2624 = vmatprep.subr.mxu0 0.0
  %2625 = vmatpush2.msra.mxu0 0.0
  %2626 = vmatprep.subr.mxu0 0.0
  %2627 = vmatpush2.msra.mxu0 0.0
  %2628 = vmatprep.subr.mxu0 0.0
  %2629 = vmatpush2.msra.mxu0 0.0
  %2630 = vmatprep.subr.mxu0 0.0
  %2631 = vmatpush2.msra.mxu0 0.0
  %2632 = vmatprep.subr.mxu0 0.0
  %2633 = vmatpush2.msra.mxu0 0.0
  %2634 = vmatprep.subr.mxu0 0.0
  %2635 = vmatpush2.msra.mxu0 0.0
  %2636 = vmatprep.mubr.f32.mxu0 0.0
  %2637 = vmatmul.mubr.f32.gmra.mxu0 %v2564
  %v2638 = vpop.f32.mrf.mxu0
  %v2639 = vadd.f32 %v2547, %v2638
  %v2640 = vpop.f32.mrf.mxu0
  %2641 = vmatprep.mubr.f32.mxu0 0.0
  %2642 = vmatmul.mubr.f32.gmra.mxu0 %v2566
  %v2643 = vpop.f32.mrf.mxu0
  %v2644 = vadd.f32 %v2552, %v2643
  %v2645 = vpop.f32.mrf.mxu0
  %2646 = vmatprep.mubr.f32.mxu0 0.0
  %2647 = vmatmul.mubr.f32.gmra.mxu0 %v2568
  %v2648 = vpop.f32.mrf.mxu0
  %v2649 = vadd.f32 %v2557, %v2648
  %v2650 = vpop.f32.mrf.mxu0
  %2651 = vmatprep.mubr.f32.mxu0 0.0
  %2652 = vmatmul.mubr.f32.gmra.mxu0 %v2570
  %v2653 = vpop.f32.mrf.mxu0
  %v2654 = vadd.f32 %v2562, %v2653
  %v2655 = vpop.f32.mrf.mxu0
  %2656 = vdwg.mxu0
  %v2657 = vmax.f32 %v2639, 0.0
  %v2658 = vmax.f32 %v2644, 0.0
  %v2659 = vmax.f32 %v2649, 0.0
  %v2660 = vmax.f32 %v2654, 0.0
  %v2661 = vld [vmem:[%s1 + $0xd0] sm:$0xff]
  %v2662 = vld [vmem:[%s1 + $0xe0] sm:$0xff]
  %2664 = vset.pattern.permute.xlu0 32
  %2665 = vperm.xlu0 %2664, %v2661
  %v2666 = vpop.permute.xlu0 %2665
  %2669 = vset.pattern.permute.xlu0 32
  %2670 = vperm.xlu0 %2669, %v2662
  %v2671 = vpop.permute.xlu0 %2670
  %v2673 = vsel %vm1948, %v2661, 0
  %v2675 = vsel %vm1948, %v2662, 0
  %2677 = vmatprep.subr.mxu0 0.0
  %2678 = vmatpush1.msra.mxu0 0.0
  %2679 = vmatprep.subr.mxu0 0.0
  %2680 = vmatpush1.msra.mxu0 0.0
  %2681 = vmatprep.subr.mxu0 0.0
  %2682 = vmatpush1.msra.mxu0 0.0
  %2683 = vmatprep.subr.mxu0 0.0
  %2684 = vmatpush1.msra.mxu0 0.0
  %2685 = vmatprep.subr.mxu0 0.0
  %2686 = vmatpush1.msra.mxu0 0.0
  %2687 = vmatprep.subr.mxu0 0.0
  %2688 = vmatpush1.msra.mxu0 0.0
  %2689 = vmatprep.subr.mxu0 0.0
  %2690 = vmatpush1.msra.mxu0 0.0
  %2691 = vmatprep.subr.mxu0 0.0
  %2692 = vmatpush1.msra.mxu0 0.0
  %2693 = vmatprep.subr.mxu0 0.0
  %2694 = vmatpush1.msra.mxu0 0.0
  %2695 = vmatprep.subr.mxu0 0.0
  %2696 = vmatpush1.msra.mxu0 0.0
  %2697 = vmatprep.subr.mxu0 0.0
  %2698 = vmatpush1.msra.mxu0 0.0
  %2699 = vmatprep.subr.mxu0 0.0
  %2700 = vmatpush1.msra.mxu0 0.0
  %2701 = vmatprep.subr.mxu0 0.0
  %2702 = vmatpush1.msra.mxu0 %v2660
  %2703 = vmatprep.subr.mxu0 0.0
  %2704 = vmatpush1.msra.mxu0 %v2659
  %2705 = vmatprep.subr.mxu0 0.0
  %2706 = vmatpush1.msra.mxu0 %v2658
  %2707 = vmatprep.subr.mxu0 0.0
  %2708 = vmatpush1.msra.mxu0 %v2657
  %2709 = vmatprep.subr.mxu0 0.0
  %2710 = vmatpush2.msra.mxu0 0.0
  %2711 = vmatprep.subr.mxu0 0.0
  %2712 = vmatpush2.msra.mxu0 0.0
  %2713 = vmatprep.subr.mxu0 0.0
  %2714 = vmatpush2.msra.mxu0 0.0
  %2715 = vmatprep.subr.mxu0 0.0
  %2716 = vmatpush2.msra.mxu0 0.0
  %2717 = vmatprep.subr.mxu0 0.0
  %2718 = vmatpush2.msra.mxu0 0.0
  %2719 = vmatprep.subr.mxu0 0.0
  %2720 = vmatpush2.msra.mxu0 0.0
  %2721 = vmatprep.subr.mxu0 0.0
  %2722 = vmatpush2.msra.mxu0 0.0
  %2723 = vmatprep.subr.mxu0 0.0
  %2724 = vmatpush2.msra.mxu0 0.0
  %2725 = vmatprep.subr.mxu0 0.0
  %2726 = vmatpush2.msra.mxu0 0.0
  %2727 = vmatprep.subr.mxu0 0.0
  %2728 = vmatpush2.msra.mxu0 0.0
  %2729 = vmatprep.subr.mxu0 0.0
  %2730 = vmatpush2.msra.mxu0 0.0
  %2731 = vmatprep.subr.mxu0 0.0
  %2732 = vmatpush2.msra.mxu0 0.0
  %2733 = vmatprep.subr.mxu0 0.0
  %2734 = vmatpush2.msra.mxu0 0.0
  %2735 = vmatprep.subr.mxu0 0.0
  %2736 = vmatpush2.msra.mxu0 0.0
  %2737 = vmatprep.subr.mxu0 0.0
  %2738 = vmatpush2.msra.mxu0 0.0
  %2739 = vmatprep.subr.mxu0 0.0
  %2740 = vmatpush2.msra.mxu0 0.0
  %2741 = vmatprep.mubr.f32.mxu0 0.0
  %2742 = vmatmul.mubr.f32.gmra.mxu0 %v2673
  %v2743 = vpop.f32.mrf.mxu0
  %v2744 = vadd.f32 %v2666, %v2743
  %v2745 = vpop.f32.mrf.mxu0
  %2746 = vmatprep.mubr.f32.mxu0 0.0
  %2747 = vmatmul.mubr.f32.gmra.mxu0 %v2675
  %v2748 = vpop.f32.mrf.mxu0
  %v2749 = vadd.f32 %v2671, %v2748
  %v2750 = vpop.f32.mrf.mxu0
  %2751 = vdwg.mxu0
  %v2752 = vmax.f32 %v2744, 0.0
  %v2753 = vmax.f32 %v2749, 0.0
  %v2754 = vld [vmem:[%s1 + $0xf0] sm:$0x3]
  %2756 = vset.pattern.permute.xlu0 16
  %2757 = vperm.xlu0 %2756, %v2754
  %v2758 = vpop.permute.xlu0 %2757
  %v2760 = vsel %vm186, %v2754, 0
  %2762 = vmatprep.subr.mxu0 0.0
  %2763 = vmatpush1.msra.mxu0 0.0
  %2764 = vmatprep.subr.mxu0 0.0
  %2765 = vmatpush1.msra.mxu0 0.0
  %2766 = vmatprep.subr.mxu0 0.0
  %2767 = vmatpush1.msra.mxu0 0.0
  %2768 = vmatprep.subr.mxu0 0.0
  %2769 = vmatpush1.msra.mxu0 0.0
  %2770 = vmatprep.subr.mxu0 0.0
  %2771 = vmatpush1.msra.mxu0 0.0
  %2772 = vmatprep.subr.mxu0 0.0
  %2773 = vmatpush1.msra.mxu0 0.0
  %2774 = vmatprep.subr.mxu0 0.0
  %2775 = vmatpush1.msra.mxu0 0.0
  %2776 = vmatprep.subr.mxu0 0.0
  %2777 = vmatpush1.msra.mxu0 0.0
  %2778 = vmatprep.subr.mxu0 0.0
  %2779 = vmatpush1.msra.mxu0 0.0
  %2780 = vmatprep.subr.mxu0 0.0
  %2781 = vmatpush1.msra.mxu0 0.0
  %2782 = vmatprep.subr.mxu0 0.0
  %2783 = vmatpush1.msra.mxu0 0.0
  %2784 = vmatprep.subr.mxu0 0.0
  %2785 = vmatpush1.msra.mxu0 0.0
  %2786 = vmatprep.subr.mxu0 0.0
  %2787 = vmatpush1.msra.mxu0 0.0
  %2788 = vmatprep.subr.mxu0 0.0
  %2789 = vmatpush1.msra.mxu0 0.0
  %2790 = vmatprep.subr.mxu0 0.0
  %2791 = vmatpush1.msra.mxu0 %v2753
  %2792 = vmatprep.subr.mxu0 0.0
  %2793 = vmatpush1.msra.mxu0 %v2752
  %2794 = vmatprep.subr.mxu0 0.0
  %2795 = vmatpush2.msra.mxu0 0.0
  %2796 = vmatprep.subr.mxu0 0.0
  %2797 = vmatpush2.msra.mxu0 0.0
  %2798 = vmatprep.subr.mxu0 0.0
  %2799 = vmatpush2.msra.mxu0 0.0
  %2800 = vmatprep.subr.mxu0 0.0
  %2801 = vmatpush2.msra.mxu0 0.0
  %2802 = vmatprep.subr.mxu0 0.0
  %2803 = vmatpush2.msra.mxu0 0.0
  %2804 = vmatprep.subr.mxu0 0.0
  %2805 = vmatpush2.msra.mxu0 0.0
  %2806 = vmatprep.subr.mxu0 0.0
  %2807 = vmatpush2.msra.mxu0 0.0
  %2808 = vmatprep.subr.mxu0 0.0
  %2809 = vmatpush2.msra.mxu0 0.0
  %2810 = vmatprep.subr.mxu0 0.0
  %2811 = vmatpush2.msra.mxu0 0.0
  %2812 = vmatprep.subr.mxu0 0.0
  %2813 = vmatpush2.msra.mxu0 0.0
  %2814 = vmatprep.subr.mxu0 0.0
  %2815 = vmatpush2.msra.mxu0 0.0
  %2816 = vmatprep.subr.mxu0 0.0
  %2817 = vmatpush2.msra.mxu0 0.0
  %2818 = vmatprep.subr.mxu0 0.0
  %2819 = vmatpush2.msra.mxu0 0.0
  %2820 = vmatprep.subr.mxu0 0.0
  %2821 = vmatpush2.msra.mxu0 0.0
  %2822 = vmatprep.subr.mxu0 0.0
  %2823 = vmatpush2.msra.mxu0 0.0
  %2824 = vmatprep.subr.mxu0 0.0
  %2825 = vmatpush2.msra.mxu0 0.0
  %2826 = vmatprep.mubr.f32.mxu0 0.0
  %2827 = vmatmul.mubr.f32.gmra.mxu0 %v2760
  %v2828 = vpop.f32.mrf.mxu0
  %v2829 = vadd.f32 %v2758, %v2828
  %v2830 = vpop.f32.mrf.mxu0
  %2831 = vdwg.mxu0
  %vm2832 = vcmask 9216
  %2833 = vst.msk [vmem:[%s6] sm:$0x3] %vm2832, %v2829
  // Predicated region
  $region26: #{modified_resnet_forward.1} parent=0 // pred_check
    _
  $region27: #{modified_resnet_forward.1} parent=0 // pred_check_branch
    %2835 = sbr.rel (0) target = $region29
  $region28: #{modified_resnet_forward.1} parent=0 // pred_region
    _
  $region29: #{modified_resnet_forward.1} parent=0 // pred_fallthru
    _
  // Predicated region
  $region30: #{modified_resnet_forward.1} parent=0 // pred_check
    _
  $region31: #{modified_resnet_forward.1} parent=0 // pred_check_branch
    %2837 = sbr.rel (0) target = $region33
  $region32: #{modified_resnet_forward.1} parent=0 // pred_region
    _
  $region33: #{modified_resnet_forward.1} parent=0 // pred_fallthru
    _

</llo_original>
